<compile_context>
chip_gen: v5e
topology: v5e:2x2
jax: 0.10.0
libtpu: 0.0.40
codegen_flags: <defaults>
</compile_context>

<pallas_src>
import jax
import jax.numpy as jnp
from jax.experimental import pallas as pl
from jax.experimental.pallas import tpu as pltpu

D_IN = 33 * 33 * 33          # 35937
H1, H2, D_OUT = 128, 32, 1
K_PAD = 288 * 128            # 36864: D_IN padded up to a lane multiple
TK = 9216                    # K tile -> 4 grid steps over K
B_TILE = 8                   # batch tile (sublane multiple)


def mlp_kernel(x_ref, w1_ref, b1_ref, w2_ref, b2_ref, w3_ref, b3_ref,
               o_ref, acc_ref):
    k = pl.program_id(1)

    @pl.when(k == 0)
    def _():
        acc_ref[...] = jnp.zeros_like(acc_ref)

    # (B_TILE, TK) bf16 x (TK, 128) bf16 -> f32 accumulation on the MXU.
    acc_ref[...] += jnp.dot(x_ref[...], w1_ref[...],
                            preferred_element_type=jnp.float32)

    @pl.when(k == pl.num_programs(1) - 1)
    def _():
        h1 = jnp.maximum(acc_ref[...] + b1_ref[...], 0.0)            # (B,128)
        h2 = jnp.maximum(
            jnp.dot(h1, w2_ref[...], preferred_element_type=jnp.float32)
            + b2_ref[...], 0.0)                                       # (B,32)
        out = (jnp.dot(h2, w3_ref[...], preferred_element_type=jnp.float32)
               + b3_ref[...])                                         # (B,1)
        o_ref[...] = out.astype(o_ref.dtype)


def prepare_params(w1, b1, w2, b2, w3, b3):
    """One-time setup (outside the hot path): pad+cast W1, reshape biases."""
    w1p = jnp.zeros((K_PAD, H1), jnp.bfloat16).at[:D_IN, :].set(
        w1.astype(jnp.bfloat16))
    return (w1p,
            b1.reshape(1, H1).astype(jnp.float32),
            w2.astype(jnp.float32),
            b2.reshape(1, H2).astype(jnp.float32),
            w3.astype(jnp.float32),
            b3.reshape(1, D_OUT).astype(jnp.float32))


@jax.jit
def neural_network_forward(x, w1p, b1, w2, b2, w3, b3):
    """x: (B, 33, 33, 33) f32. w1p: pre-padded bf16 (K_PAD, 128). Returns (B, 1)."""
    B = x.shape[0]
    b_pad = pl.cdiv(B, B_TILE) * B_TILE
    x2 = x.reshape(B, D_IN).astype(jnp.bfloat16)
    # Single pad op: batch -> b_pad, K -> K_PAD (zeros contribute nothing).
    xp = jnp.pad(x2, ((0, b_pad - B), (0, K_PAD - D_IN)))

    n_b = b_pad // B_TILE
    n_k = K_PAD // TK

    out = pl.pallas_call(
        mlp_kernel,
        out_shape=jax.ShapeDtypeStruct((b_pad, D_OUT), jnp.float32),
        grid_spec=pltpu.PrefetchScalarGridSpec(
            num_scalar_prefetch=0,
            grid=(n_b, n_k),
            in_specs=[
                pl.BlockSpec((B_TILE, TK), lambda b, k: (b, k)),     # x tile (bf16)
                pl.BlockSpec((TK, H1), lambda b, k: (k, 0)),         # W1 tile (bf16)
                pl.BlockSpec((1, H1), lambda b, k: (0, 0)),          # b1
                pl.BlockSpec((H1, H2), lambda b, k: (0, 0)),         # W2
                pl.BlockSpec((1, H2), lambda b, k: (0, 0)),          # b2
                pl.BlockSpec((H2, D_OUT), lambda b, k: (0, 0)),      # W3
                pl.BlockSpec((1, D_OUT), lambda b, k: (0, 0)),       # b3
            ],
            out_specs=pl.BlockSpec((B_TILE, D_OUT), lambda b, k: (b, 0)),
            scratch_shapes=[pltpu.VMEM((B_TILE, H1), jnp.float32)],
        ),
        compiler_params=pltpu.CompilerParams(
            dimension_semantics=("parallel", "arbitrary")),
    )(xp, w1p, b1, w2, b2, w3, b3)

    return out[:B]


def init_params(key):
    """Deterministic init mimicking nn.Linear (uniform +/- 1/sqrt(fan_in))."""
    ks = jax.random.split(key, 6)
    def lin(kw, kb, fan_in, fan_out):
        bound = 1.0 / jnp.sqrt(jnp.float32(fan_in))
        w = jax.random.uniform(kw, (fan_in, fan_out), jnp.float32,
                               -bound, bound)
        b = jax.random.uniform(kb, (fan_out,), jnp.float32, -bound, bound)
        return w, b
    w1, b1 = lin(ks[0], ks[1], D_IN, H1)
    w2, b2 = lin(ks[2], ks[3], H1, H2)
    w3, b3 = lin(ks[4], ks[5], H2, D_OUT)
    return w1, b1, w2, b2, w3, b3


def reference_forward(x, w1, b1, w2, b2, w3, b3):
    """Pure-f32 reference matching the PyTorch module."""
    x2 = x.reshape(x.shape[0], -1)
    h1 = jnp.maximum(x2 @ w1 + b1, 0.0)
    h2 = jnp.maximum(h1 @ w2 + b2, 0.0)
    return h2 @ w3 + b3


if __name__ == "__main__":
    key = jax.random.PRNGKey(0)
    kx, kp = jax.random.split(key)

    B = 2
    x = jax.random.normal(kx, (B, 33, 33, 33), jnp.float32)
    params = init_params(kp)
    prepped = prepare_params(*params)

    out = neural_network_forward(x, *prepped)
    out = jax.block_until_ready(out)

    ref = reference_forward(x, *params)
    assert out.shape == (B, 1), out.shape
    # Layer-1 inputs stream as bf16 (f32 accumulation) -> slightly looser tol
    # vs the pure-f32 reference.
    assert jnp.allclose(out, ref, atol=2e-2, rtol=2e-2), (out, ref)

    print("KERNEL_OK")
</pallas_src>

<mosaic_0001>
module attributes {stable_mosaic.version = 11 : i64} {
  func.func @mlp_kernel(%arg0: i32, %arg1: i32, %arg2: memref<8x9216xbf16, #tpu.memory_space<vmem>>, %arg3: memref<9216x128xbf16, #tpu.memory_space<vmem>>, %arg4: memref<1x128xf32, #tpu.memory_space<vmem>>, %arg5: memref<128x32xf32, #tpu.memory_space<vmem>>, %arg6: memref<1x32xf32, #tpu.memory_space<vmem>>, %arg7: memref<32x1xf32, #tpu.memory_space<vmem>>, %arg8: memref<1x1xf32, #tpu.memory_space<vmem>>, %arg9: memref<8x1xf32, #tpu.memory_space<vmem>>, %arg10: memref<8x128xf32, #tpu.memory_space<vmem>>) attributes {dimension_semantics = [#tpu.dimension_semantics<parallel>, #tpu.dimension_semantics<arbitrary>], iteration_bounds = array<i64: 1, 4>, scalar_prefetch = 0 : i64, scratch_operands = 1 : i64, tpu.core_type = #tpu.core_type<tc>, window_params = [{transform_indices = @transform_0, window_bounds = array<i64: 8, 9216>}, {transform_indices = @transform_1, window_bounds = array<i64: 9216, 128>}, {pipeline_mode = #tpu.pipeline_mode<synchronous>, transform_indices = @transform_2, window_bounds = array<i64: 1, 128>}, {pipeline_mode = #tpu.pipeline_mode<synchronous>, transform_indices = @transform_3, window_bounds = array<i64: 128, 32>}, {pipeline_mode = #tpu.pipeline_mode<synchronous>, transform_indices = @transform_4, window_bounds = array<i64: 1, 32>}, {pipeline_mode = #tpu.pipeline_mode<synchronous>, transform_indices = @transform_5, window_bounds = array<i64: 32, 1>}, {pipeline_mode = #tpu.pipeline_mode<synchronous>, transform_indices = @transform_6, window_bounds = array<i64: 1, 1>}, {transform_indices = @transform_7, window_bounds = array<i64: 8, 1>}]} {
    %c0_i32 = arith.constant 0 : i32
    %0 = arith.cmpi eq, %arg1, %c0_i32 : i32
    %1 = arith.extui %0 : i1 to i32
    %c0_i32_0 = arith.constant 0 : i32
    %2 = arith.cmpi ne, %1, %c0_i32_0 : i32
    scf.if %2 {
      %cst_9 = arith.constant 0.000000e+00 : f32
      %12 = vector.broadcast %cst_9 : f32 to vector<8x128xf32>
      %c0_10 = arith.constant 0 : index
      %c0_11 = arith.constant 0 : index
      %13 = vector.load %arg10[%c0_10, %c0_11] : memref<8x128xf32, #tpu.memory_space<vmem>>, vector<8x128xf32>
      tpu.vector_store %arg10[%c0_10, %c0_11], %12 {strides = array<i32>} : memref<8x128xf32, #tpu.memory_space<vmem>>, vector<8x128xf32>,
    } else {
    }
    %c0 = arith.constant 0 : index
    %c0_1 = arith.constant 0 : index
    %3 = vector.load %arg10[%c0, %c0_1] : memref<8x128xf32, #tpu.memory_space<vmem>>, vector<8x128xf32>
    %c0_2 = arith.constant 0 : index
    %c0_3 = arith.constant 0 : index
    %4 = vector.load %arg2[%c0_2, %c0_3] : memref<8x9216xbf16, #tpu.memory_space<vmem>>, vector<8x9216xbf16>
    %c0_4 = arith.constant 0 : index
    %c0_5 = arith.constant 0 : index
    %5 = vector.load %arg3[%c0_4, %c0_5] : memref<9216x128xbf16, #tpu.memory_space<vmem>>, vector<9216x128xbf16>
    %cst = arith.constant dense<0.000000e+00> : vector<8x128xf32>
    %6 = tpu.matmul %4, %5, %cst {dimension_numbers = #tpu.dot_dimension_numbers<[1], [0], [0], [1], [0, 0, 1, 1], [], []>} : vector<8x9216xbf16>, vector<9216x128xbf16>, vector<8x128xf32> -> vector<8x128xf32>
    %7 = arith.addf %3, %6 : vector<8x128xf32>
    %c0_6 = arith.constant 0 : index
    %c0_7 = arith.constant 0 : index
    %8 = vector.load %arg10[%c0_6, %c0_7] : memref<8x128xf32, #tpu.memory_space<vmem>>, vector<8x128xf32>
    tpu.vector_store %arg10[%c0_6, %c0_7], %7 {strides = array<i32>} : memref<8x128xf32, #tpu.memory_space<vmem>>, vector<8x128xf32>,
    %c3_i32 = arith.constant 3 : i32
    %9 = arith.cmpi eq, %arg1, %c3_i32 : i32
    %10 = arith.extui %9 : i1 to i32
    %c0_i32_8 = arith.constant 0 : i32
    %11 = arith.cmpi ne, %10, %c0_i32_8 : i32
    scf.if %11 {
      %c0_9 = arith.constant 0 : index
      %c0_10 = arith.constant 0 : index
      %12 = vector.load %arg10[%c0_9, %c0_10] : memref<8x128xf32, #tpu.memory_space<vmem>>, vector<8x128xf32>
      %c0_11 = arith.constant 0 : index
      %c0_12 = arith.constant 0 : index
      %13 = vector.load %arg4[%c0_11, %c0_12] : memref<1x128xf32, #tpu.memory_space<vmem>>, vector<1x128xf32>
      %14 = vector.broadcast %13 : vector<1x128xf32> to vector<8x128xf32>
      %15 = arith.addf %12, %14 : vector<8x128xf32>
      %cst_13 = arith.constant 0.000000e+00 : f32
      %16 = vector.broadcast %cst_13 : f32 to vector<8x128xf32>
      %17 = arith.maximumf %15, %16 : vector<8x128xf32>
      %c0_14 = arith.constant 0 : index
      %c0_15 = arith.constant 0 : index
      %18 = vector.load %arg5[%c0_14, %c0_15] : memref<128x32xf32, #tpu.memory_space<vmem>>, vector<128x32xf32>
      %cst_16 = arith.constant dense<0.000000e+00> : vector<8x32xf32>
      %19 = tpu.matmul %17, %18, %cst_16 {dimension_numbers = #tpu.dot_dimension_numbers<[1], [0], [0], [1], [0, 0, 1, 1], [], []>} : vector<8x128xf32>, vector<128x32xf32>, vector<8x32xf32> -> vector<8x32xf32>
      %c0_17 = arith.constant 0 : index
      %c0_18 = arith.constant 0 : index
      %20 = vector.load %arg6[%c0_17, %c0_18] : memref<1x32xf32, #tpu.memory_space<vmem>>, vector<1x32xf32>
      %21 = vector.broadcast %20 : vector<1x32xf32> to vector<8x32xf32>
      %22 = arith.addf %19, %21 : vector<8x32xf32>
      %cst_19 = arith.constant 0.000000e+00 : f32
      %23 = vector.broadcast %cst_19 : f32 to vector<8x32xf32>
      %24 = arith.maximumf %22, %23 : vector<8x32xf32>
      %c0_20 = arith.constant 0 : index
      %c0_21 = arith.constant 0 : index
      %25 = vector.load %arg7[%c0_20, %c0_21] : memref<32x1xf32, #tpu.memory_space<vmem>>, vector<32x1xf32>
      %cst_22 = arith.constant dense<0.000000e+00> : vector<8x1xf32>
      %26 = tpu.matmul %24, %25, %cst_22 {dimension_numbers = #tpu.dot_dimension_numbers<[1], [0], [0], [1], [0, 0, 1, 1], [], []>} : vector<8x32xf32>, vector<32x1xf32>, vector<8x1xf32> -> vector<8x1xf32>
      %c0_23 = arith.constant 0 : index
      %c0_24 = arith.constant 0 : index
      %27 = vector.load %arg8[%c0_23, %c0_24] : memref<1x1xf32, #tpu.memory_space<vmem>>, vector<1x1xf32>
      %28 = vector.broadcast %27 : vector<1x1xf32> to vector<8x1xf32>
      %29 = arith.addf %26, %28 : vector<8x1xf32>
      %c0_25 = arith.constant 0 : index
      %c0_26 = arith.constant 0 : index
      %30 = vector.load %arg9[%c0_25, %c0_26] : memref<8x1xf32, #tpu.memory_space<vmem>>, vector<8x1xf32>
      tpu.vector_store %arg9[%c0_25, %c0_26], %29 {strides = array<i32>} : memref<8x1xf32, #tpu.memory_space<vmem>>, vector<8x1xf32>,
    } else {
    }
    return
  }
  func.func @transform_0(%arg0: i32, %arg1: i32) -> (i32, i32) {
    %c0_i32 = arith.constant 0 : i32
    return %arg0, %arg1 : i32, i32
  }
  func.func @transform_1(%arg0: i32, %arg1: i32) -> (i32, i32) {
    %c0_i32 = arith.constant 0 : i32
    %c0_i32_0 = arith.constant 0 : i32
    return %arg1, %c0_i32 : i32, i32
  }
  func.func @transform_2(%arg0: i32, %arg1: i32) -> (i32, i32) {
    %c0_i32 = arith.constant 0 : i32
    %c0_i32_0 = arith.constant 0 : i32
    %c0_i32_1 = arith.constant 0 : i32
    return %c0_i32, %c0_i32_0 : i32, i32
  }
  func.func @transform_3(%arg0: i32, %arg1: i32) -> (i32, i32) {
    %c0_i32 = arith.constant 0 : i32
    %c0_i32_0 = arith.constant 0 : i32
    %c0_i32_1 = arith.constant 0 : i32
    return %c0_i32, %c0_i32_0 : i32, i32
  }
  func.func @transform_4(%arg0: i32, %arg1: i32) -> (i32, i32) {
    %c0_i32 = arith.constant 0 : i32
    %c0_i32_0 = arith.constant 0 : i32
    %c0_i32_1 = arith.constant 0 : i32
    return %c0_i32, %c0_i32_0 : i32, i32
  }
  func.func @transform_5(%arg0: i32, %arg1: i32) -> (i32, i32) {
    %c0_i32 = arith.constant 0 : i32
    %c0_i32_0 = arith.constant 0 : i32
    %c0_i32_1 = arith.constant 0 : i32
    return %c0_i32, %c0_i32_0 : i32, i32
  }
  func.func @transform_6(%arg0: i32, %arg1: i32) -> (i32, i32) {
    %c0_i32 = arith.constant 0 : i32
    %c0_i32_0 = arith.constant 0 : i32
    %c0_i32_1 = arith.constant 0 : i32
    return %c0_i32, %c0_i32_0 : i32, i32
  }
  func.func @transform_7(%arg0: i32, %arg1: i32) -> (i32, i32) {
    %c0_i32 = arith.constant 0 : i32
    %c0_i32_0 = arith.constant 0 : i32
    return %arg0, %c0_i32 : i32, i32
  }
}

</mosaic_0001>

<llo_original>
// kernel: neural_network_forward.1
$region0: #{neural_network_forward.1}
  #allocation0 [shape = 'u32[]', space=smem, size = 0x4, offset = 0x4, fixed_abs, tag = 'smem constant byte address 0x4 - core index']
  #allocation1 [shape = 'u32[72,128]{1,0:T(1,128)}', space=vmem, size = 0x9000, scoped, tag = 'internal scratch']
  #allocation2 [shape = 'f32[8,128]{1,0:T(8,128)}', space=vmem, size = 0x1000, scoped, tag = 'scratch operand']
  #allocation3 [shape = 'f32[1,1]{1,0:T(1,128)S(1)}', space=vmem, size = 0x200, scoped, tag = 'scoped memory for neural_network_forward.1']
  %s0 = inlined_call_operand.vmem [shape: bf16[8,36864], index: 0, kind: input, shape index: {}]
  %s1 = inlined_call_operand.hbm [shape: bf16[36864,128], index: 1, kind: input, shape index: {}]
  %s2 = inlined_call_operand.hbm [shape: f32[1,128], index: 2, kind: input, shape index: {}]
  %s3 = inlined_call_operand.vmem [shape: f32[128,32], index: 3, kind: input, shape index: {}]
  %s4 = inlined_call_operand.hbm [shape: f32[1,32], index: 4, kind: input, shape index: {}]
  %s5 = inlined_call_operand.vmem [shape: f32[32,1], index: 5, kind: input, shape index: {}]
  %s6 = inlined_call_operand.<no memory space> [shape: f32[1,1], index: 6, kind: input, shape index: {}]
  %s7 = inlined_call_operand.vmem [shape: f32[8,1], index: 7, kind: output, shape index: {}]
  %s8 = sld [smem:[#allocation0]]
  $region81: #{neural_network_forward.1} parent=0
    _
  %s10 = ssub.s32 1, %s8
  %s11 = scalar_select 0, %s10, %s8
  %v12 = vstv %s6
  %13 = vst [vmem:[#allocation3] sm:$0x1] %v12
  $region1: #{neural_network_forward.1} parent=0
    #allocation4 [shape = 'u8[4718592]{0}', space=vmem, size = 0x480000, scoped, tag = 'input window, operand 1']
    #allocation5 [shape = 's32[2]{0}', space=sflag, size = 0x8, scoped, tag = 'scoped memory for neural_network_forward.1']
    #allocation6 [shape = 'u8[512]{0}', space=vmem, size = 0x400, scoped, tag = 'input window, operand 2, single buffered']
    #allocation7 [shape = 's32[1]{0}', space=sflag, size = 0x4, scoped, tag = 'scoped memory for neural_network_forward.1']
    #allocation8 [shape = 'u8[512]{0}', space=vmem, size = 0x400, scoped, tag = 'input window, operand 4, single buffered']
    %14 = vsyncpa [#allocation5], 0
    %s15 = scalar_lea.sflag [#allocation5], 1
    %16 = vsyncpa %s15, 0
    %17 = vsyncpa [#allocation7], 0
    loop: start=0, step=1, limit=6
    $region2: #{neural_network_forward.1} parent=1 // loop_pre_header
      _
    $region3: #{neural_network_forward.1} parent=1 // loop_header
      %s19 = sphi 0, %s23
      %p20 = scmp.ge.s32.totalorder %s19, 6
      %s26 = sphi 0, %s38
      %s27 = sphi 0, %s34
      %s28 = sphi 0, %s26
      %s29 = sphi 0, %s27
      %s30 = sphi 0, %s28
      %s31 = sphi 0, %s29
      %s43 = sphi 0, %s45
      %s46 = sphi 0, %s43
      %s47 = sphi 0, %s46
      %s63 = sphi 0, %s47
      %s69 = sphi 0, %s71
      %s72 = sphi 0, %s69
      %s73 = sphi 0, %s72
      %s89 = sphi 0, %s73
      %s93 = sphi 0, %s93
      %s95 = sphi 0, %s93
      %s96 = sphi 0, %s95
      %s110 = sphi 0, %s96
      %s114 = sphi 0, %s114
      %s116 = sphi 0, %s114
      %s117 = sphi 0, %s116
      %s131 = sphi 0, %s117
      %s135 = sphi 0, %s135
      %s137 = sphi 0, %s135
      %s138 = sphi 0, %s137
      %s152 = sphi 0, %s138
      %s156 = sphi 0, %s156
      %s158 = sphi 0, %s156
      %s159 = sphi 0, %s158
      %s173 = sphi 0, %s159
      %s177 = sphi 0, %s177
      %s179 = sphi 0, %s177
      %s180 = sphi 0, %s179
      %s194 = sphi 0, %s180
      %s200 = sphi 0, %s202
      %s203 = sphi 0, %s200
      %s204 = sphi 0, %s203
      %s220 = sphi 0, %s204
    $region4: #{neural_network_forward.1} parent=1 // loop_header_branch
      %22 = sbr.rel (%p20) target = $region8
    $region5: #{neural_network_forward.1} parent=1 // loop_body
      %s24 = ssub.s32 %s19, 1
      %s25 = ssub.s32 %s19, 2
      %s32 = sadd.s32 1, %s27
      %p33 = scmp.ge.s32.totalorder %s32, 4
      %s34 = scalar_select %p33, 0, %s32
      %s35 = sadd.s32 1, %s26
      %s36 = scalar_select %p33, %s35, %s26
      %p37 = scmp.ge.s32.totalorder %s36, 1
      %s38 = scalar_select %p37, 0, %s36
      %s39 = ssub.s32 %s26, %s38
      %s40 = ssub.s32 %s27, %s34
      %s41 = sor.u32 %s39, %s40
      %p42 = scmp.eq.s32.totalorder %s41, 0
      %s44 = sadd.s32 %s43, 1
      %s45 = scalar_select %p42, %s43, %s44
      %p48 = pneg %p42
      %p49 = scmp.eq.s32.totalorder %s19, 3
      %p50 = por %p48, %p49
      %p51 = scmp.ne.s32.totalorder %s43, %s46
      %p52 = scmp.eq.s32.totalorder %s19, 0
      %p53 = por %p51, %p52
      %p54 = scmp.ne.s32.totalorder %s43, %s46
      %p55 = scmp.eq.s32.totalorder %s24, 3
      %p56 = por %p54, %p55
      %p57 = scmp.ne.s32.totalorder %s46, %s47
      %p58 = scmp.eq.s32.totalorder %s24, 0
      %p59 = por %p57, %p58
      %p60 = scmp.ne.s32.totalorder %s46, %s47
      %p61 = scmp.eq.s32.totalorder %s25, 3
      %p62 = por %p60, %p61
      %p64 = scmp.ne.s32.totalorder %s47, %s63
      %p65 = scmp.eq.s32.totalorder %s25, 0
      %p66 = por %p64, %p65
      %s67 = ssub.s32 %s27, %s34
      %p68 = scmp.eq.s32.totalorder %s67, 0
      %s70 = sadd.s32 %s69, 1
      %s71 = scalar_select %p68, %s69, %s70
      %p74 = pneg %p68
      %p75 = scmp.eq.s32.totalorder %s19, 3
      %p76 = por %p74, %p75
      %p77 = scmp.ne.s32.totalorder %s69, %s72
      %p78 = scmp.eq.s32.totalorder %s19, 0
      %p79 = por %p77, %p78
      %p80 = scmp.ne.s32.totalorder %s69, %s72
      %p81 = scmp.eq.s32.totalorder %s24, 3
      %p82 = por %p80, %p81
      %p83 = scmp.ne.s32.totalorder %s72, %s73
      %p84 = scmp.eq.s32.totalorder %s24, 0
      %p85 = por %p83, %p84
      %p86 = scmp.ne.s32.totalorder %s72, %s73
      %p87 = scmp.eq.s32.totalorder %s25, 3
      %p88 = por %p86, %p87
      %p90 = scmp.ne.s32.totalorder %s73, %s89
      %p91 = scmp.eq.s32.totalorder %s25, 0
      %p92 = por %p90, %p91
      %s94 = sadd.s32 %s93, 1
      %p97 = scmp.eq.s32.totalorder %s19, 3
      %p98 = scmp.ne.s32.totalorder %s93, %s95
      %p99 = scmp.eq.s32.totalorder %s19, 0
      %p100 = por %p98, %p99
      %p101 = scmp.ne.s32.totalorder %s93, %s95
      %p102 = scmp.eq.s32.totalorder %s24, 3
      %p103 = por %p101, %p102
      %p104 = scmp.ne.s32.totalorder %s95, %s96
      %p105 = scmp.eq.s32.totalorder %s24, 0
      %p106 = por %p104, %p105
      %p107 = scmp.ne.s32.totalorder %s95, %s96
      %p108 = scmp.eq.s32.totalorder %s25, 3
      %p109 = por %p107, %p108
      %p111 = scmp.ne.s32.totalorder %s96, %s110
      %p112 = scmp.eq.s32.totalorder %s25, 0
      %p113 = por %p111, %p112
      %s115 = sadd.s32 %s114, 1
      %p118 = scmp.eq.s32.totalorder %s19, 3
      %p119 = scmp.ne.s32.totalorder %s114, %s116
      %p120 = scmp.eq.s32.totalorder %s19, 0
      %p121 = por %p119, %p120
      %p122 = scmp.ne.s32.totalorder %s114, %s116
      %p123 = scmp.eq.s32.totalorder %s24, 3
      %p124 = por %p122, %p123
      %p125 = scmp.ne.s32.totalorder %s116, %s117
      %p126 = scmp.eq.s32.totalorder %s24, 0
      %p127 = por %p125, %p126
      %p128 = scmp.ne.s32.totalorder %s116, %s117
      %p129 = scmp.eq.s32.totalorder %s25, 3
      %p130 = por %p128, %p129
      %p132 = scmp.ne.s32.totalorder %s117, %s131
      %p133 = scmp.eq.s32.totalorder %s25, 0
      %p134 = por %p132, %p133
      %s136 = sadd.s32 %s135, 1
      %p139 = scmp.eq.s32.totalorder %s19, 3
      %p140 = scmp.ne.s32.totalorder %s135, %s137
      %p141 = scmp.eq.s32.totalorder %s19, 0
      %p142 = por %p140, %p141
      %p143 = scmp.ne.s32.totalorder %s135, %s137
      %p144 = scmp.eq.s32.totalorder %s24, 3
      %p145 = por %p143, %p144
      %p146 = scmp.ne.s32.totalorder %s137, %s138
      %p147 = scmp.eq.s32.totalorder %s24, 0
      %p148 = por %p146, %p147
      %p149 = scmp.ne.s32.totalorder %s137, %s138
      %p150 = scmp.eq.s32.totalorder %s25, 3
      %p151 = por %p149, %p150
      %p153 = scmp.ne.s32.totalorder %s138, %s152
      %p154 = scmp.eq.s32.totalorder %s25, 0
      %p155 = por %p153, %p154
      %s157 = sadd.s32 %s156, 1
      %p160 = scmp.eq.s32.totalorder %s19, 3
      %p161 = scmp.ne.s32.totalorder %s156, %s158
      %p162 = scmp.eq.s32.totalorder %s19, 0
      %p163 = por %p161, %p162
      %p164 = scmp.ne.s32.totalorder %s156, %s158
      %p165 = scmp.eq.s32.totalorder %s24, 3
      %p166 = por %p164, %p165
      %p167 = scmp.ne.s32.totalorder %s158, %s159
      %p168 = scmp.eq.s32.totalorder %s24, 0
      %p169 = por %p167, %p168
      %p170 = scmp.ne.s32.totalorder %s158, %s159
      %p171 = scmp.eq.s32.totalorder %s25, 3
      %p172 = por %p170, %p171
      %p174 = scmp.ne.s32.totalorder %s159, %s173
      %p175 = scmp.eq.s32.totalorder %s25, 0
      %p176 = por %p174, %p175
      %s178 = sadd.s32 %s177, 1
      %p181 = scmp.eq.s32.totalorder %s19, 3
      %p182 = scmp.ne.s32.totalorder %s177, %s179
      %p183 = scmp.eq.s32.totalorder %s19, 0
      %p184 = por %p182, %p183
      %p185 = scmp.ne.s32.totalorder %s177, %s179
      %p186 = scmp.eq.s32.totalorder %s24, 3
      %p187 = por %p185, %p186
      %p188 = scmp.ne.s32.totalorder %s179, %s180
      %p189 = scmp.eq.s32.totalorder %s24, 0
      %p190 = por %p188, %p189
      %p191 = scmp.ne.s32.totalorder %s179, %s180
      %p192 = scmp.eq.s32.totalorder %s25, 3
      %p193 = por %p191, %p192
      %p195 = scmp.ne.s32.totalorder %s180, %s194
      %p196 = scmp.eq.s32.totalorder %s25, 0
      %p197 = por %p195, %p196
      %s198 = ssub.s32 %s26, %s38
      %p199 = scmp.eq.s32.totalorder %s198, 0
      %s201 = sadd.s32 %s200, 1
      %s202 = scalar_select %p199, %s200, %s201
      %p205 = pneg %p199
      %p206 = scmp.eq.s32.totalorder %s19, 3
      %p207 = por %p205, %p206
      %p208 = scmp.ne.s32.totalorder %s200, %s203
      %p209 = scmp.eq.s32.totalorder %s19, 0
      %p210 = por %p208, %p209
      %p211 = scmp.ne.s32.totalorder %s200, %s203
      %p212 = scmp.eq.s32.totalorder %s24, 3
      %p213 = por %p211, %p212
      %p214 = scmp.ne.s32.totalorder %s203, %s204
      %p215 = scmp.eq.s32.totalorder %s24, 0
      %p216 = por %p214, %p215
      %p217 = scmp.ne.s32.totalorder %s203, %s204
      %p218 = scmp.eq.s32.totalorder %s25, 3
      %p219 = por %p217, %p218
      %p221 = scmp.ne.s32.totalorder %s204, %s220
      %p222 = scmp.eq.s32.totalorder %s25, 0
      %p223 = por %p221, %p222
      %p224 = scmp.le.s32.totalorder 1, %s19
      %p225 = scmp.lt.s32.totalorder %s19, 5
      %p226 = pnand %p224, %p225
      %p227 = pneg %p226
      // Predicated region
      $region9: #{neural_network_forward.1} parent=5 // pred_check
        _
      $region10: #{neural_network_forward.1} parent=5 // pred_check_branch
        %229 = sbr.rel (%p226) target = $region12
      $region11: #{neural_network_forward.1} parent=5 // pred_region
        %s230 = ssub.s32 %s19, 1
        // Predicated region
        $region13: #{neural_network_forward.1} parent=11 // pred_check
          %p231 = pneg %p106
        $region14: #{neural_network_forward.1} parent=11 // pred_check_branch
          %233 = sbr.rel (%p231) target = $region16
        $region15: #{neural_network_forward.1} parent=11 // pred_region
          %235 = vsyncadd [#allocation7], 0
          %s237 = sshll.u32 %s2, 4
          %s238 = int_to_ptr.hbm [resolvable:$true] %s237
          %s239 = sshll.u32 [#allocation6], 4
          %s240 = int_to_ptr.vmem [resolvable:$true] %s239
          %242 = dma.hbm_to_vmem [thread:$0]  %s238, 16, %s240, [#allocation7]
        $region16: #{neural_network_forward.1} parent=11 // pred_fallthru
          _
        // Predicated region
        $region17: #{neural_network_forward.1} parent=11 // pred_check
          %p243 = pneg %p127
        $region18: #{neural_network_forward.1} parent=11 // pred_check_branch
          %245 = sbr.rel (%p243) target = $region20
        $region19: #{neural_network_forward.1} parent=11 // pred_region
          _
        $region20: #{neural_network_forward.1} parent=11 // pred_fallthru
          _
        // Predicated region
        $region21: #{neural_network_forward.1} parent=11 // pred_check
          %p246 = pneg %p148
        $region22: #{neural_network_forward.1} parent=11 // pred_check_branch
          %248 = sbr.rel (%p246) target = $region24
        $region23: #{neural_network_forward.1} parent=11 // pred_region
          %250 = vsyncadd [#allocation7], 0
          %s252 = sshll.u32 %s4, 4
          %s253 = int_to_ptr.hbm [resolvable:$true] %s252
          %s254 = sshll.u32 [#allocation8], 4
          %s255 = int_to_ptr.vmem [resolvable:$true] %s254
          %257 = dma.hbm_to_vmem [thread:$0]  %s253, 16, %s255, [#allocation7]
        $region24: #{neural_network_forward.1} parent=11 // pred_fallthru
          _
        // Predicated region
        $region25: #{neural_network_forward.1} parent=11 // pred_check
          %p258 = pneg %p169
        $region26: #{neural_network_forward.1} parent=11 // pred_check_branch
          %260 = sbr.rel (%p258) target = $region28
        $region27: #{neural_network_forward.1} parent=11 // pred_region
          _
        $region28: #{neural_network_forward.1} parent=11 // pred_fallthru
          _
        // Predicated region
        $region29: #{neural_network_forward.1} parent=11 // pred_check
          %p261 = pneg %p190
        $region30: #{neural_network_forward.1} parent=11 // pred_check_branch
          %263 = sbr.rel (%p261) target = $region32
        $region31: #{neural_network_forward.1} parent=11 // pred_region
          _
        $region32: #{neural_network_forward.1} parent=11 // pred_fallthru
          _
      $region12: #{neural_network_forward.1} parent=5 // pred_fallthru
        _
      %p264 = scmp.lt.s32.totalorder %s19, 4
      // Predicated region
      $region33: #{neural_network_forward.1} parent=5 // pred_check
        %p265 = pneg %p264
      $region34: #{neural_network_forward.1} parent=5 // pred_check_branch
        %267 = sbr.rel (%p265) target = $region36
      $region35: #{neural_network_forward.1} parent=5 // pred_region
        // Predicated region
        $region37: #{neural_network_forward.1} parent=35 // pred_check
          %p268 = pneg %p53
        $region38: #{neural_network_forward.1} parent=35 // pred_check_branch
          %270 = sbr.rel (%p268) target = $region40
        $region39: #{neural_network_forward.1} parent=35 // pred_region
          %s271 = smul.u32 72, %s27
          %p272 = scmp.lt.s32.totalorder %s26, 0
          %s273 = scalar_select %p272, %s26, 0
          %p274 = scmp.lt.s32.totalorder %s271, 287
          %s275 = scalar_select %p274, %s271, 287
          %s276 = smul.addr %s273, 288
          %s277 = sadd.s32 %s275, %s276
          %s278 = smul.addr %s277, 4
          %s279 = scalar_lea.vmem %s0, %s278
          %s280 = smul.u32 72, %s27
        $region40: #{neural_network_forward.1} parent=35 // pred_fallthru
          _
        // Predicated region
        $region41: #{neural_network_forward.1} parent=35 // pred_check
          %p281 = pneg %p79
        $region42: #{neural_network_forward.1} parent=35 // pred_check_branch
          %283 = sbr.rel (%p281) target = $region44
        $region43: #{neural_network_forward.1} parent=35 // pred_region
          %s284 = sand.u32 %s69, 1
          %s285 = scalar_lea.sflag [#allocation5], %s284
          %s286 = sand.u32 %s69, 1
          %s287 = smul.addr %s286, 4608
          %s288 = scalar_lea.vmem [#allocation4], %s287
          %s289 = smul.u32 1152, %s27
          %291 = vsyncadd %s285, 0
          %s292 = smul.addr %s289, 4
          %s293 = scalar_lea.hbm %s1, %s292
          %s294 = sshll.u32 %s293, 4
          %s295 = int_to_ptr.hbm [resolvable:$true] %s294
          %s296 = sshll.u32 %s288, 4
          %s297 = int_to_ptr.vmem [resolvable:$true] %s296
          %302 = dma.hbm_to_vmem [thread:$0]  %s295, 73728, %s297, %s285, 64, 64, 4
        $region44: #{neural_network_forward.1} parent=35 // pred_fallthru
          _
      $region36: #{neural_network_forward.1} parent=5 // pred_fallthru
        _
      %p303 = scmp.le.s32.totalorder 1, %s19
      %p304 = scmp.lt.s32.totalorder %s19, 5
      %p305 = pnand %p303, %p304
      %p306 = pneg %p305
      // Predicated region
      $region45: #{neural_network_forward.1} parent=5 // pred_check
        _
      $region46: #{neural_network_forward.1} parent=5 // pred_check_branch
        %308 = sbr.rel (%p305) target = $region48
      $region47: #{neural_network_forward.1} parent=5 // pred_region
        %s309 = ssub.s32 %s19, 1
        %s310 = sand.u32 %s72, 1
        %s311 = scalar_lea.sflag [#allocation5], %s310
        %s312 = sand.u32 %s72, 1
        %s313 = smul.addr %s312, 4608
        %s314 = scalar_lea.vmem [#allocation4], %s313
        // Predicated region
        $region49: #{neural_network_forward.1} parent=47 // pred_check
          %p315 = pneg %p85
        $region50: #{neural_network_forward.1} parent=47 // pred_check_branch
          %317 = sbr.rel (%p315) target = $region52
        $region51: #{neural_network_forward.1} parent=47 // pred_region
          %319 = dma.done %s311, 73728
        $region52: #{neural_network_forward.1} parent=47 // pred_fallthru
          _
        // Predicated region
        $region53: #{neural_network_forward.1} parent=47 // pred_check
          %p320 = pneg %p106
        $region54: #{neural_network_forward.1} parent=47 // pred_check_branch
          %322 = sbr.rel (%p320) target = $region56
        $region55: #{neural_network_forward.1} parent=47 // pred_region
          %324 = dma.done [#allocation7], 16
        $region56: #{neural_network_forward.1} parent=47 // pred_fallthru
          _
        // Predicated region
        $region57: #{neural_network_forward.1} parent=47 // pred_check
          %p325 = pneg %p148
        $region58: #{neural_network_forward.1} parent=47 // pred_check_branch
          %327 = sbr.rel (%p325) target = $region60
        $region59: #{neural_network_forward.1} parent=47 // pred_region
          %329 = dma.done [#allocation7], 16
        $region60: #{neural_network_forward.1} parent=47 // pred_fallthru
          _
        %s330 = smul.u32 72, %s29
        %p331 = scmp.lt.s32.totalorder %s28, 0
        %s332 = scalar_select %p331, %s28, 0
        %p333 = scmp.lt.s32.totalorder %s330, 287
        %s334 = scalar_select %p333, %s330, 287
        %s335 = smul.addr %s332, 288
        %s336 = sadd.s32 %s334, %s335
        %s337 = smul.addr %s336, 4
        %s338 = scalar_lea.vmem %s0, %s337
        %p339 = pneg %p59
        %p340 = pneg %p56
        %s341 = sand.u32 %s72, 1
        %s342 = scalar_lea.sflag [#allocation5], %s341
        %s343 = sand.u32 %s72, 1
        %s344 = smul.addr %s343, 4608
        %s345 = scalar_lea.vmem [#allocation4], %s344
        %p346 = pneg %p85
        %p347 = pneg %p82
        %p348 = pneg %p106
        %p349 = pneg %p103
        %p350 = pneg %p127
        %p351 = pneg %p124
        %p352 = pneg %p148
        %p353 = pneg %p145
        %p354 = pneg %p169
        %p355 = pneg %p166
        %p356 = pneg %p190
        %p357 = pneg %p187
        %p358 = pneg %p216
        %p359 = pneg %p213
        %p360 = scmp.lt.s32.totalorder %s28, 0
        %s361 = scalar_select %p360, %s28, 0
        %s362 = smul.addr %s361, 8
        %s363 = scalar_lea.vmem %s7, %s362
        %s364 = smul.u32 72, %s29
        %p365 = scmp.lt.s32.totalorder %s28, 0
        %s366 = scalar_select %p365, %s28, 0
        %p367 = scmp.lt.s32.totalorder %s364, 287
        %s368 = scalar_select %p367, %s364, 287
        %s369 = smul.addr %s366, 288
        %s370 = sadd.s32 %s368, %s369
        %s371 = smul.addr %s370, 4
        %s372 = scalar_lea.vmem %s0, %s371
        %s373 = smul.u32 72, %s29
        %s374 = smul.u32 1152, %s29
        %p375 = scmp.lt.s32.totalorder %s28, 0
        %s376 = scalar_select %p375, %s28, 0
        %s377 = smul.addr %s376, 8
        %s378 = scalar_lea.vmem %s7, %s377
        %p379 = scmp.eq.s32.totalorder %s29, 0
        // Predicated region
        $region61: #{neural_network_forward.1} parent=47 // pred_check
          %p380 = pneg %p379
        $region62: #{neural_network_forward.1} parent=47 // pred_check_branch
          %382 = sbr.rel (%p380) target = $region64
        $region63: #{neural_network_forward.1} parent=47 // pred_region
          %383 = vst [vmem:[#allocation2] sm:$0xff] 0.0
        $region64: #{neural_network_forward.1} parent=47 // pred_fallthru
          _
        %v384 = vld [vmem:[#allocation2] sm:$0xff]
        %v385 = vld [vmem:[%s372] sm:$0xff]
        %v386 = vld [vmem:[%s372 + $0x8] sm:$0xff]
        %v387 = vld [vmem:[%s372 + $0x10] sm:$0xff]
        %v388 = vld [vmem:[%s372 + $0x18] sm:$0xff]
        %v389 = vld [vmem:[%s372 + $0x20] sm:$0xff]
        %v390 = vld [vmem:[%s372 + $0x28] sm:$0xff]
        %v391 = vld [vmem:[%s372 + $0x30] sm:$0xff]
        %v392 = vld [vmem:[%s372 + $0x38] sm:$0xff]
        %v393 = vld [vmem:[%s372 + $0x40] sm:$0xff]
        %v394 = vld [vmem:[%s372 + $0x48] sm:$0xff]
        %v395 = vld [vmem:[%s372 + $0x50] sm:$0xff]
        %v396 = vld [vmem:[%s372 + $0x58] sm:$0xff]
        %v397 = vld [vmem:[%s372 + $0x60] sm:$0xff]
        %v398 = vld [vmem:[%s372 + $0x68] sm:$0xff]
        %v399 = vld [vmem:[%s372 + $0x70] sm:$0xff]
        %v400 = vld [vmem:[%s372 + $0x78] sm:$0xff]
        %v401 = vld [vmem:[%s372 + $0x80] sm:$0xff]
        %v402 = vld [vmem:[%s372 + $0x88] sm:$0xff]
        %v403 = vld [vmem:[%s372 + $0x90] sm:$0xff]
        %v404 = vld [vmem:[%s372 + $0x98] sm:$0xff]
        %v405 = vld [vmem:[%s372 + $0xa0] sm:$0xff]
        %v406 = vld [vmem:[%s372 + $0xa8] sm:$0xff]
        %v407 = vld [vmem:[%s372 + $0xb0] sm:$0xff]
        %v408 = vld [vmem:[%s372 + $0xb8] sm:$0xff]
        %v409 = vld [vmem:[%s372 + $0xc0] sm:$0xff]
        %v410 = vld [vmem:[%s372 + $0xc8] sm:$0xff]
        %v411 = vld [vmem:[%s372 + $0xd0] sm:$0xff]
        %v412 = vld [vmem:[%s372 + $0xd8] sm:$0xff]
        %v413 = vld [vmem:[%s372 + $0xe0] sm:$0xff]
        %v414 = vld [vmem:[%s372 + $0xe8] sm:$0xff]
        %v415 = vld [vmem:[%s372 + $0xf0] sm:$0xff]
        %v416 = vld [vmem:[%s372 + $0xf8] sm:$0xff]
        %v417 = vld [vmem:[%s372 + $0x100] sm:$0xff]
        %v418 = vld [vmem:[%s372 + $0x108] sm:$0xff]
        %v419 = vld [vmem:[%s372 + $0x110] sm:$0xff]
        %v420 = vld [vmem:[%s372 + $0x118] sm:$0xff]
        %v421 = vld [vmem:[%s314] sm:$0xf]
        %v422 = vld [vmem:[%s314 + $0x4] sm:$0xf]
        %v423 = vld [vmem:[%s314 + $0x8] sm:$0xf]
        %v424 = vld [vmem:[%s314 + $0xc] sm:$0xf]
        %v425 = vld [vmem:[%s314 + $0x10] sm:$0xf]
        %v426 = vld [vmem:[%s314 + $0x14] sm:$0xf]
        %v427 = vld [vmem:[%s314 + $0x18] sm:$0xf]
        %v428 = vld [vmem:[%s314 + $0x1c] sm:$0xf]
        %v429 = vld [vmem:[%s314 + $0x20] sm:$0xf]
        %v430 = vld [vmem:[%s314 + $0x24] sm:$0xf]
        %v431 = vld [vmem:[%s314 + $0x28] sm:$0xf]
        %v432 = vld [vmem:[%s314 + $0x2c] sm:$0xf]
        %v433 = vld [vmem:[%s314 + $0x30] sm:$0xf]
        %v434 = vld [vmem:[%s314 + $0x34] sm:$0xf]
        %v435 = vld [vmem:[%s314 + $0x38] sm:$0xf]
        %v436 = vld [vmem:[%s314 + $0x3c] sm:$0xf]
        %v437 = vld [vmem:[%s314 + $0x40] sm:$0xf]
        %v438 = vld [vmem:[%s314 + $0x44] sm:$0xf]
        %v439 = vld [vmem:[%s314 + $0x48] sm:$0xf]
        %v440 = vld [vmem:[%s314 + $0x4c] sm:$0xf]
        %v441 = vld [vmem:[%s314 + $0x50] sm:$0xf]
        %v442 = vld [vmem:[%s314 + $0x54] sm:$0xf]
        %v443 = vld [vmem:[%s314 + $0x58] sm:$0xf]
        %v444 = vld [vmem:[%s314 + $0x5c] sm:$0xf]
        %v445 = vld [vmem:[%s314 + $0x60] sm:$0xf]
        %v446 = vld [vmem:[%s314 + $0x64] sm:$0xf]
        %v447 = vld [vmem:[%s314 + $0x68] sm:$0xf]
        %v448 = vld [vmem:[%s314 + $0x6c] sm:$0xf]
        %v449 = vld [vmem:[%s314 + $0x70] sm:$0xf]
        %v450 = vld [vmem:[%s314 + $0x74] sm:$0xf]
        %v451 = vld [vmem:[%s314 + $0x78] sm:$0xf]
        %v452 = vld [vmem:[%s314 + $0x7c] sm:$0xf]
        %v453 = vld [vmem:[%s314 + $0x80] sm:$0xf]
        %v454 = vld [vmem:[%s314 + $0x84] sm:$0xf]
        %v455 = vld [vmem:[%s314 + $0x88] sm:$0xf]
        %v456 = vld [vmem:[%s314 + $0x8c] sm:$0xf]
        %v457 = vld [vmem:[%s314 + $0x90] sm:$0xf]
        %v458 = vld [vmem:[%s314 + $0x94] sm:$0xf]
        %v459 = vld [vmem:[%s314 + $0x98] sm:$0xf]
        %v460 = vld [vmem:[%s314 + $0x9c] sm:$0xf]
        %v461 = vld [vmem:[%s314 + $0xa0] sm:$0xf]
        %v462 = vld [vmem:[%s314 + $0xa4] sm:$0xf]
        %v463 = vld [vmem:[%s314 + $0xa8] sm:$0xf]
        %v464 = vld [vmem:[%s314 + $0xac] sm:$0xf]
        %v465 = vld [vmem:[%s314 + $0xb0] sm:$0xf]
        %v466 = vld [vmem:[%s314 + $0xb4] sm:$0xf]
        %v467 = vld [vmem:[%s314 + $0xb8] sm:$0xf]
        %v468 = vld [vmem:[%s314 + $0xbc] sm:$0xf]
        %v469 = vld [vmem:[%s314 + $0xc0] sm:$0xf]
        %v470 = vld [vmem:[%s314 + $0xc4] sm:$0xf]
        %v471 = vld [vmem:[%s314 + $0xc8] sm:$0xf]
        %v472 = vld [vmem:[%s314 + $0xcc] sm:$0xf]
        %v473 = vld [vmem:[%s314 + $0xd0] sm:$0xf]
        %v474 = vld [vmem:[%s314 + $0xd4] sm:$0xf]
        %v475 = vld [vmem:[%s314 + $0xd8] sm:$0xf]
        %v476 = vld [vmem:[%s314 + $0xdc] sm:$0xf]
        %v477 = vld [vmem:[%s314 + $0xe0] sm:$0xf]
        %v478 = vld [vmem:[%s314 + $0xe4] sm:$0xf]
        %v479 = vld [vmem:[%s314 + $0xe8] sm:$0xf]
        %v480 = vld [vmem:[%s314 + $0xec] sm:$0xf]
        %v481 = vld [vmem:[%s314 + $0xf0] sm:$0xf]
        %v482 = vld [vmem:[%s314 + $0xf4] sm:$0xf]
        %v483 = vld [vmem:[%s314 + $0xf8] sm:$0xf]
        %v484 = vld [vmem:[%s314 + $0xfc] sm:$0xf]
        %v485 = vld [vmem:[%s314 + $0x100] sm:$0xf]
        %v486 = vld [vmem:[%s314 + $0x104] sm:$0xf]
        %v487 = vld [vmem:[%s314 + $0x108] sm:$0xf]
        %v488 = vld [vmem:[%s314 + $0x10c] sm:$0xf]
        %v489 = vld [vmem:[%s314 + $0x110] sm:$0xf]
        %v490 = vld [vmem:[%s314 + $0x114] sm:$0xf]
        %v491 = vld [vmem:[%s314 + $0x118] sm:$0xf]
        %v492 = vld [vmem:[%s314 + $0x11c] sm:$0xf]
        %v493 = vld [vmem:[%s314 + $0x120] sm:$0xf]
        %v494 = vld [vmem:[%s314 + $0x124] sm:$0xf]
        %v495 = vld [vmem:[%s314 + $0x128] sm:$0xf]
        %v496 = vld [vmem:[%s314 + $0x12c] sm:$0xf]
        %v497 = vld [vmem:[%s314 + $0x130] sm:$0xf]
        %v498 = vld [vmem:[%s314 + $0x134] sm:$0xf]
        %v499 = vld [vmem:[%s314 + $0x138] sm:$0xf]
        %v500 = vld [vmem:[%s314 + $0x13c] sm:$0xf]
        %v501 = vld [vmem:[%s314 + $0x140] sm:$0xf]
        %v502 = vld [vmem:[%s314 + $0x144] sm:$0xf]
        %v503 = vld [vmem:[%s314 + $0x148] sm:$0xf]
        %v504 = vld [vmem:[%s314 + $0x14c] sm:$0xf]
        %v505 = vld [vmem:[%s314 + $0x150] sm:$0xf]
        %v506 = vld [vmem:[%s314 + $0x154] sm:$0xf]
        %v507 = vld [vmem:[%s314 + $0x158] sm:$0xf]
        %v508 = vld [vmem:[%s314 + $0x15c] sm:$0xf]
        %v509 = vld [vmem:[%s314 + $0x160] sm:$0xf]
        %v510 = vld [vmem:[%s314 + $0x164] sm:$0xf]
        %v511 = vld [vmem:[%s314 + $0x168] sm:$0xf]
        %v512 = vld [vmem:[%s314 + $0x16c] sm:$0xf]
        %v513 = vld [vmem:[%s314 + $0x170] sm:$0xf]
        %v514 = vld [vmem:[%s314 + $0x174] sm:$0xf]
        %v515 = vld [vmem:[%s314 + $0x178] sm:$0xf]
        %v516 = vld [vmem:[%s314 + $0x17c] sm:$0xf]
        %v517 = vld [vmem:[%s314 + $0x180] sm:$0xf]
        %v518 = vld [vmem:[%s314 + $0x184] sm:$0xf]
        %v519 = vld [vmem:[%s314 + $0x188] sm:$0xf]
        %v520 = vld [vmem:[%s314 + $0x18c] sm:$0xf]
        %v521 = vld [vmem:[%s314 + $0x190] sm:$0xf]
        %v522 = vld [vmem:[%s314 + $0x194] sm:$0xf]
        %v523 = vld [vmem:[%s314 + $0x198] sm:$0xf]
        %v524 = vld [vmem:[%s314 + $0x19c] sm:$0xf]
        %v525 = vld [vmem:[%s314 + $0x1a0] sm:$0xf]
        %v526 = vld [vmem:[%s314 + $0x1a4] sm:$0xf]
        %v527 = vld [vmem:[%s314 + $0x1a8] sm:$0xf]
        %v528 = vld [vmem:[%s314 + $0x1ac] sm:$0xf]
        %v529 = vld [vmem:[%s314 + $0x1b0] sm:$0xf]
        %v530 = vld [vmem:[%s314 + $0x1b4] sm:$0xf]
        %v531 = vld [vmem:[%s314 + $0x1b8] sm:$0xf]
        %v532 = vld [vmem:[%s314 + $0x1bc] sm:$0xf]
        %v533 = vld [vmem:[%s314 + $0x1c0] sm:$0xf]
        %v534 = vld [vmem:[%s314 + $0x1c4] sm:$0xf]
        %v535 = vld [vmem:[%s314 + $0x1c8] sm:$0xf]
        %v536 = vld [vmem:[%s314 + $0x1cc] sm:$0xf]
        %v537 = vld [vmem:[%s314 + $0x1d0] sm:$0xf]
        %v538 = vld [vmem:[%s314 + $0x1d4] sm:$0xf]
        %v539 = vld [vmem:[%s314 + $0x1d8] sm:$0xf]
        %v540 = vld [vmem:[%s314 + $0x1dc] sm:$0xf]
        %v541 = vld [vmem:[%s314 + $0x1e0] sm:$0xf]
        %v542 = vld [vmem:[%s314 + $0x1e4] sm:$0xf]
        %v543 = vld [vmem:[%s314 + $0x1e8] sm:$0xf]
        %v544 = vld [vmem:[%s314 + $0x1ec] sm:$0xf]
        %v545 = vld [vmem:[%s314 + $0x1f0] sm:$0xf]
        %v546 = vld [vmem:[%s314 + $0x1f4] sm:$0xf]
        %v547 = vld [vmem:[%s314 + $0x1f8] sm:$0xf]
        %v548 = vld [vmem:[%s314 + $0x1fc] sm:$0xf]
        %v549 = vld [vmem:[%s314 + $0x200] sm:$0xf]
        %v550 = vld [vmem:[%s314 + $0x204] sm:$0xf]
        %v551 = vld [vmem:[%s314 + $0x208] sm:$0xf]
        %v552 = vld [vmem:[%s314 + $0x20c] sm:$0xf]
        %v553 = vld [vmem:[%s314 + $0x210] sm:$0xf]
        %v554 = vld [vmem:[%s314 + $0x214] sm:$0xf]
        %v555 = vld [vmem:[%s314 + $0x218] sm:$0xf]
        %v556 = vld [vmem:[%s314 + $0x21c] sm:$0xf]
        %v557 = vld [vmem:[%s314 + $0x220] sm:$0xf]
        %v558 = vld [vmem:[%s314 + $0x224] sm:$0xf]
        %v559 = vld [vmem:[%s314 + $0x228] sm:$0xf]
        %v560 = vld [vmem:[%s314 + $0x22c] sm:$0xf]
        %v561 = vld [vmem:[%s314 + $0x230] sm:$0xf]
        %v562 = vld [vmem:[%s314 + $0x234] sm:$0xf]
        %v563 = vld [vmem:[%s314 + $0x238] sm:$0xf]
        %v564 = vld [vmem:[%s314 + $0x23c] sm:$0xf]
        %v565 = vld [vmem:[%s314 + $0x240] sm:$0xf]
        %v566 = vld [vmem:[%s314 + $0x244] sm:$0xf]
        %v567 = vld [vmem:[%s314 + $0x248] sm:$0xf]
        %v568 = vld [vmem:[%s314 + $0x24c] sm:$0xf]
        %v569 = vld [vmem:[%s314 + $0x250] sm:$0xf]
        %v570 = vld [vmem:[%s314 + $0x254] sm:$0xf]
        %v571 = vld [vmem:[%s314 + $0x258] sm:$0xf]
        %v572 = vld [vmem:[%s314 + $0x25c] sm:$0xf]
        %v573 = vld [vmem:[%s314 + $0x260] sm:$0xf]
        %v574 = vld [vmem:[%s314 + $0x264] sm:$0xf]
        %v575 = vld [vmem:[%s314 + $0x268] sm:$0xf]
        %v576 = vld [vmem:[%s314 + $0x26c] sm:$0xf]
        %v577 = vld [vmem:[%s314 + $0x270] sm:$0xf]
        %v578 = vld [vmem:[%s314 + $0x274] sm:$0xf]
        %v579 = vld [vmem:[%s314 + $0x278] sm:$0xf]
        %v580 = vld [vmem:[%s314 + $0x27c] sm:$0xf]
        %v581 = vld [vmem:[%s314 + $0x280] sm:$0xf]
        %v582 = vld [vmem:[%s314 + $0x284] sm:$0xf]
        %v583 = vld [vmem:[%s314 + $0x288] sm:$0xf]
        %v584 = vld [vmem:[%s314 + $0x28c] sm:$0xf]
        %v585 = vld [vmem:[%s314 + $0x290] sm:$0xf]
        %v586 = vld [vmem:[%s314 + $0x294] sm:$0xf]
        %v587 = vld [vmem:[%s314 + $0x298] sm:$0xf]
        %v588 = vld [vmem:[%s314 + $0x29c] sm:$0xf]
        %v589 = vld [vmem:[%s314 + $0x2a0] sm:$0xf]
        %v590 = vld [vmem:[%s314 + $0x2a4] sm:$0xf]
        %v591 = vld [vmem:[%s314 + $0x2a8] sm:$0xf]
        %v592 = vld [vmem:[%s314 + $0x2ac] sm:$0xf]
        %v593 = vld [vmem:[%s314 + $0x2b0] sm:$0xf]
        %v594 = vld [vmem:[%s314 + $0x2b4] sm:$0xf]
        %v595 = vld [vmem:[%s314 + $0x2b8] sm:$0xf]
        %v596 = vld [vmem:[%s314 + $0x2bc] sm:$0xf]
        %v597 = vld [vmem:[%s314 + $0x2c0] sm:$0xf]
        %v598 = vld [vmem:[%s314 + $0x2c4] sm:$0xf]
        %v599 = vld [vmem:[%s314 + $0x2c8] sm:$0xf]
        %v600 = vld [vmem:[%s314 + $0x2cc] sm:$0xf]
        %v601 = vld [vmem:[%s314 + $0x2d0] sm:$0xf]
        %v602 = vld [vmem:[%s314 + $0x2d4] sm:$0xf]
        %v603 = vld [vmem:[%s314 + $0x2d8] sm:$0xf]
        %v604 = vld [vmem:[%s314 + $0x2dc] sm:$0xf]
        %v605 = vld [vmem:[%s314 + $0x2e0] sm:$0xf]
        %v606 = vld [vmem:[%s314 + $0x2e4] sm:$0xf]
        %v607 = vld [vmem:[%s314 + $0x2e8] sm:$0xf]
        %v608 = vld [vmem:[%s314 + $0x2ec] sm:$0xf]
        %v609 = vld [vmem:[%s314 + $0x2f0] sm:$0xf]
        %v610 = vld [vmem:[%s314 + $0x2f4] sm:$0xf]
        %v611 = vld [vmem:[%s314 + $0x2f8] sm:$0xf]
        %v612 = vld [vmem:[%s314 + $0x2fc] sm:$0xf]
        %v613 = vld [vmem:[%s314 + $0x300] sm:$0xf]
        %v614 = vld [vmem:[%s314 + $0x304] sm:$0xf]
        %v615 = vld [vmem:[%s314 + $0x308] sm:$0xf]
        %v616 = vld [vmem:[%s314 + $0x30c] sm:$0xf]
        %v617 = vld [vmem:[%s314 + $0x310] sm:$0xf]
        %v618 = vld [vmem:[%s314 + $0x314] sm:$0xf]
        %v619 = vld [vmem:[%s314 + $0x318] sm:$0xf]
        %v620 = vld [vmem:[%s314 + $0x31c] sm:$0xf]
        %v621 = vld [vmem:[%s314 + $0x320] sm:$0xf]
        %v622 = vld [vmem:[%s314 + $0x324] sm:$0xf]
        %v623 = vld [vmem:[%s314 + $0x328] sm:$0xf]
        %v624 = vld [vmem:[%s314 + $0x32c] sm:$0xf]
        %v625 = vld [vmem:[%s314 + $0x330] sm:$0xf]
        %v626 = vld [vmem:[%s314 + $0x334] sm:$0xf]
        %v627 = vld [vmem:[%s314 + $0x338] sm:$0xf]
        %v628 = vld [vmem:[%s314 + $0x33c] sm:$0xf]
        %v629 = vld [vmem:[%s314 + $0x340] sm:$0xf]
        %v630 = vld [vmem:[%s314 + $0x344] sm:$0xf]
        %v631 = vld [vmem:[%s314 + $0x348] sm:$0xf]
        %v632 = vld [vmem:[%s314 + $0x34c] sm:$0xf]
        %v633 = vld [vmem:[%s314 + $0x350] sm:$0xf]
        %v634 = vld [vmem:[%s314 + $0x354] sm:$0xf]
        %v635 = vld [vmem:[%s314 + $0x358] sm:$0xf]
        %v636 = vld [vmem:[%s314 + $0x35c] sm:$0xf]
        %v637 = vld [vmem:[%s314 + $0x360] sm:$0xf]
        %v638 = vld [vmem:[%s314 + $0x364] sm:$0xf]
        %v639 = vld [vmem:[%s314 + $0x368] sm:$0xf]
        %v640 = vld [vmem:[%s314 + $0x36c] sm:$0xf]
        %v641 = vld [vmem:[%s314 + $0x370] sm:$0xf]
        %v642 = vld [vmem:[%s314 + $0x374] sm:$0xf]
        %v643 = vld [vmem:[%s314 + $0x378] sm:$0xf]
        %v644 = vld [vmem:[%s314 + $0x37c] sm:$0xf]
        %v645 = vld [vmem:[%s314 + $0x380] sm:$0xf]
        %v646 = vld [vmem:[%s314 + $0x384] sm:$0xf]
        %v647 = vld [vmem:[%s314 + $0x388] sm:$0xf]
        %v648 = vld [vmem:[%s314 + $0x38c] sm:$0xf]
        %v649 = vld [vmem:[%s314 + $0x390] sm:$0xf]
        %v650 = vld [vmem:[%s314 + $0x394] sm:$0xf]
        %v651 = vld [vmem:[%s314 + $0x398] sm:$0xf]
        %v652 = vld [vmem:[%s314 + $0x39c] sm:$0xf]
        %v653 = vld [vmem:[%s314 + $0x3a0] sm:$0xf]
        %v654 = vld [vmem:[%s314 + $0x3a4] sm:$0xf]
        %v655 = vld [vmem:[%s314 + $0x3a8] sm:$0xf]
        %v656 = vld [vmem:[%s314 + $0x3ac] sm:$0xf]
        %v657 = vld [vmem:[%s314 + $0x3b0] sm:$0xf]
        %v658 = vld [vmem:[%s314 + $0x3b4] sm:$0xf]
        %v659 = vld [vmem:[%s314 + $0x3b8] sm:$0xf]
        %v660 = vld [vmem:[%s314 + $0x3bc] sm:$0xf]
        %v661 = vld [vmem:[%s314 + $0x3c0] sm:$0xf]
        %v662 = vld [vmem:[%s314 + $0x3c4] sm:$0xf]
        %v663 = vld [vmem:[%s314 + $0x3c8] sm:$0xf]
        %v664 = vld [vmem:[%s314 + $0x3cc] sm:$0xf]
        %v665 = vld [vmem:[%s314 + $0x3d0] sm:$0xf]
        %v666 = vld [vmem:[%s314 + $0x3d4] sm:$0xf]
        %v667 = vld [vmem:[%s314 + $0x3d8] sm:$0xf]
        %v668 = vld [vmem:[%s314 + $0x3dc] sm:$0xf]
        %v669 = vld [vmem:[%s314 + $0x3e0] sm:$0xf]
        %v670 = vld [vmem:[%s314 + $0x3e4] sm:$0xf]
        %v671 = vld [vmem:[%s314 + $0x3e8] sm:$0xf]
        %v672 = vld [vmem:[%s314 + $0x3ec] sm:$0xf]
        %v673 = vld [vmem:[%s314 + $0x3f0] sm:$0xf]
        %v674 = vld [vmem:[%s314 + $0x3f4] sm:$0xf]
        %v675 = vld [vmem:[%s314 + $0x3f8] sm:$0xf]
        %v676 = vld [vmem:[%s314 + $0x3fc] sm:$0xf]
        %v677 = vld [vmem:[%s314 + $0x400] sm:$0xf]
        %v678 = vld [vmem:[%s314 + $0x404] sm:$0xf]
        %v679 = vld [vmem:[%s314 + $0x408] sm:$0xf]
        %v680 = vld [vmem:[%s314 + $0x40c] sm:$0xf]
        %v681 = vld [vmem:[%s314 + $0x410] sm:$0xf]
        %v682 = vld [vmem:[%s314 + $0x414] sm:$0xf]
        %v683 = vld [vmem:[%s314 + $0x418] sm:$0xf]
        %v684 = vld [vmem:[%s314 + $0x41c] sm:$0xf]
        %v685 = vld [vmem:[%s314 + $0x420] sm:$0xf]
        %v686 = vld [vmem:[%s314 + $0x424] sm:$0xf]
        %v687 = vld [vmem:[%s314 + $0x428] sm:$0xf]
        %v688 = vld [vmem:[%s314 + $0x42c] sm:$0xf]
        %v689 = vld [vmem:[%s314 + $0x430] sm:$0xf]
        %v690 = vld [vmem:[%s314 + $0x434] sm:$0xf]
        %v691 = vld [vmem:[%s314 + $0x438] sm:$0xf]
        %v692 = vld [vmem:[%s314 + $0x43c] sm:$0xf]
        %v693 = vld [vmem:[%s314 + $0x440] sm:$0xf]
        %v694 = vld [vmem:[%s314 + $0x444] sm:$0xf]
        %v695 = vld [vmem:[%s314 + $0x448] sm:$0xf]
        %v696 = vld [vmem:[%s314 + $0x44c] sm:$0xf]
        %v697 = vld [vmem:[%s314 + $0x450] sm:$0xf]
        %v698 = vld [vmem:[%s314 + $0x454] sm:$0xf]
        %v699 = vld [vmem:[%s314 + $0x458] sm:$0xf]
        %v700 = vld [vmem:[%s314 + $0x45c] sm:$0xf]
        %v701 = vld [vmem:[%s314 + $0x460] sm:$0xf]
        %v702 = vld [vmem:[%s314 + $0x464] sm:$0xf]
        %v703 = vld [vmem:[%s314 + $0x468] sm:$0xf]
        %v704 = vld [vmem:[%s314 + $0x46c] sm:$0xf]
        %v705 = vld [vmem:[%s314 + $0x470] sm:$0xf]
        %v706 = vld [vmem:[%s314 + $0x474] sm:$0xf]
        %v707 = vld [vmem:[%s314 + $0x478] sm:$0xf]
        %v708 = vld [vmem:[%s314 + $0x47c] sm:$0xf]
        %v709 = vld [vmem:[%s314 + $0x480] sm:$0xf]
        %v710 = vld [vmem:[%s314 + $0x484] sm:$0xf]
        %v711 = vld [vmem:[%s314 + $0x488] sm:$0xf]
        %v712 = vld [vmem:[%s314 + $0x48c] sm:$0xf]
        %v713 = vld [vmem:[%s314 + $0x490] sm:$0xf]
        %v714 = vld [vmem:[%s314 + $0x494] sm:$0xf]
        %v715 = vld [vmem:[%s314 + $0x498] sm:$0xf]
        %v716 = vld [vmem:[%s314 + $0x49c] sm:$0xf]
        %v717 = vld [vmem:[%s314 + $0x4a0] sm:$0xf]
        %v718 = vld [vmem:[%s314 + $0x4a4] sm:$0xf]
        %v719 = vld [vmem:[%s314 + $0x4a8] sm:$0xf]
        %v720 = vld [vmem:[%s314 + $0x4ac] sm:$0xf]
        %v721 = vld [vmem:[%s314 + $0x4b0] sm:$0xf]
        %v722 = vld [vmem:[%s314 + $0x4b4] sm:$0xf]
        %v723 = vld [vmem:[%s314 + $0x4b8] sm:$0xf]
        %v724 = vld [vmem:[%s314 + $0x4bc] sm:$0xf]
        %v725 = vld [vmem:[%s314 + $0x4c0] sm:$0xf]
        %v726 = vld [vmem:[%s314 + $0x4c4] sm:$0xf]
        %v727 = vld [vmem:[%s314 + $0x4c8] sm:$0xf]
        %v728 = vld [vmem:[%s314 + $0x4cc] sm:$0xf]
        %v729 = vld [vmem:[%s314 + $0x4d0] sm:$0xf]
        %v730 = vld [vmem:[%s314 + $0x4d4] sm:$0xf]
        %v731 = vld [vmem:[%s314 + $0x4d8] sm:$0xf]
        %v732 = vld [vmem:[%s314 + $0x4dc] sm:$0xf]
        %v733 = vld [vmem:[%s314 + $0x4e0] sm:$0xf]
        %v734 = vld [vmem:[%s314 + $0x4e4] sm:$0xf]
        %v735 = vld [vmem:[%s314 + $0x4e8] sm:$0xf]
        %v736 = vld [vmem:[%s314 + $0x4ec] sm:$0xf]
        %v737 = vld [vmem:[%s314 + $0x4f0] sm:$0xf]
        %v738 = vld [vmem:[%s314 + $0x4f4] sm:$0xf]
        %v739 = vld [vmem:[%s314 + $0x4f8] sm:$0xf]
        %v740 = vld [vmem:[%s314 + $0x4fc] sm:$0xf]
        %v741 = vld [vmem:[%s314 + $0x500] sm:$0xf]
        %v742 = vld [vmem:[%s314 + $0x504] sm:$0xf]
        %v743 = vld [vmem:[%s314 + $0x508] sm:$0xf]
        %v744 = vld [vmem:[%s314 + $0x50c] sm:$0xf]
        %v745 = vld [vmem:[%s314 + $0x510] sm:$0xf]
        %v746 = vld [vmem:[%s314 + $0x514] sm:$0xf]
        %v747 = vld [vmem:[%s314 + $0x518] sm:$0xf]
        %v748 = vld [vmem:[%s314 + $0x51c] sm:$0xf]
        %v749 = vld [vmem:[%s314 + $0x520] sm:$0xf]
        %v750 = vld [vmem:[%s314 + $0x524] sm:$0xf]
        %v751 = vld [vmem:[%s314 + $0x528] sm:$0xf]
        %v752 = vld [vmem:[%s314 + $0x52c] sm:$0xf]
        %v753 = vld [vmem:[%s314 + $0x530] sm:$0xf]
        %v754 = vld [vmem:[%s314 + $0x534] sm:$0xf]
        %v755 = vld [vmem:[%s314 + $0x538] sm:$0xf]
        %v756 = vld [vmem:[%s314 + $0x53c] sm:$0xf]
        %v757 = vld [vmem:[%s314 + $0x540] sm:$0xf]
        %v758 = vld [vmem:[%s314 + $0x544] sm:$0xf]
        %v759 = vld [vmem:[%s314 + $0x548] sm:$0xf]
        %v760 = vld [vmem:[%s314 + $0x54c] sm:$0xf]
        %v761 = vld [vmem:[%s314 + $0x550] sm:$0xf]
        %v762 = vld [vmem:[%s314 + $0x554] sm:$0xf]
        %v763 = vld [vmem:[%s314 + $0x558] sm:$0xf]
        %v764 = vld [vmem:[%s314 + $0x55c] sm:$0xf]
        %v765 = vld [vmem:[%s314 + $0x560] sm:$0xf]
        %v766 = vld [vmem:[%s314 + $0x564] sm:$0xf]
        %v767 = vld [vmem:[%s314 + $0x568] sm:$0xf]
        %v768 = vld [vmem:[%s314 + $0x56c] sm:$0xf]
        %v769 = vld [vmem:[%s314 + $0x570] sm:$0xf]
        %v770 = vld [vmem:[%s314 + $0x574] sm:$0xf]
        %v771 = vld [vmem:[%s314 + $0x578] sm:$0xf]
        %v772 = vld [vmem:[%s314 + $0x57c] sm:$0xf]
        %v773 = vld [vmem:[%s314 + $0x580] sm:$0xf]
        %v774 = vld [vmem:[%s314 + $0x584] sm:$0xf]
        %v775 = vld [vmem:[%s314 + $0x588] sm:$0xf]
        %v776 = vld [vmem:[%s314 + $0x58c] sm:$0xf]
        %v777 = vld [vmem:[%s314 + $0x590] sm:$0xf]
        %v778 = vld [vmem:[%s314 + $0x594] sm:$0xf]
        %v779 = vld [vmem:[%s314 + $0x598] sm:$0xf]
        %v780 = vld [vmem:[%s314 + $0x59c] sm:$0xf]
        %v781 = vld [vmem:[%s314 + $0x5a0] sm:$0xf]
        %v782 = vld [vmem:[%s314 + $0x5a4] sm:$0xf]
        %v783 = vld [vmem:[%s314 + $0x5a8] sm:$0xf]
        %v784 = vld [vmem:[%s314 + $0x5ac] sm:$0xf]
        %v785 = vld [vmem:[%s314 + $0x5b0] sm:$0xf]
        %v786 = vld [vmem:[%s314 + $0x5b4] sm:$0xf]
        %v787 = vld [vmem:[%s314 + $0x5b8] sm:$0xf]
        %v788 = vld [vmem:[%s314 + $0x5bc] sm:$0xf]
        %v789 = vld [vmem:[%s314 + $0x5c0] sm:$0xf]
        %v790 = vld [vmem:[%s314 + $0x5c4] sm:$0xf]
        %v791 = vld [vmem:[%s314 + $0x5c8] sm:$0xf]
        %v792 = vld [vmem:[%s314 + $0x5cc] sm:$0xf]
        %v793 = vld [vmem:[%s314 + $0x5d0] sm:$0xf]
        %v794 = vld [vmem:[%s314 + $0x5d4] sm:$0xf]
        %v795 = vld [vmem:[%s314 + $0x5d8] sm:$0xf]
        %v796 = vld [vmem:[%s314 + $0x5dc] sm:$0xf]
        %v797 = vld [vmem:[%s314 + $0x5e0] sm:$0xf]
        %v798 = vld [vmem:[%s314 + $0x5e4] sm:$0xf]
        %v799 = vld [vmem:[%s314 + $0x5e8] sm:$0xf]
        %v800 = vld [vmem:[%s314 + $0x5ec] sm:$0xf]
        %v801 = vld [vmem:[%s314 + $0x5f0] sm:$0xf]
        %v802 = vld [vmem:[%s314 + $0x5f4] sm:$0xf]
        %v803 = vld [vmem:[%s314 + $0x5f8] sm:$0xf]
        %v804 = vld [vmem:[%s314 + $0x5fc] sm:$0xf]
        %v805 = vld [vmem:[%s314 + $0x600] sm:$0xf]
        %v806 = vld [vmem:[%s314 + $0x604] sm:$0xf]
        %v807 = vld [vmem:[%s314 + $0x608] sm:$0xf]
        %v808 = vld [vmem:[%s314 + $0x60c] sm:$0xf]
        %v809 = vld [vmem:[%s314 + $0x610] sm:$0xf]
        %v810 = vld [vmem:[%s314 + $0x614] sm:$0xf]
        %v811 = vld [vmem:[%s314 + $0x618] sm:$0xf]
        %v812 = vld [vmem:[%s314 + $0x61c] sm:$0xf]
        %v813 = vld [vmem:[%s314 + $0x620] sm:$0xf]
        %v814 = vld [vmem:[%s314 + $0x624] sm:$0xf]
        %v815 = vld [vmem:[%s314 + $0x628] sm:$0xf]
        %v816 = vld [vmem:[%s314 + $0x62c] sm:$0xf]
        %v817 = vld [vmem:[%s314 + $0x630] sm:$0xf]
        %v818 = vld [vmem:[%s314 + $0x634] sm:$0xf]
        %v819 = vld [vmem:[%s314 + $0x638] sm:$0xf]
        %v820 = vld [vmem:[%s314 + $0x63c] sm:$0xf]
        %v821 = vld [vmem:[%s314 + $0x640] sm:$0xf]
        %v822 = vld [vmem:[%s314 + $0x644] sm:$0xf]
        %v823 = vld [vmem:[%s314 + $0x648] sm:$0xf]
        %v824 = vld [vmem:[%s314 + $0x64c] sm:$0xf]
        %v825 = vld [vmem:[%s314 + $0x650] sm:$0xf]
        %v826 = vld [vmem:[%s314 + $0x654] sm:$0xf]
        %v827 = vld [vmem:[%s314 + $0x658] sm:$0xf]
        %v828 = vld [vmem:[%s314 + $0x65c] sm:$0xf]
        %v829 = vld [vmem:[%s314 + $0x660] sm:$0xf]
        %v830 = vld [vmem:[%s314 + $0x664] sm:$0xf]
        %v831 = vld [vmem:[%s314 + $0x668] sm:$0xf]
        %v832 = vld [vmem:[%s314 + $0x66c] sm:$0xf]
        %v833 = vld [vmem:[%s314 + $0x670] sm:$0xf]
        %v834 = vld [vmem:[%s314 + $0x674] sm:$0xf]
        %v835 = vld [vmem:[%s314 + $0x678] sm:$0xf]
        %v836 = vld [vmem:[%s314 + $0x67c] sm:$0xf]
        %v837 = vld [vmem:[%s314 + $0x680] sm:$0xf]
        %v838 = vld [vmem:[%s314 + $0x684] sm:$0xf]
        %v839 = vld [vmem:[%s314 + $0x688] sm:$0xf]
        %v840 = vld [vmem:[%s314 + $0x68c] sm:$0xf]
        %v841 = vld [vmem:[%s314 + $0x690] sm:$0xf]
        %v842 = vld [vmem:[%s314 + $0x694] sm:$0xf]
        %v843 = vld [vmem:[%s314 + $0x698] sm:$0xf]
        %v844 = vld [vmem:[%s314 + $0x69c] sm:$0xf]
        %v845 = vld [vmem:[%s314 + $0x6a0] sm:$0xf]
        %v846 = vld [vmem:[%s314 + $0x6a4] sm:$0xf]
        %v847 = vld [vmem:[%s314 + $0x6a8] sm:$0xf]
        %v848 = vld [vmem:[%s314 + $0x6ac] sm:$0xf]
        %v849 = vld [vmem:[%s314 + $0x6b0] sm:$0xf]
        %v850 = vld [vmem:[%s314 + $0x6b4] sm:$0xf]
        %v851 = vld [vmem:[%s314 + $0x6b8] sm:$0xf]
        %v852 = vld [vmem:[%s314 + $0x6bc] sm:$0xf]
        %v853 = vld [vmem:[%s314 + $0x6c0] sm:$0xf]
        %v854 = vld [vmem:[%s314 + $0x6c4] sm:$0xf]
        %v855 = vld [vmem:[%s314 + $0x6c8] sm:$0xf]
        %v856 = vld [vmem:[%s314 + $0x6cc] sm:$0xf]
        %v857 = vld [vmem:[%s314 + $0x6d0] sm:$0xf]
        %v858 = vld [vmem:[%s314 + $0x6d4] sm:$0xf]
        %v859 = vld [vmem:[%s314 + $0x6d8] sm:$0xf]
        %v860 = vld [vmem:[%s314 + $0x6dc] sm:$0xf]
        %v861 = vld [vmem:[%s314 + $0x6e0] sm:$0xf]
        %v862 = vld [vmem:[%s314 + $0x6e4] sm:$0xf]
        %v863 = vld [vmem:[%s314 + $0x6e8] sm:$0xf]
        %v864 = vld [vmem:[%s314 + $0x6ec] sm:$0xf]
        %v865 = vld [vmem:[%s314 + $0x6f0] sm:$0xf]
        %v866 = vld [vmem:[%s314 + $0x6f4] sm:$0xf]
        %v867 = vld [vmem:[%s314 + $0x6f8] sm:$0xf]
        %v868 = vld [vmem:[%s314 + $0x6fc] sm:$0xf]
        %v869 = vld [vmem:[%s314 + $0x700] sm:$0xf]
        %v870 = vld [vmem:[%s314 + $0x704] sm:$0xf]
        %v871 = vld [vmem:[%s314 + $0x708] sm:$0xf]
        %v872 = vld [vmem:[%s314 + $0x70c] sm:$0xf]
        %v873 = vld [vmem:[%s314 + $0x710] sm:$0xf]
        %v874 = vld [vmem:[%s314 + $0x714] sm:$0xf]
        %v875 = vld [vmem:[%s314 + $0x718] sm:$0xf]
        %v876 = vld [vmem:[%s314 + $0x71c] sm:$0xf]
        %v877 = vld [vmem:[%s314 + $0x720] sm:$0xf]
        %v878 = vld [vmem:[%s314 + $0x724] sm:$0xf]
        %v879 = vld [vmem:[%s314 + $0x728] sm:$0xf]
        %v880 = vld [vmem:[%s314 + $0x72c] sm:$0xf]
        %v881 = vld [vmem:[%s314 + $0x730] sm:$0xf]
        %v882 = vld [vmem:[%s314 + $0x734] sm:$0xf]
        %v883 = vld [vmem:[%s314 + $0x738] sm:$0xf]
        %v884 = vld [vmem:[%s314 + $0x73c] sm:$0xf]
        %v885 = vld [vmem:[%s314 + $0x740] sm:$0xf]
        %v886 = vld [vmem:[%s314 + $0x744] sm:$0xf]
        %v887 = vld [vmem:[%s314 + $0x748] sm:$0xf]
        %v888 = vld [vmem:[%s314 + $0x74c] sm:$0xf]
        %v889 = vld [vmem:[%s314 + $0x750] sm:$0xf]
        %v890 = vld [vmem:[%s314 + $0x754] sm:$0xf]
        %v891 = vld [vmem:[%s314 + $0x758] sm:$0xf]
        %v892 = vld [vmem:[%s314 + $0x75c] sm:$0xf]
        %v893 = vld [vmem:[%s314 + $0x760] sm:$0xf]
        %v894 = vld [vmem:[%s314 + $0x764] sm:$0xf]
        %v895 = vld [vmem:[%s314 + $0x768] sm:$0xf]
        %v896 = vld [vmem:[%s314 + $0x76c] sm:$0xf]
        %v897 = vld [vmem:[%s314 + $0x770] sm:$0xf]
        %v898 = vld [vmem:[%s314 + $0x774] sm:$0xf]
        %v899 = vld [vmem:[%s314 + $0x778] sm:$0xf]
        %v900 = vld [vmem:[%s314 + $0x77c] sm:$0xf]
        %v901 = vld [vmem:[%s314 + $0x780] sm:$0xf]
        %v902 = vld [vmem:[%s314 + $0x784] sm:$0xf]
        %v903 = vld [vmem:[%s314 + $0x788] sm:$0xf]
        %v904 = vld [vmem:[%s314 + $0x78c] sm:$0xf]
        %v905 = vld [vmem:[%s314 + $0x790] sm:$0xf]
        %v906 = vld [vmem:[%s314 + $0x794] sm:$0xf]
        %v907 = vld [vmem:[%s314 + $0x798] sm:$0xf]
        %v908 = vld [vmem:[%s314 + $0x79c] sm:$0xf]
        %v909 = vld [vmem:[%s314 + $0x7a0] sm:$0xf]
        %v910 = vld [vmem:[%s314 + $0x7a4] sm:$0xf]
        %v911 = vld [vmem:[%s314 + $0x7a8] sm:$0xf]
        %v912 = vld [vmem:[%s314 + $0x7ac] sm:$0xf]
        %v913 = vld [vmem:[%s314 + $0x7b0] sm:$0xf]
        %v914 = vld [vmem:[%s314 + $0x7b4] sm:$0xf]
        %v915 = vld [vmem:[%s314 + $0x7b8] sm:$0xf]
        %v916 = vld [vmem:[%s314 + $0x7bc] sm:$0xf]
        %v917 = vld [vmem:[%s314 + $0x7c0] sm:$0xf]
        %v918 = vld [vmem:[%s314 + $0x7c4] sm:$0xf]
        %v919 = vld [vmem:[%s314 + $0x7c8] sm:$0xf]
        %v920 = vld [vmem:[%s314 + $0x7cc] sm:$0xf]
        %v921 = vld [vmem:[%s314 + $0x7d0] sm:$0xf]
        %v922 = vld [vmem:[%s314 + $0x7d4] sm:$0xf]
        %v923 = vld [vmem:[%s314 + $0x7d8] sm:$0xf]
        %v924 = vld [vmem:[%s314 + $0x7dc] sm:$0xf]
        %v925 = vld [vmem:[%s314 + $0x7e0] sm:$0xf]
        %v926 = vld [vmem:[%s314 + $0x7e4] sm:$0xf]
        %v927 = vld [vmem:[%s314 + $0x7e8] sm:$0xf]
        %v928 = vld [vmem:[%s314 + $0x7ec] sm:$0xf]
        %v929 = vld [vmem:[%s314 + $0x7f0] sm:$0xf]
        %v930 = vld [vmem:[%s314 + $0x7f4] sm:$0xf]
        %v931 = vld [vmem:[%s314 + $0x7f8] sm:$0xf]
        %v932 = vld [vmem:[%s314 + $0x7fc] sm:$0xf]
        %v933 = vld [vmem:[%s314 + $0x800] sm:$0xf]
        %v934 = vld [vmem:[%s314 + $0x804] sm:$0xf]
        %v935 = vld [vmem:[%s314 + $0x808] sm:$0xf]
        %v936 = vld [vmem:[%s314 + $0x80c] sm:$0xf]
        %v937 = vld [vmem:[%s314 + $0x810] sm:$0xf]
        %v938 = vld [vmem:[%s314 + $0x814] sm:$0xf]
        %v939 = vld [vmem:[%s314 + $0x818] sm:$0xf]
        %v940 = vld [vmem:[%s314 + $0x81c] sm:$0xf]
        %v941 = vld [vmem:[%s314 + $0x820] sm:$0xf]
        %v942 = vld [vmem:[%s314 + $0x824] sm:$0xf]
        %v943 = vld [vmem:[%s314 + $0x828] sm:$0xf]
        %v944 = vld [vmem:[%s314 + $0x82c] sm:$0xf]
        %v945 = vld [vmem:[%s314 + $0x830] sm:$0xf]
        %v946 = vld [vmem:[%s314 + $0x834] sm:$0xf]
        %v947 = vld [vmem:[%s314 + $0x838] sm:$0xf]
        %v948 = vld [vmem:[%s314 + $0x83c] sm:$0xf]
        %v949 = vld [vmem:[%s314 + $0x840] sm:$0xf]
        %v950 = vld [vmem:[%s314 + $0x844] sm:$0xf]
        %v951 = vld [vmem:[%s314 + $0x848] sm:$0xf]
        %v952 = vld [vmem:[%s314 + $0x84c] sm:$0xf]
        %v953 = vld [vmem:[%s314 + $0x850] sm:$0xf]
        %v954 = vld [vmem:[%s314 + $0x854] sm:$0xf]
        %v955 = vld [vmem:[%s314 + $0x858] sm:$0xf]
        %v956 = vld [vmem:[%s314 + $0x85c] sm:$0xf]
        %v957 = vld [vmem:[%s314 + $0x860] sm:$0xf]
        %v958 = vld [vmem:[%s314 + $0x864] sm:$0xf]
        %v959 = vld [vmem:[%s314 + $0x868] sm:$0xf]
        %v960 = vld [vmem:[%s314 + $0x86c] sm:$0xf]
        %v961 = vld [vmem:[%s314 + $0x870] sm:$0xf]
        %v962 = vld [vmem:[%s314 + $0x874] sm:$0xf]
        %v963 = vld [vmem:[%s314 + $0x878] sm:$0xf]
        %v964 = vld [vmem:[%s314 + $0x87c] sm:$0xf]
        %v965 = vld [vmem:[%s314 + $0x880] sm:$0xf]
        %v966 = vld [vmem:[%s314 + $0x884] sm:$0xf]
        %v967 = vld [vmem:[%s314 + $0x888] sm:$0xf]
        %v968 = vld [vmem:[%s314 + $0x88c] sm:$0xf]
        %v969 = vld [vmem:[%s314 + $0x890] sm:$0xf]
        %v970 = vld [vmem:[%s314 + $0x894] sm:$0xf]
        %v971 = vld [vmem:[%s314 + $0x898] sm:$0xf]
        %v972 = vld [vmem:[%s314 + $0x89c] sm:$0xf]
        %v973 = vld [vmem:[%s314 + $0x8a0] sm:$0xf]
        %v974 = vld [vmem:[%s314 + $0x8a4] sm:$0xf]
        %v975 = vld [vmem:[%s314 + $0x8a8] sm:$0xf]
        %v976 = vld [vmem:[%s314 + $0x8ac] sm:$0xf]
        %v977 = vld [vmem:[%s314 + $0x8b0] sm:$0xf]
        %v978 = vld [vmem:[%s314 + $0x8b4] sm:$0xf]
        %v979 = vld [vmem:[%s314 + $0x8b8] sm:$0xf]
        %v980 = vld [vmem:[%s314 + $0x8bc] sm:$0xf]
        %v981 = vld [vmem:[%s314 + $0x8c0] sm:$0xf]
        %v982 = vld [vmem:[%s314 + $0x8c4] sm:$0xf]
        %v983 = vld [vmem:[%s314 + $0x8c8] sm:$0xf]
        %v984 = vld [vmem:[%s314 + $0x8cc] sm:$0xf]
        %v985 = vld [vmem:[%s314 + $0x8d0] sm:$0xf]
        %v986 = vld [vmem:[%s314 + $0x8d4] sm:$0xf]
        %v987 = vld [vmem:[%s314 + $0x8d8] sm:$0xf]
        %v988 = vld [vmem:[%s314 + $0x8dc] sm:$0xf]
        %v989 = vld [vmem:[%s314 + $0x8e0] sm:$0xf]
        %v990 = vld [vmem:[%s314 + $0x8e4] sm:$0xf]
        %v991 = vld [vmem:[%s314 + $0x8e8] sm:$0xf]
        %v992 = vld [vmem:[%s314 + $0x8ec] sm:$0xf]
        %v993 = vld [vmem:[%s314 + $0x8f0] sm:$0xf]
        %v994 = vld [vmem:[%s314 + $0x8f4] sm:$0xf]
        %v995 = vld [vmem:[%s314 + $0x8f8] sm:$0xf]
        %v996 = vld [vmem:[%s314 + $0x8fc] sm:$0xf]
        %v997 = vld [vmem:[%s314 + $0x900] sm:$0xf]
        %v998 = vld [vmem:[%s314 + $0x904] sm:$0xf]
        %v999 = vld [vmem:[%s314 + $0x908] sm:$0xf]
        %v1000 = vld [vmem:[%s314 + $0x90c] sm:$0xf]
        %v1001 = vld [vmem:[%s314 + $0x910] sm:$0xf]
        %v1002 = vld [vmem:[%s314 + $0x914] sm:$0xf]
        %v1003 = vld [vmem:[%s314 + $0x918] sm:$0xf]
        %v1004 = vld [vmem:[%s314 + $0x91c] sm:$0xf]
        %v1005 = vld [vmem:[%s314 + $0x920] sm:$0xf]
        %v1006 = vld [vmem:[%s314 + $0x924] sm:$0xf]
        %v1007 = vld [vmem:[%s314 + $0x928] sm:$0xf]
        %v1008 = vld [vmem:[%s314 + $0x92c] sm:$0xf]
        %v1009 = vld [vmem:[%s314 + $0x930] sm:$0xf]
        %v1010 = vld [vmem:[%s314 + $0x934] sm:$0xf]
        %v1011 = vld [vmem:[%s314 + $0x938] sm:$0xf]
        %v1012 = vld [vmem:[%s314 + $0x93c] sm:$0xf]
        %v1013 = vld [vmem:[%s314 + $0x940] sm:$0xf]
        %v1014 = vld [vmem:[%s314 + $0x944] sm:$0xf]
        %v1015 = vld [vmem:[%s314 + $0x948] sm:$0xf]
        %v1016 = vld [vmem:[%s314 + $0x94c] sm:$0xf]
        %v1017 = vld [vmem:[%s314 + $0x950] sm:$0xf]
        %v1018 = vld [vmem:[%s314 + $0x954] sm:$0xf]
        %v1019 = vld [vmem:[%s314 + $0x958] sm:$0xf]
        %v1020 = vld [vmem:[%s314 + $0x95c] sm:$0xf]
        %v1021 = vld [vmem:[%s314 + $0x960] sm:$0xf]
        %v1022 = vld [vmem:[%s314 + $0x964] sm:$0xf]
        %v1023 = vld [vmem:[%s314 + $0x968] sm:$0xf]
        %v1024 = vld [vmem:[%s314 + $0x96c] sm:$0xf]
        %v1025 = vld [vmem:[%s314 + $0x970] sm:$0xf]
        %v1026 = vld [vmem:[%s314 + $0x974] sm:$0xf]
        %v1027 = vld [vmem:[%s314 + $0x978] sm:$0xf]
        %v1028 = vld [vmem:[%s314 + $0x97c] sm:$0xf]
        %v1029 = vld [vmem:[%s314 + $0x980] sm:$0xf]
        %v1030 = vld [vmem:[%s314 + $0x984] sm:$0xf]
        %v1031 = vld [vmem:[%s314 + $0x988] sm:$0xf]
        %v1032 = vld [vmem:[%s314 + $0x98c] sm:$0xf]
        %v1033 = vld [vmem:[%s314 + $0x990] sm:$0xf]
        %v1034 = vld [vmem:[%s314 + $0x994] sm:$0xf]
        %v1035 = vld [vmem:[%s314 + $0x998] sm:$0xf]
        %v1036 = vld [vmem:[%s314 + $0x99c] sm:$0xf]
        %v1037 = vld [vmem:[%s314 + $0x9a0] sm:$0xf]
        %v1038 = vld [vmem:[%s314 + $0x9a4] sm:$0xf]
        %v1039 = vld [vmem:[%s314 + $0x9a8] sm:$0xf]
        %v1040 = vld [vmem:[%s314 + $0x9ac] sm:$0xf]
        %v1041 = vld [vmem:[%s314 + $0x9b0] sm:$0xf]
        %v1042 = vld [vmem:[%s314 + $0x9b4] sm:$0xf]
        %v1043 = vld [vmem:[%s314 + $0x9b8] sm:$0xf]
        %v1044 = vld [vmem:[%s314 + $0x9bc] sm:$0xf]
        %v1045 = vld [vmem:[%s314 + $0x9c0] sm:$0xf]
        %v1046 = vld [vmem:[%s314 + $0x9c4] sm:$0xf]
        %v1047 = vld [vmem:[%s314 + $0x9c8] sm:$0xf]
        %v1048 = vld [vmem:[%s314 + $0x9cc] sm:$0xf]
        %v1049 = vld [vmem:[%s314 + $0x9d0] sm:$0xf]
        %v1050 = vld [vmem:[%s314 + $0x9d4] sm:$0xf]
        %v1051 = vld [vmem:[%s314 + $0x9d8] sm:$0xf]
        %v1052 = vld [vmem:[%s314 + $0x9dc] sm:$0xf]
        %v1053 = vld [vmem:[%s314 + $0x9e0] sm:$0xf]
        %v1054 = vld [vmem:[%s314 + $0x9e4] sm:$0xf]
        %v1055 = vld [vmem:[%s314 + $0x9e8] sm:$0xf]
        %v1056 = vld [vmem:[%s314 + $0x9ec] sm:$0xf]
        %v1057 = vld [vmem:[%s314 + $0x9f0] sm:$0xf]
        %v1058 = vld [vmem:[%s314 + $0x9f4] sm:$0xf]
        %v1059 = vld [vmem:[%s314 + $0x9f8] sm:$0xf]
        %v1060 = vld [vmem:[%s314 + $0x9fc] sm:$0xf]
        %v1061 = vld [vmem:[%s314 + $0xa00] sm:$0xf]
        %v1062 = vld [vmem:[%s314 + $0xa04] sm:$0xf]
        %v1063 = vld [vmem:[%s314 + $0xa08] sm:$0xf]
        %v1064 = vld [vmem:[%s314 + $0xa0c] sm:$0xf]
        %v1065 = vld [vmem:[%s314 + $0xa10] sm:$0xf]
        %v1066 = vld [vmem:[%s314 + $0xa14] sm:$0xf]
        %v1067 = vld [vmem:[%s314 + $0xa18] sm:$0xf]
        %v1068 = vld [vmem:[%s314 + $0xa1c] sm:$0xf]
        %v1069 = vld [vmem:[%s314 + $0xa20] sm:$0xf]
        %v1070 = vld [vmem:[%s314 + $0xa24] sm:$0xf]
        %v1071 = vld [vmem:[%s314 + $0xa28] sm:$0xf]
        %v1072 = vld [vmem:[%s314 + $0xa2c] sm:$0xf]
        %v1073 = vld [vmem:[%s314 + $0xa30] sm:$0xf]
        %v1074 = vld [vmem:[%s314 + $0xa34] sm:$0xf]
        %v1075 = vld [vmem:[%s314 + $0xa38] sm:$0xf]
        %v1076 = vld [vmem:[%s314 + $0xa3c] sm:$0xf]
        %v1077 = vld [vmem:[%s314 + $0xa40] sm:$0xf]
        %v1078 = vld [vmem:[%s314 + $0xa44] sm:$0xf]
        %v1079 = vld [vmem:[%s314 + $0xa48] sm:$0xf]
        %v1080 = vld [vmem:[%s314 + $0xa4c] sm:$0xf]
        %v1081 = vld [vmem:[%s314 + $0xa50] sm:$0xf]
        %v1082 = vld [vmem:[%s314 + $0xa54] sm:$0xf]
        %v1083 = vld [vmem:[%s314 + $0xa58] sm:$0xf]
        %v1084 = vld [vmem:[%s314 + $0xa5c] sm:$0xf]
        %v1085 = vld [vmem:[%s314 + $0xa60] sm:$0xf]
        %v1086 = vld [vmem:[%s314 + $0xa64] sm:$0xf]
        %v1087 = vld [vmem:[%s314 + $0xa68] sm:$0xf]
        %v1088 = vld [vmem:[%s314 + $0xa6c] sm:$0xf]
        %v1089 = vld [vmem:[%s314 + $0xa70] sm:$0xf]
        %v1090 = vld [vmem:[%s314 + $0xa74] sm:$0xf]
        %v1091 = vld [vmem:[%s314 + $0xa78] sm:$0xf]
        %v1092 = vld [vmem:[%s314 + $0xa7c] sm:$0xf]
        %v1093 = vld [vmem:[%s314 + $0xa80] sm:$0xf]
        %v1094 = vld [vmem:[%s314 + $0xa84] sm:$0xf]
        %v1095 = vld [vmem:[%s314 + $0xa88] sm:$0xf]
        %v1096 = vld [vmem:[%s314 + $0xa8c] sm:$0xf]
        %v1097 = vld [vmem:[%s314 + $0xa90] sm:$0xf]
        %v1098 = vld [vmem:[%s314 + $0xa94] sm:$0xf]
        %v1099 = vld [vmem:[%s314 + $0xa98] sm:$0xf]
        %v1100 = vld [vmem:[%s314 + $0xa9c] sm:$0xf]
        %v1101 = vld [vmem:[%s314 + $0xaa0] sm:$0xf]
        %v1102 = vld [vmem:[%s314 + $0xaa4] sm:$0xf]
        %v1103 = vld [vmem:[%s314 + $0xaa8] sm:$0xf]
        %v1104 = vld [vmem:[%s314 + $0xaac] sm:$0xf]
        %v1105 = vld [vmem:[%s314 + $0xab0] sm:$0xf]
        %v1106 = vld [vmem:[%s314 + $0xab4] sm:$0xf]
        %v1107 = vld [vmem:[%s314 + $0xab8] sm:$0xf]
        %v1108 = vld [vmem:[%s314 + $0xabc] sm:$0xf]
        %v1109 = vld [vmem:[%s314 + $0xac0] sm:$0xf]
        %v1110 = vld [vmem:[%s314 + $0xac4] sm:$0xf]
        %v1111 = vld [vmem:[%s314 + $0xac8] sm:$0xf]
        %v1112 = vld [vmem:[%s314 + $0xacc] sm:$0xf]
        %v1113 = vld [vmem:[%s314 + $0xad0] sm:$0xf]
        %v1114 = vld [vmem:[%s314 + $0xad4] sm:$0xf]
        %v1115 = vld [vmem:[%s314 + $0xad8] sm:$0xf]
        %v1116 = vld [vmem:[%s314 + $0xadc] sm:$0xf]
        %v1117 = vld [vmem:[%s314 + $0xae0] sm:$0xf]
        %v1118 = vld [vmem:[%s314 + $0xae4] sm:$0xf]
        %v1119 = vld [vmem:[%s314 + $0xae8] sm:$0xf]
        %v1120 = vld [vmem:[%s314 + $0xaec] sm:$0xf]
        %v1121 = vld [vmem:[%s314 + $0xaf0] sm:$0xf]
        %v1122 = vld [vmem:[%s314 + $0xaf4] sm:$0xf]
        %v1123 = vld [vmem:[%s314 + $0xaf8] sm:$0xf]
        %v1124 = vld [vmem:[%s314 + $0xafc] sm:$0xf]
        %v1125 = vld [vmem:[%s314 + $0xb00] sm:$0xf]
        %v1126 = vld [vmem:[%s314 + $0xb04] sm:$0xf]
        %v1127 = vld [vmem:[%s314 + $0xb08] sm:$0xf]
        %v1128 = vld [vmem:[%s314 + $0xb0c] sm:$0xf]
        %v1129 = vld [vmem:[%s314 + $0xb10] sm:$0xf]
        %v1130 = vld [vmem:[%s314 + $0xb14] sm:$0xf]
        %v1131 = vld [vmem:[%s314 + $0xb18] sm:$0xf]
        %v1132 = vld [vmem:[%s314 + $0xb1c] sm:$0xf]
        %v1133 = vld [vmem:[%s314 + $0xb20] sm:$0xf]
        %v1134 = vld [vmem:[%s314 + $0xb24] sm:$0xf]
        %v1135 = vld [vmem:[%s314 + $0xb28] sm:$0xf]
        %v1136 = vld [vmem:[%s314 + $0xb2c] sm:$0xf]
        %v1137 = vld [vmem:[%s314 + $0xb30] sm:$0xf]
        %v1138 = vld [vmem:[%s314 + $0xb34] sm:$0xf]
        %v1139 = vld [vmem:[%s314 + $0xb38] sm:$0xf]
        %v1140 = vld [vmem:[%s314 + $0xb3c] sm:$0xf]
        %v1141 = vld [vmem:[%s314 + $0xb40] sm:$0xf]
        %v1142 = vld [vmem:[%s314 + $0xb44] sm:$0xf]
        %v1143 = vld [vmem:[%s314 + $0xb48] sm:$0xf]
        %v1144 = vld [vmem:[%s314 + $0xb4c] sm:$0xf]
        %v1145 = vld [vmem:[%s314 + $0xb50] sm:$0xf]
        %v1146 = vld [vmem:[%s314 + $0xb54] sm:$0xf]
        %v1147 = vld [vmem:[%s314 + $0xb58] sm:$0xf]
        %v1148 = vld [vmem:[%s314 + $0xb5c] sm:$0xf]
        %v1149 = vld [vmem:[%s314 + $0xb60] sm:$0xf]
        %v1150 = vld [vmem:[%s314 + $0xb64] sm:$0xf]
        %v1151 = vld [vmem:[%s314 + $0xb68] sm:$0xf]
        %v1152 = vld [vmem:[%s314 + $0xb6c] sm:$0xf]
        %v1153 = vld [vmem:[%s314 + $0xb70] sm:$0xf]
        %v1154 = vld [vmem:[%s314 + $0xb74] sm:$0xf]
        %v1155 = vld [vmem:[%s314 + $0xb78] sm:$0xf]
        %v1156 = vld [vmem:[%s314 + $0xb7c] sm:$0xf]
        %v1157 = vld [vmem:[%s314 + $0xb80] sm:$0xf]
        %v1158 = vld [vmem:[%s314 + $0xb84] sm:$0xf]
        %v1159 = vld [vmem:[%s314 + $0xb88] sm:$0xf]
        %v1160 = vld [vmem:[%s314 + $0xb8c] sm:$0xf]
        %v1161 = vld [vmem:[%s314 + $0xb90] sm:$0xf]
        %v1162 = vld [vmem:[%s314 + $0xb94] sm:$0xf]
        %v1163 = vld [vmem:[%s314 + $0xb98] sm:$0xf]
        %v1164 = vld [vmem:[%s314 + $0xb9c] sm:$0xf]
        %v1165 = vld [vmem:[%s314 + $0xba0] sm:$0xf]
        %v1166 = vld [vmem:[%s314 + $0xba4] sm:$0xf]
        %v1167 = vld [vmem:[%s314 + $0xba8] sm:$0xf]
        %v1168 = vld [vmem:[%s314 + $0xbac] sm:$0xf]
        %v1169 = vld [vmem:[%s314 + $0xbb0] sm:$0xf]
        %v1170 = vld [vmem:[%s314 + $0xbb4] sm:$0xf]
        %v1171 = vld [vmem:[%s314 + $0xbb8] sm:$0xf]
        %v1172 = vld [vmem:[%s314 + $0xbbc] sm:$0xf]
        %v1173 = vld [vmem:[%s314 + $0xbc0] sm:$0xf]
        %v1174 = vld [vmem:[%s314 + $0xbc4] sm:$0xf]
        %v1175 = vld [vmem:[%s314 + $0xbc8] sm:$0xf]
        %v1176 = vld [vmem:[%s314 + $0xbcc] sm:$0xf]
        %v1177 = vld [vmem:[%s314 + $0xbd0] sm:$0xf]
        %v1178 = vld [vmem:[%s314 + $0xbd4] sm:$0xf]
        %v1179 = vld [vmem:[%s314 + $0xbd8] sm:$0xf]
        %v1180 = vld [vmem:[%s314 + $0xbdc] sm:$0xf]
        %v1181 = vld [vmem:[%s314 + $0xbe0] sm:$0xf]
        %v1182 = vld [vmem:[%s314 + $0xbe4] sm:$0xf]
        %v1183 = vld [vmem:[%s314 + $0xbe8] sm:$0xf]
        %v1184 = vld [vmem:[%s314 + $0xbec] sm:$0xf]
        %v1185 = vld [vmem:[%s314 + $0xbf0] sm:$0xf]
        %v1186 = vld [vmem:[%s314 + $0xbf4] sm:$0xf]
        %v1187 = vld [vmem:[%s314 + $0xbf8] sm:$0xf]
        %v1188 = vld [vmem:[%s314 + $0xbfc] sm:$0xf]
        %v1189 = vld [vmem:[%s314 + $0xc00] sm:$0xf]
        %v1190 = vld [vmem:[%s314 + $0xc04] sm:$0xf]
        %v1191 = vld [vmem:[%s314 + $0xc08] sm:$0xf]
        %v1192 = vld [vmem:[%s314 + $0xc0c] sm:$0xf]
        %v1193 = vld [vmem:[%s314 + $0xc10] sm:$0xf]
        %v1194 = vld [vmem:[%s314 + $0xc14] sm:$0xf]
        %v1195 = vld [vmem:[%s314 + $0xc18] sm:$0xf]
        %v1196 = vld [vmem:[%s314 + $0xc1c] sm:$0xf]
        %v1197 = vld [vmem:[%s314 + $0xc20] sm:$0xf]
        %v1198 = vld [vmem:[%s314 + $0xc24] sm:$0xf]
        %v1199 = vld [vmem:[%s314 + $0xc28] sm:$0xf]
        %v1200 = vld [vmem:[%s314 + $0xc2c] sm:$0xf]
        %v1201 = vld [vmem:[%s314 + $0xc30] sm:$0xf]
        %v1202 = vld [vmem:[%s314 + $0xc34] sm:$0xf]
        %v1203 = vld [vmem:[%s314 + $0xc38] sm:$0xf]
        %v1204 = vld [vmem:[%s314 + $0xc3c] sm:$0xf]
        %v1205 = vld [vmem:[%s314 + $0xc40] sm:$0xf]
        %v1206 = vld [vmem:[%s314 + $0xc44] sm:$0xf]
        %v1207 = vld [vmem:[%s314 + $0xc48] sm:$0xf]
        %v1208 = vld [vmem:[%s314 + $0xc4c] sm:$0xf]
        %v1209 = vld [vmem:[%s314 + $0xc50] sm:$0xf]
        %v1210 = vld [vmem:[%s314 + $0xc54] sm:$0xf]
        %v1211 = vld [vmem:[%s314 + $0xc58] sm:$0xf]
        %v1212 = vld [vmem:[%s314 + $0xc5c] sm:$0xf]
        %v1213 = vld [vmem:[%s314 + $0xc60] sm:$0xf]
        %v1214 = vld [vmem:[%s314 + $0xc64] sm:$0xf]
        %v1215 = vld [vmem:[%s314 + $0xc68] sm:$0xf]
        %v1216 = vld [vmem:[%s314 + $0xc6c] sm:$0xf]
        %v1217 = vld [vmem:[%s314 + $0xc70] sm:$0xf]
        %v1218 = vld [vmem:[%s314 + $0xc74] sm:$0xf]
        %v1219 = vld [vmem:[%s314 + $0xc78] sm:$0xf]
        %v1220 = vld [vmem:[%s314 + $0xc7c] sm:$0xf]
        %v1221 = vld [vmem:[%s314 + $0xc80] sm:$0xf]
        %v1222 = vld [vmem:[%s314 + $0xc84] sm:$0xf]
        %v1223 = vld [vmem:[%s314 + $0xc88] sm:$0xf]
        %v1224 = vld [vmem:[%s314 + $0xc8c] sm:$0xf]
        %v1225 = vld [vmem:[%s314 + $0xc90] sm:$0xf]
        %v1226 = vld [vmem:[%s314 + $0xc94] sm:$0xf]
        %v1227 = vld [vmem:[%s314 + $0xc98] sm:$0xf]
        %v1228 = vld [vmem:[%s314 + $0xc9c] sm:$0xf]
        %v1229 = vld [vmem:[%s314 + $0xca0] sm:$0xf]
        %v1230 = vld [vmem:[%s314 + $0xca4] sm:$0xf]
        %v1231 = vld [vmem:[%s314 + $0xca8] sm:$0xf]
        %v1232 = vld [vmem:[%s314 + $0xcac] sm:$0xf]
        %v1233 = vld [vmem:[%s314 + $0xcb0] sm:$0xf]
        %v1234 = vld [vmem:[%s314 + $0xcb4] sm:$0xf]
        %v1235 = vld [vmem:[%s314 + $0xcb8] sm:$0xf]
        %v1236 = vld [vmem:[%s314 + $0xcbc] sm:$0xf]
        %v1237 = vld [vmem:[%s314 + $0xcc0] sm:$0xf]
        %v1238 = vld [vmem:[%s314 + $0xcc4] sm:$0xf]
        %v1239 = vld [vmem:[%s314 + $0xcc8] sm:$0xf]
        %v1240 = vld [vmem:[%s314 + $0xccc] sm:$0xf]
        %v1241 = vld [vmem:[%s314 + $0xcd0] sm:$0xf]
        %v1242 = vld [vmem:[%s314 + $0xcd4] sm:$0xf]
        %v1243 = vld [vmem:[%s314 + $0xcd8] sm:$0xf]
        %v1244 = vld [vmem:[%s314 + $0xcdc] sm:$0xf]
        %v1245 = vld [vmem:[%s314 + $0xce0] sm:$0xf]
        %v1246 = vld [vmem:[%s314 + $0xce4] sm:$0xf]
        %v1247 = vld [vmem:[%s314 + $0xce8] sm:$0xf]
        %v1248 = vld [vmem:[%s314 + $0xcec] sm:$0xf]
        %v1249 = vld [vmem:[%s314 + $0xcf0] sm:$0xf]
        %v1250 = vld [vmem:[%s314 + $0xcf4] sm:$0xf]
        %v1251 = vld [vmem:[%s314 + $0xcf8] sm:$0xf]
        %v1252 = vld [vmem:[%s314 + $0xcfc] sm:$0xf]
        %v1253 = vld [vmem:[%s314 + $0xd00] sm:$0xf]
        %v1254 = vld [vmem:[%s314 + $0xd04] sm:$0xf]
        %v1255 = vld [vmem:[%s314 + $0xd08] sm:$0xf]
        %v1256 = vld [vmem:[%s314 + $0xd0c] sm:$0xf]
        %v1257 = vld [vmem:[%s314 + $0xd10] sm:$0xf]
        %v1258 = vld [vmem:[%s314 + $0xd14] sm:$0xf]
        %v1259 = vld [vmem:[%s314 + $0xd18] sm:$0xf]
        %v1260 = vld [vmem:[%s314 + $0xd1c] sm:$0xf]
        %v1261 = vld [vmem:[%s314 + $0xd20] sm:$0xf]
        %v1262 = vld [vmem:[%s314 + $0xd24] sm:$0xf]
        %v1263 = vld [vmem:[%s314 + $0xd28] sm:$0xf]
        %v1264 = vld [vmem:[%s314 + $0xd2c] sm:$0xf]
        %v1265 = vld [vmem:[%s314 + $0xd30] sm:$0xf]
        %v1266 = vld [vmem:[%s314 + $0xd34] sm:$0xf]
        %v1267 = vld [vmem:[%s314 + $0xd38] sm:$0xf]
        %v1268 = vld [vmem:[%s314 + $0xd3c] sm:$0xf]
        %v1269 = vld [vmem:[%s314 + $0xd40] sm:$0xf]
        %v1270 = vld [vmem:[%s314 + $0xd44] sm:$0xf]
        %v1271 = vld [vmem:[%s314 + $0xd48] sm:$0xf]
        %v1272 = vld [vmem:[%s314 + $0xd4c] sm:$0xf]
        %v1273 = vld [vmem:[%s314 + $0xd50] sm:$0xf]
        %v1274 = vld [vmem:[%s314 + $0xd54] sm:$0xf]
        %v1275 = vld [vmem:[%s314 + $0xd58] sm:$0xf]
        %v1276 = vld [vmem:[%s314 + $0xd5c] sm:$0xf]
        %v1277 = vld [vmem:[%s314 + $0xd60] sm:$0xf]
        %v1278 = vld [vmem:[%s314 + $0xd64] sm:$0xf]
        %v1279 = vld [vmem:[%s314 + $0xd68] sm:$0xf]
        %v1280 = vld [vmem:[%s314 + $0xd6c] sm:$0xf]
        %v1281 = vld [vmem:[%s314 + $0xd70] sm:$0xf]
        %v1282 = vld [vmem:[%s314 + $0xd74] sm:$0xf]
        %v1283 = vld [vmem:[%s314 + $0xd78] sm:$0xf]
        %v1284 = vld [vmem:[%s314 + $0xd7c] sm:$0xf]
        %v1285 = vld [vmem:[%s314 + $0xd80] sm:$0xf]
        %v1286 = vld [vmem:[%s314 + $0xd84] sm:$0xf]
        %v1287 = vld [vmem:[%s314 + $0xd88] sm:$0xf]
        %v1288 = vld [vmem:[%s314 + $0xd8c] sm:$0xf]
        %v1289 = vld [vmem:[%s314 + $0xd90] sm:$0xf]
        %v1290 = vld [vmem:[%s314 + $0xd94] sm:$0xf]
        %v1291 = vld [vmem:[%s314 + $0xd98] sm:$0xf]
        %v1292 = vld [vmem:[%s314 + $0xd9c] sm:$0xf]
        %v1293 = vld [vmem:[%s314 + $0xda0] sm:$0xf]
        %v1294 = vld [vmem:[%s314 + $0xda4] sm:$0xf]
        %v1295 = vld [vmem:[%s314 + $0xda8] sm:$0xf]
        %v1296 = vld [vmem:[%s314 + $0xdac] sm:$0xf]
        %v1297 = vld [vmem:[%s314 + $0xdb0] sm:$0xf]
        %v1298 = vld [vmem:[%s314 + $0xdb4] sm:$0xf]
        %v1299 = vld [vmem:[%s314 + $0xdb8] sm:$0xf]
        %v1300 = vld [vmem:[%s314 + $0xdbc] sm:$0xf]
        %v1301 = vld [vmem:[%s314 + $0xdc0] sm:$0xf]
        %v1302 = vld [vmem:[%s314 + $0xdc4] sm:$0xf]
        %v1303 = vld [vmem:[%s314 + $0xdc8] sm:$0xf]
        %v1304 = vld [vmem:[%s314 + $0xdcc] sm:$0xf]
        %v1305 = vld [vmem:[%s314 + $0xdd0] sm:$0xf]
        %v1306 = vld [vmem:[%s314 + $0xdd4] sm:$0xf]
        %v1307 = vld [vmem:[%s314 + $0xdd8] sm:$0xf]
        %v1308 = vld [vmem:[%s314 + $0xddc] sm:$0xf]
        %v1309 = vld [vmem:[%s314 + $0xde0] sm:$0xf]
        %v1310 = vld [vmem:[%s314 + $0xde4] sm:$0xf]
        %v1311 = vld [vmem:[%s314 + $0xde8] sm:$0xf]
        %v1312 = vld [vmem:[%s314 + $0xdec] sm:$0xf]
        %v1313 = vld [vmem:[%s314 + $0xdf0] sm:$0xf]
        %v1314 = vld [vmem:[%s314 + $0xdf4] sm:$0xf]
        %v1315 = vld [vmem:[%s314 + $0xdf8] sm:$0xf]
        %v1316 = vld [vmem:[%s314 + $0xdfc] sm:$0xf]
        %v1317 = vld [vmem:[%s314 + $0xe00] sm:$0xf]
        %v1318 = vld [vmem:[%s314 + $0xe04] sm:$0xf]
        %v1319 = vld [vmem:[%s314 + $0xe08] sm:$0xf]
        %v1320 = vld [vmem:[%s314 + $0xe0c] sm:$0xf]
        %v1321 = vld [vmem:[%s314 + $0xe10] sm:$0xf]
        %v1322 = vld [vmem:[%s314 + $0xe14] sm:$0xf]
        %v1323 = vld [vmem:[%s314 + $0xe18] sm:$0xf]
        %v1324 = vld [vmem:[%s314 + $0xe1c] sm:$0xf]
        %v1325 = vld [vmem:[%s314 + $0xe20] sm:$0xf]
        %v1326 = vld [vmem:[%s314 + $0xe24] sm:$0xf]
        %v1327 = vld [vmem:[%s314 + $0xe28] sm:$0xf]
        %v1328 = vld [vmem:[%s314 + $0xe2c] sm:$0xf]
        %v1329 = vld [vmem:[%s314 + $0xe30] sm:$0xf]
        %v1330 = vld [vmem:[%s314 + $0xe34] sm:$0xf]
        %v1331 = vld [vmem:[%s314 + $0xe38] sm:$0xf]
        %v1332 = vld [vmem:[%s314 + $0xe3c] sm:$0xf]
        %v1333 = vld [vmem:[%s314 + $0xe40] sm:$0xf]
        %v1334 = vld [vmem:[%s314 + $0xe44] sm:$0xf]
        %v1335 = vld [vmem:[%s314 + $0xe48] sm:$0xf]
        %v1336 = vld [vmem:[%s314 + $0xe4c] sm:$0xf]
        %v1337 = vld [vmem:[%s314 + $0xe50] sm:$0xf]
        %v1338 = vld [vmem:[%s314 + $0xe54] sm:$0xf]
        %v1339 = vld [vmem:[%s314 + $0xe58] sm:$0xf]
        %v1340 = vld [vmem:[%s314 + $0xe5c] sm:$0xf]
        %v1341 = vld [vmem:[%s314 + $0xe60] sm:$0xf]
        %v1342 = vld [vmem:[%s314 + $0xe64] sm:$0xf]
        %v1343 = vld [vmem:[%s314 + $0xe68] sm:$0xf]
        %v1344 = vld [vmem:[%s314 + $0xe6c] sm:$0xf]
        %v1345 = vld [vmem:[%s314 + $0xe70] sm:$0xf]
        %v1346 = vld [vmem:[%s314 + $0xe74] sm:$0xf]
        %v1347 = vld [vmem:[%s314 + $0xe78] sm:$0xf]
        %v1348 = vld [vmem:[%s314 + $0xe7c] sm:$0xf]
        %v1349 = vld [vmem:[%s314 + $0xe80] sm:$0xf]
        %v1350 = vld [vmem:[%s314 + $0xe84] sm:$0xf]
        %v1351 = vld [vmem:[%s314 + $0xe88] sm:$0xf]
        %v1352 = vld [vmem:[%s314 + $0xe8c] sm:$0xf]
        %v1353 = vld [vmem:[%s314 + $0xe90] sm:$0xf]
        %v1354 = vld [vmem:[%s314 + $0xe94] sm:$0xf]
        %v1355 = vld [vmem:[%s314 + $0xe98] sm:$0xf]
        %v1356 = vld [vmem:[%s314 + $0xe9c] sm:$0xf]
        %v1357 = vld [vmem:[%s314 + $0xea0] sm:$0xf]
        %v1358 = vld [vmem:[%s314 + $0xea4] sm:$0xf]
        %v1359 = vld [vmem:[%s314 + $0xea8] sm:$0xf]
        %v1360 = vld [vmem:[%s314 + $0xeac] sm:$0xf]
        %v1361 = vld [vmem:[%s314 + $0xeb0] sm:$0xf]
        %v1362 = vld [vmem:[%s314 + $0xeb4] sm:$0xf]
        %v1363 = vld [vmem:[%s314 + $0xeb8] sm:$0xf]
        %v1364 = vld [vmem:[%s314 + $0xebc] sm:$0xf]
        %v1365 = vld [vmem:[%s314 + $0xec0] sm:$0xf]
        %v1366 = vld [vmem:[%s314 + $0xec4] sm:$0xf]
        %v1367 = vld [vmem:[%s314 + $0xec8] sm:$0xf]
        %v1368 = vld [vmem:[%s314 + $0xecc] sm:$0xf]
        %v1369 = vld [vmem:[%s314 + $0xed0] sm:$0xf]
        %v1370 = vld [vmem:[%s314 + $0xed4] sm:$0xf]
        %v1371 = vld [vmem:[%s314 + $0xed8] sm:$0xf]
        %v1372 = vld [vmem:[%s314 + $0xedc] sm:$0xf]
        %v1373 = vld [vmem:[%s314 + $0xee0] sm:$0xf]
        %v1374 = vld [vmem:[%s314 + $0xee4] sm:$0xf]
        %v1375 = vld [vmem:[%s314 + $0xee8] sm:$0xf]
        %v1376 = vld [vmem:[%s314 + $0xeec] sm:$0xf]
        %v1377 = vld [vmem:[%s314 + $0xef0] sm:$0xf]
        %v1378 = vld [vmem:[%s314 + $0xef4] sm:$0xf]
        %v1379 = vld [vmem:[%s314 + $0xef8] sm:$0xf]
        %v1380 = vld [vmem:[%s314 + $0xefc] sm:$0xf]
        %v1381 = vld [vmem:[%s314 + $0xf00] sm:$0xf]
        %v1382 = vld [vmem:[%s314 + $0xf04] sm:$0xf]
        %v1383 = vld [vmem:[%s314 + $0xf08] sm:$0xf]
        %v1384 = vld [vmem:[%s314 + $0xf0c] sm:$0xf]
        %v1385 = vld [vmem:[%s314 + $0xf10] sm:$0xf]
        %v1386 = vld [vmem:[%s314 + $0xf14] sm:$0xf]
        %v1387 = vld [vmem:[%s314 + $0xf18] sm:$0xf]
        %v1388 = vld [vmem:[%s314 + $0xf1c] sm:$0xf]
        %v1389 = vld [vmem:[%s314 + $0xf20] sm:$0xf]
        %v1390 = vld [vmem:[%s314 + $0xf24] sm:$0xf]
        %v1391 = vld [vmem:[%s314 + $0xf28] sm:$0xf]
        %v1392 = vld [vmem:[%s314 + $0xf2c] sm:$0xf]
        %v1393 = vld [vmem:[%s314 + $0xf30] sm:$0xf]
        %v1394 = vld [vmem:[%s314 + $0xf34] sm:$0xf]
        %v1395 = vld [vmem:[%s314 + $0xf38] sm:$0xf]
        %v1396 = vld [vmem:[%s314 + $0xf3c] sm:$0xf]
        %v1397 = vld [vmem:[%s314 + $0xf40] sm:$0xf]
        %v1398 = vld [vmem:[%s314 + $0xf44] sm:$0xf]
        %v1399 = vld [vmem:[%s314 + $0xf48] sm:$0xf]
        %v1400 = vld [vmem:[%s314 + $0xf4c] sm:$0xf]
        %v1401 = vld [vmem:[%s314 + $0xf50] sm:$0xf]
        %v1402 = vld [vmem:[%s314 + $0xf54] sm:$0xf]
        %v1403 = vld [vmem:[%s314 + $0xf58] sm:$0xf]
        %v1404 = vld [vmem:[%s314 + $0xf5c] sm:$0xf]
        %v1405 = vld [vmem:[%s314 + $0xf60] sm:$0xf]
        %v1406 = vld [vmem:[%s314 + $0xf64] sm:$0xf]
        %v1407 = vld [vmem:[%s314 + $0xf68] sm:$0xf]
        %v1408 = vld [vmem:[%s314 + $0xf6c] sm:$0xf]
        %v1409 = vld [vmem:[%s314 + $0xf70] sm:$0xf]
        %v1410 = vld [vmem:[%s314 + $0xf74] sm:$0xf]
        %v1411 = vld [vmem:[%s314 + $0xf78] sm:$0xf]
        %v1412 = vld [vmem:[%s314 + $0xf7c] sm:$0xf]
        %v1413 = vld [vmem:[%s314 + $0xf80] sm:$0xf]
        %v1414 = vld [vmem:[%s314 + $0xf84] sm:$0xf]
        %v1415 = vld [vmem:[%s314 + $0xf88] sm:$0xf]
        %v1416 = vld [vmem:[%s314 + $0xf8c] sm:$0xf]
        %v1417 = vld [vmem:[%s314 + $0xf90] sm:$0xf]
        %v1418 = vld [vmem:[%s314 + $0xf94] sm:$0xf]
        %v1419 = vld [vmem:[%s314 + $0xf98] sm:$0xf]
        %v1420 = vld [vmem:[%s314 + $0xf9c] sm:$0xf]
        %v1421 = vld [vmem:[%s314 + $0xfa0] sm:$0xf]
        %v1422 = vld [vmem:[%s314 + $0xfa4] sm:$0xf]
        %v1423 = vld [vmem:[%s314 + $0xfa8] sm:$0xf]
        %v1424 = vld [vmem:[%s314 + $0xfac] sm:$0xf]
        %v1425 = vld [vmem:[%s314 + $0xfb0] sm:$0xf]
        %v1426 = vld [vmem:[%s314 + $0xfb4] sm:$0xf]
        %v1427 = vld [vmem:[%s314 + $0xfb8] sm:$0xf]
        %v1428 = vld [vmem:[%s314 + $0xfbc] sm:$0xf]
        %v1429 = vld [vmem:[%s314 + $0xfc0] sm:$0xf]
        %v1430 = vld [vmem:[%s314 + $0xfc4] sm:$0xf]
        %v1431 = vld [vmem:[%s314 + $0xfc8] sm:$0xf]
        %v1432 = vld [vmem:[%s314 + $0xfcc] sm:$0xf]
        %v1433 = vld [vmem:[%s314 + $0xfd0] sm:$0xf]
        %v1434 = vld [vmem:[%s314 + $0xfd4] sm:$0xf]
        %v1435 = vld [vmem:[%s314 + $0xfd8] sm:$0xf]
        %v1436 = vld [vmem:[%s314 + $0xfdc] sm:$0xf]
        %v1437 = vld [vmem:[%s314 + $0xfe0] sm:$0xf]
        %v1438 = vld [vmem:[%s314 + $0xfe4] sm:$0xf]
        %v1439 = vld [vmem:[%s314 + $0xfe8] sm:$0xf]
        %v1440 = vld [vmem:[%s314 + $0xfec] sm:$0xf]
        %v1441 = vld [vmem:[%s314 + $0xff0] sm:$0xf]
        %v1442 = vld [vmem:[%s314 + $0xff4] sm:$0xf]
        %v1443 = vld [vmem:[%s314 + $0xff8] sm:$0xf]
        %v1444 = vld [vmem:[%s314 + $0xffc] sm:$0xf]
        %v1445 = vld [vmem:[%s314 + $0x1000] sm:$0xf]
        %v1446 = vld [vmem:[%s314 + $0x1004] sm:$0xf]
        %v1447 = vld [vmem:[%s314 + $0x1008] sm:$0xf]
        %v1448 = vld [vmem:[%s314 + $0x100c] sm:$0xf]
        %v1449 = vld [vmem:[%s314 + $0x1010] sm:$0xf]
        %v1450 = vld [vmem:[%s314 + $0x1014] sm:$0xf]
        %v1451 = vld [vmem:[%s314 + $0x1018] sm:$0xf]
        %v1452 = vld [vmem:[%s314 + $0x101c] sm:$0xf]
        %v1453 = vld [vmem:[%s314 + $0x1020] sm:$0xf]
        %v1454 = vld [vmem:[%s314 + $0x1024] sm:$0xf]
        %v1455 = vld [vmem:[%s314 + $0x1028] sm:$0xf]
        %v1456 = vld [vmem:[%s314 + $0x102c] sm:$0xf]
        %v1457 = vld [vmem:[%s314 + $0x1030] sm:$0xf]
        %v1458 = vld [vmem:[%s314 + $0x1034] sm:$0xf]
        %v1459 = vld [vmem:[%s314 + $0x1038] sm:$0xf]
        %v1460 = vld [vmem:[%s314 + $0x103c] sm:$0xf]
        %v1461 = vld [vmem:[%s314 + $0x1040] sm:$0xf]
        %v1462 = vld [vmem:[%s314 + $0x1044] sm:$0xf]
        %v1463 = vld [vmem:[%s314 + $0x1048] sm:$0xf]
        %v1464 = vld [vmem:[%s314 + $0x104c] sm:$0xf]
        %v1465 = vld [vmem:[%s314 + $0x1050] sm:$0xf]
        %v1466 = vld [vmem:[%s314 + $0x1054] sm:$0xf]
        %v1467 = vld [vmem:[%s314 + $0x1058] sm:$0xf]
        %v1468 = vld [vmem:[%s314 + $0x105c] sm:$0xf]
        %v1469 = vld [vmem:[%s314 + $0x1060] sm:$0xf]
        %v1470 = vld [vmem:[%s314 + $0x1064] sm:$0xf]
        %v1471 = vld [vmem:[%s314 + $0x1068] sm:$0xf]
        %v1472 = vld [vmem:[%s314 + $0x106c] sm:$0xf]
        %v1473 = vld [vmem:[%s314 + $0x1070] sm:$0xf]
        %v1474 = vld [vmem:[%s314 + $0x1074] sm:$0xf]
        %v1475 = vld [vmem:[%s314 + $0x1078] sm:$0xf]
        %v1476 = vld [vmem:[%s314 + $0x107c] sm:$0xf]
        %v1477 = vld [vmem:[%s314 + $0x1080] sm:$0xf]
        %v1478 = vld [vmem:[%s314 + $0x1084] sm:$0xf]
        %v1479 = vld [vmem:[%s314 + $0x1088] sm:$0xf]
        %v1480 = vld [vmem:[%s314 + $0x108c] sm:$0xf]
        %v1481 = vld [vmem:[%s314 + $0x1090] sm:$0xf]
        %v1482 = vld [vmem:[%s314 + $0x1094] sm:$0xf]
        %v1483 = vld [vmem:[%s314 + $0x1098] sm:$0xf]
        %v1484 = vld [vmem:[%s314 + $0x109c] sm:$0xf]
        %v1485 = vld [vmem:[%s314 + $0x10a0] sm:$0xf]
        %v1486 = vld [vmem:[%s314 + $0x10a4] sm:$0xf]
        %v1487 = vld [vmem:[%s314 + $0x10a8] sm:$0xf]
        %v1488 = vld [vmem:[%s314 + $0x10ac] sm:$0xf]
        %v1489 = vld [vmem:[%s314 + $0x10b0] sm:$0xf]
        %v1490 = vld [vmem:[%s314 + $0x10b4] sm:$0xf]
        %v1491 = vld [vmem:[%s314 + $0x10b8] sm:$0xf]
        %v1492 = vld [vmem:[%s314 + $0x10bc] sm:$0xf]
        %v1493 = vld [vmem:[%s314 + $0x10c0] sm:$0xf]
        %v1494 = vld [vmem:[%s314 + $0x10c4] sm:$0xf]
        %v1495 = vld [vmem:[%s314 + $0x10c8] sm:$0xf]
        %v1496 = vld [vmem:[%s314 + $0x10cc] sm:$0xf]
        %v1497 = vld [vmem:[%s314 + $0x10d0] sm:$0xf]
        %v1498 = vld [vmem:[%s314 + $0x10d4] sm:$0xf]
        %v1499 = vld [vmem:[%s314 + $0x10d8] sm:$0xf]
        %v1500 = vld [vmem:[%s314 + $0x10dc] sm:$0xf]
        %v1501 = vld [vmem:[%s314 + $0x10e0] sm:$0xf]
        %v1502 = vld [vmem:[%s314 + $0x10e4] sm:$0xf]
        %v1503 = vld [vmem:[%s314 + $0x10e8] sm:$0xf]
        %v1504 = vld [vmem:[%s314 + $0x10ec] sm:$0xf]
        %v1505 = vld [vmem:[%s314 + $0x10f0] sm:$0xf]
        %v1506 = vld [vmem:[%s314 + $0x10f4] sm:$0xf]
        %v1507 = vld [vmem:[%s314 + $0x10f8] sm:$0xf]
        %v1508 = vld [vmem:[%s314 + $0x10fc] sm:$0xf]
        %v1509 = vld [vmem:[%s314 + $0x1100] sm:$0xf]
        %v1510 = vld [vmem:[%s314 + $0x1104] sm:$0xf]
        %v1511 = vld [vmem:[%s314 + $0x1108] sm:$0xf]
        %v1512 = vld [vmem:[%s314 + $0x110c] sm:$0xf]
        %v1513 = vld [vmem:[%s314 + $0x1110] sm:$0xf]
        %v1514 = vld [vmem:[%s314 + $0x1114] sm:$0xf]
        %v1515 = vld [vmem:[%s314 + $0x1118] sm:$0xf]
        %v1516 = vld [vmem:[%s314 + $0x111c] sm:$0xf]
        %v1517 = vld [vmem:[%s314 + $0x1120] sm:$0xf]
        %v1518 = vld [vmem:[%s314 + $0x1124] sm:$0xf]
        %v1519 = vld [vmem:[%s314 + $0x1128] sm:$0xf]
        %v1520 = vld [vmem:[%s314 + $0x112c] sm:$0xf]
        %v1521 = vld [vmem:[%s314 + $0x1130] sm:$0xf]
        %v1522 = vld [vmem:[%s314 + $0x1134] sm:$0xf]
        %v1523 = vld [vmem:[%s314 + $0x1138] sm:$0xf]
        %v1524 = vld [vmem:[%s314 + $0x113c] sm:$0xf]
        %v1525 = vld [vmem:[%s314 + $0x1140] sm:$0xf]
        %v1526 = vld [vmem:[%s314 + $0x1144] sm:$0xf]
        %v1527 = vld [vmem:[%s314 + $0x1148] sm:$0xf]
        %v1528 = vld [vmem:[%s314 + $0x114c] sm:$0xf]
        %v1529 = vld [vmem:[%s314 + $0x1150] sm:$0xf]
        %v1530 = vld [vmem:[%s314 + $0x1154] sm:$0xf]
        %v1531 = vld [vmem:[%s314 + $0x1158] sm:$0xf]
        %v1532 = vld [vmem:[%s314 + $0x115c] sm:$0xf]
        %v1533 = vld [vmem:[%s314 + $0x1160] sm:$0xf]
        %v1534 = vld [vmem:[%s314 + $0x1164] sm:$0xf]
        %v1535 = vld [vmem:[%s314 + $0x1168] sm:$0xf]
        %v1536 = vld [vmem:[%s314 + $0x116c] sm:$0xf]
        %v1537 = vld [vmem:[%s314 + $0x1170] sm:$0xf]
        %v1538 = vld [vmem:[%s314 + $0x1174] sm:$0xf]
        %v1539 = vld [vmem:[%s314 + $0x1178] sm:$0xf]
        %v1540 = vld [vmem:[%s314 + $0x117c] sm:$0xf]
        %v1541 = vld [vmem:[%s314 + $0x1180] sm:$0xf]
        %v1542 = vld [vmem:[%s314 + $0x1184] sm:$0xf]
        %v1543 = vld [vmem:[%s314 + $0x1188] sm:$0xf]
        %v1544 = vld [vmem:[%s314 + $0x118c] sm:$0xf]
        %v1545 = vld [vmem:[%s314 + $0x1190] sm:$0xf]
        %v1546 = vld [vmem:[%s314 + $0x1194] sm:$0xf]
        %v1547 = vld [vmem:[%s314 + $0x1198] sm:$0xf]
        %v1548 = vld [vmem:[%s314 + $0x119c] sm:$0xf]
        %v1549 = vld [vmem:[%s314 + $0x11a0] sm:$0xf]
        %v1550 = vld [vmem:[%s314 + $0x11a4] sm:$0xf]
        %v1551 = vld [vmem:[%s314 + $0x11a8] sm:$0xf]
        %v1552 = vld [vmem:[%s314 + $0x11ac] sm:$0xf]
        %v1553 = vld [vmem:[%s314 + $0x11b0] sm:$0xf]
        %v1554 = vld [vmem:[%s314 + $0x11b4] sm:$0xf]
        %v1555 = vld [vmem:[%s314 + $0x11b8] sm:$0xf]
        %v1556 = vld [vmem:[%s314 + $0x11bc] sm:$0xf]
        %v1557 = vld [vmem:[%s314 + $0x11c0] sm:$0xf]
        %v1558 = vld [vmem:[%s314 + $0x11c4] sm:$0xf]
        %v1559 = vld [vmem:[%s314 + $0x11c8] sm:$0xf]
        %v1560 = vld [vmem:[%s314 + $0x11cc] sm:$0xf]
        %v1561 = vld [vmem:[%s314 + $0x11d0] sm:$0xf]
        %v1562 = vld [vmem:[%s314 + $0x11d4] sm:$0xf]
        %v1563 = vld [vmem:[%s314 + $0x11d8] sm:$0xf]
        %v1564 = vld [vmem:[%s314 + $0x11dc] sm:$0xf]
        %v1565 = vld [vmem:[%s314 + $0x11e0] sm:$0xf]
        %v1566 = vld [vmem:[%s314 + $0x11e4] sm:$0xf]
        %v1567 = vld [vmem:[%s314 + $0x11e8] sm:$0xf]
        %v1568 = vld [vmem:[%s314 + $0x11ec] sm:$0xf]
        %v1569 = vld [vmem:[%s314 + $0x11f0] sm:$0xf]
        %v1570 = vld [vmem:[%s314 + $0x11f4] sm:$0xf]
        %v1571 = vld [vmem:[%s314 + $0x11f8] sm:$0xf]
        %v1572 = vld [vmem:[%s314 + $0x11fc] sm:$0xf]
        %v1609 = vunpack.c.l.b16 %v385
        %v1610 = vunpack.c.h.b16 %v385
        %v1611 = vunpack.c.l.b16 %v386
        %v1612 = vunpack.c.h.b16 %v386
        %v1613 = vunpack.c.l.b16 %v387
        %v1614 = vunpack.c.h.b16 %v387
        %v1615 = vunpack.c.l.b16 %v388
        %v1616 = vunpack.c.h.b16 %v388
        %v1617 = vunpack.c.l.b16 %v389
        %v1618 = vunpack.c.h.b16 %v389
        %v1619 = vunpack.c.l.b16 %v390
        %v1620 = vunpack.c.h.b16 %v390
        %v1621 = vunpack.c.l.b16 %v391
        %v1622 = vunpack.c.h.b16 %v391
        %v1623 = vunpack.c.l.b16 %v392
        %v1624 = vunpack.c.h.b16 %v392
        %v1625 = vunpack.c.l.b16 %v393
        %v1626 = vunpack.c.h.b16 %v393
        %v1627 = vunpack.c.l.b16 %v394
        %v1628 = vunpack.c.h.b16 %v394
        %v1629 = vunpack.c.l.b16 %v395
        %v1630 = vunpack.c.h.b16 %v395
        %v1631 = vunpack.c.l.b16 %v396
        %v1632 = vunpack.c.h.b16 %v396
        %v1633 = vunpack.c.l.b16 %v397
        %v1634 = vunpack.c.h.b16 %v397
        %v1635 = vunpack.c.l.b16 %v398
        %v1636 = vunpack.c.h.b16 %v398
        %v1637 = vunpack.c.l.b16 %v399
        %v1638 = vunpack.c.h.b16 %v399
        %v1639 = vunpack.c.l.b16 %v400
        %v1640 = vunpack.c.h.b16 %v400
        %v1641 = vunpack.c.l.b16 %v401
        %v1642 = vunpack.c.h.b16 %v401
        %v1643 = vunpack.c.l.b16 %v402
        %v1644 = vunpack.c.h.b16 %v402
        %v1645 = vunpack.c.l.b16 %v403
        %v1646 = vunpack.c.h.b16 %v403
        %v1647 = vunpack.c.l.b16 %v404
        %v1648 = vunpack.c.h.b16 %v404
        %v1649 = vunpack.c.l.b16 %v405
        %v1650 = vunpack.c.h.b16 %v405
        %v1651 = vunpack.c.l.b16 %v406
        %v1652 = vunpack.c.h.b16 %v406
        %v1653 = vunpack.c.l.b16 %v407
        %v1654 = vunpack.c.h.b16 %v407
        %v1655 = vunpack.c.l.b16 %v408
        %v1656 = vunpack.c.h.b16 %v408
        %v1657 = vunpack.c.l.b16 %v409
        %v1658 = vunpack.c.h.b16 %v409
        %v1659 = vunpack.c.l.b16 %v410
        %v1660 = vunpack.c.h.b16 %v410
        %v1661 = vunpack.c.l.b16 %v411
        %v1662 = vunpack.c.h.b16 %v411
        %v1663 = vunpack.c.l.b16 %v412
        %v1664 = vunpack.c.h.b16 %v412
        %v1665 = vunpack.c.l.b16 %v413
        %v1666 = vunpack.c.h.b16 %v413
        %v1667 = vunpack.c.l.b16 %v414
        %v1668 = vunpack.c.h.b16 %v414
        %v1669 = vunpack.c.l.b16 %v415
        %v1670 = vunpack.c.h.b16 %v415
        %v1671 = vunpack.c.l.b16 %v416
        %v1672 = vunpack.c.h.b16 %v416
        %v1673 = vunpack.c.l.b16 %v417
        %v1674 = vunpack.c.h.b16 %v417
        %v1675 = vunpack.c.l.b16 %v418
        %v1676 = vunpack.c.h.b16 %v418
        %v1677 = vunpack.c.l.b16 %v419
        %v1678 = vunpack.c.h.b16 %v419
        %v1679 = vunpack.c.l.b16 %v420
        %v1680 = vunpack.c.h.b16 %v420
        %v1681 = vpack.c.b16 %v1609, %v1609
        %v1682 = vpack.c.b16 %v1610, %v1610
        %v1683 = vpack.c.b16 %v1611, %v1611
        %v1684 = vpack.c.b16 %v1612, %v1612
        %v1685 = vpack.c.b16 %v1613, %v1613
        %v1686 = vpack.c.b16 %v1614, %v1614
        %v1687 = vpack.c.b16 %v1615, %v1615
        %v1688 = vpack.c.b16 %v1616, %v1616
        %v1689 = vpack.c.b16 %v1617, %v1617
        %v1690 = vpack.c.b16 %v1618, %v1618
        %v1691 = vpack.c.b16 %v1619, %v1619
        %v1692 = vpack.c.b16 %v1620, %v1620
        %v1693 = vpack.c.b16 %v1621, %v1621
        %v1694 = vpack.c.b16 %v1622, %v1622
        %v1695 = vpack.c.b16 %v1623, %v1623
        %v1696 = vpack.c.b16 %v1624, %v1624
        %v1697 = vpack.c.b16 %v1625, %v1625
        %v1698 = vpack.c.b16 %v1626, %v1626
        %v1699 = vpack.c.b16 %v1627, %v1627
        %v1700 = vpack.c.b16 %v1628, %v1628
        %v1701 = vpack.c.b16 %v1629, %v1629
        %v1702 = vpack.c.b16 %v1630, %v1630
        %v1703 = vpack.c.b16 %v1631, %v1631
        %v1704 = vpack.c.b16 %v1632, %v1632
        %v1705 = vpack.c.b16 %v1633, %v1633
        %v1706 = vpack.c.b16 %v1634, %v1634
        %v1707 = vpack.c.b16 %v1635, %v1635
        %v1708 = vpack.c.b16 %v1636, %v1636
        %v1709 = vpack.c.b16 %v1637, %v1637
        %v1710 = vpack.c.b16 %v1638, %v1638
        %v1711 = vpack.c.b16 %v1639, %v1639
        %v1712 = vpack.c.b16 %v1640, %v1640
        %v1713 = vpack.c.b16 %v1641, %v1641
        %v1714 = vpack.c.b16 %v1642, %v1642
        %v1715 = vpack.c.b16 %v1643, %v1643
        %v1716 = vpack.c.b16 %v1644, %v1644
        %v1717 = vpack.c.b16 %v1645, %v1645
        %v1718 = vpack.c.b16 %v1646, %v1646
        %v1719 = vpack.c.b16 %v1647, %v1647
        %v1720 = vpack.c.b16 %v1648, %v1648
        %v1721 = vpack.c.b16 %v1649, %v1649
        %v1722 = vpack.c.b16 %v1650, %v1650
        %v1723 = vpack.c.b16 %v1651, %v1651
        %v1724 = vpack.c.b16 %v1652, %v1652
        %v1725 = vpack.c.b16 %v1653, %v1653
        %v1726 = vpack.c.b16 %v1654, %v1654
        %v1727 = vpack.c.b16 %v1655, %v1655
        %v1728 = vpack.c.b16 %v1656, %v1656
        %v1729 = vpack.c.b16 %v1657, %v1657
        %v1730 = vpack.c.b16 %v1658, %v1658
        %v1731 = vpack.c.b16 %v1659, %v1659
        %v1732 = vpack.c.b16 %v1660, %v1660
        %v1733 = vpack.c.b16 %v1661, %v1661
        %v1734 = vpack.c.b16 %v1662, %v1662
        %v1735 = vpack.c.b16 %v1663, %v1663
        %v1736 = vpack.c.b16 %v1664, %v1664
        %v1737 = vpack.c.b16 %v1665, %v1665
        %v1738 = vpack.c.b16 %v1666, %v1666
        %v1739 = vpack.c.b16 %v1667, %v1667
        %v1740 = vpack.c.b16 %v1668, %v1668
        %v1741 = vpack.c.b16 %v1669, %v1669
        %v1742 = vpack.c.b16 %v1670, %v1670
        %v1743 = vpack.c.b16 %v1671, %v1671
        %v1744 = vpack.c.b16 %v1672, %v1672
        %v1745 = vpack.c.b16 %v1673, %v1673
        %v1746 = vpack.c.b16 %v1674, %v1674
        %v1747 = vpack.c.b16 %v1675, %v1675
        %v1748 = vpack.c.b16 %v1676, %v1676
        %v1749 = vpack.c.b16 %v1677, %v1677
        %v1750 = vpack.c.b16 %v1678, %v1678
        %v1751 = vpack.c.b16 %v1679, %v1679
        %v1752 = vpack.c.b16 %v1680, %v1680
        %v2977 = vunpack.c.l.b16 %v421
        %v2978 = vunpack.c.l.b16 %v422
        %v2979 = vunpack.c.l.b16 %v423
        %v2980 = vunpack.c.l.b16 %v424
        %v2981 = vunpack.c.l.b16 %v425
        %v2982 = vunpack.c.l.b16 %v426
        %v2983 = vunpack.c.l.b16 %v427
        %v2984 = vunpack.c.l.b16 %v428
        %v2985 = vunpack.c.l.b16 %v429
        %v2986 = vunpack.c.l.b16 %v430
        %v2987 = vunpack.c.l.b16 %v431
        %v2988 = vunpack.c.l.b16 %v432
        %v2989 = vunpack.c.l.b16 %v433
        %v2990 = vunpack.c.l.b16 %v434
        %v2991 = vunpack.c.l.b16 %v435
        %v2992 = vunpack.c.l.b16 %v436
        %v2993 = vunpack.c.l.b16 %v437
        %v2994 = vunpack.c.l.b16 %v438
        %v2995 = vunpack.c.l.b16 %v439
        %v2996 = vunpack.c.l.b16 %v440
        %v2997 = vunpack.c.l.b16 %v441
        %v2998 = vunpack.c.l.b16 %v442
        %v2999 = vunpack.c.l.b16 %v443
        %v3000 = vunpack.c.l.b16 %v444
        %v3001 = vunpack.c.l.b16 %v445
        %v3002 = vunpack.c.l.b16 %v446
        %v3003 = vunpack.c.l.b16 %v447
        %v3004 = vunpack.c.l.b16 %v448
        %v3005 = vunpack.c.l.b16 %v449
        %v3006 = vunpack.c.l.b16 %v450
        %v3007 = vunpack.c.l.b16 %v451
        %v3008 = vunpack.c.l.b16 %v452
        %v3009 = vunpack.c.l.b16 %v453
        %v3010 = vunpack.c.l.b16 %v454
        %v3011 = vunpack.c.l.b16 %v455
        %v3012 = vunpack.c.l.b16 %v456
        %v3013 = vunpack.c.l.b16 %v457
        %v3014 = vunpack.c.l.b16 %v458
        %v3015 = vunpack.c.l.b16 %v459
        %v3016 = vunpack.c.l.b16 %v460
        %v3017 = vunpack.c.l.b16 %v461
        %v3018 = vunpack.c.l.b16 %v462
        %v3019 = vunpack.c.l.b16 %v463
        %v3020 = vunpack.c.l.b16 %v464
        %v3021 = vunpack.c.l.b16 %v465
        %v3022 = vunpack.c.l.b16 %v466
        %v3023 = vunpack.c.l.b16 %v467
        %v3024 = vunpack.c.l.b16 %v468
        %v3025 = vunpack.c.l.b16 %v469
        %v3026 = vunpack.c.l.b16 %v470
        %v3027 = vunpack.c.l.b16 %v471
        %v3028 = vunpack.c.l.b16 %v472
        %v3029 = vunpack.c.l.b16 %v473
        %v3030 = vunpack.c.l.b16 %v474
        %v3031 = vunpack.c.l.b16 %v475
        %v3032 = vunpack.c.l.b16 %v476
        %v3033 = vunpack.c.l.b16 %v477
        %v3034 = vunpack.c.l.b16 %v478
        %v3035 = vunpack.c.l.b16 %v479
        %v3036 = vunpack.c.l.b16 %v480
        %v3037 = vunpack.c.l.b16 %v481
        %v3038 = vunpack.c.l.b16 %v482
        %v3039 = vunpack.c.l.b16 %v483
        %v3040 = vunpack.c.l.b16 %v484
        %v3041 = vunpack.c.l.b16 %v485
        %v3042 = vunpack.c.l.b16 %v486
        %v3043 = vunpack.c.l.b16 %v487
        %v3044 = vunpack.c.l.b16 %v488
        %v3045 = vunpack.c.l.b16 %v489
        %v3046 = vunpack.c.l.b16 %v490
        %v3047 = vunpack.c.l.b16 %v491
        %v3048 = vunpack.c.l.b16 %v492
        %v3049 = vunpack.c.l.b16 %v493
        %v3050 = vunpack.c.l.b16 %v494
        %v3051 = vunpack.c.l.b16 %v495
        %v3052 = vunpack.c.l.b16 %v496
        %v3053 = vunpack.c.l.b16 %v497
        %v3054 = vunpack.c.l.b16 %v498
        %v3055 = vunpack.c.l.b16 %v499
        %v3056 = vunpack.c.l.b16 %v500
        %v3057 = vunpack.c.l.b16 %v501
        %v3058 = vunpack.c.l.b16 %v502
        %v3059 = vunpack.c.l.b16 %v503
        %v3060 = vunpack.c.l.b16 %v504
        %v3061 = vunpack.c.l.b16 %v505
        %v3062 = vunpack.c.l.b16 %v506
        %v3063 = vunpack.c.l.b16 %v507
        %v3064 = vunpack.c.l.b16 %v508
        %v3065 = vunpack.c.l.b16 %v509
        %v3066 = vunpack.c.l.b16 %v510
        %v3067 = vunpack.c.l.b16 %v511
        %v3068 = vunpack.c.l.b16 %v512
        %v3069 = vunpack.c.l.b16 %v513
        %v3070 = vunpack.c.l.b16 %v514
        %v3071 = vunpack.c.l.b16 %v515
        %v3072 = vunpack.c.l.b16 %v516
        %v3073 = vunpack.c.l.b16 %v517
        %v3074 = vunpack.c.l.b16 %v518
        %v3075 = vunpack.c.l.b16 %v519
        %v3076 = vunpack.c.l.b16 %v520
        %v3077 = vunpack.c.l.b16 %v521
        %v3078 = vunpack.c.l.b16 %v522
        %v3079 = vunpack.c.l.b16 %v523
        %v3080 = vunpack.c.l.b16 %v524
        %v3081 = vunpack.c.l.b16 %v525
        %v3082 = vunpack.c.l.b16 %v526
        %v3083 = vunpack.c.l.b16 %v527
        %v3084 = vunpack.c.l.b16 %v528
        %v3085 = vunpack.c.l.b16 %v529
        %v3086 = vunpack.c.l.b16 %v530
        %v3087 = vunpack.c.l.b16 %v531
        %v3088 = vunpack.c.l.b16 %v532
        %v3089 = vunpack.c.l.b16 %v533
        %v3090 = vunpack.c.l.b16 %v534
        %v3091 = vunpack.c.l.b16 %v535
        %v3092 = vunpack.c.l.b16 %v536
        %v3093 = vunpack.c.l.b16 %v537
        %v3094 = vunpack.c.l.b16 %v538
        %v3095 = vunpack.c.l.b16 %v539
        %v3096 = vunpack.c.l.b16 %v540
        %v3097 = vunpack.c.l.b16 %v541
        %v3098 = vunpack.c.l.b16 %v542
        %v3099 = vunpack.c.l.b16 %v543
        %v3100 = vunpack.c.l.b16 %v544
        %v3101 = vunpack.c.l.b16 %v545
        %v3102 = vunpack.c.l.b16 %v546
        %v3103 = vunpack.c.l.b16 %v547
        %v3104 = vunpack.c.l.b16 %v548
        %v3105 = vunpack.c.l.b16 %v549
        %v3106 = vunpack.c.l.b16 %v550
        %v3107 = vunpack.c.l.b16 %v551
        %v3108 = vunpack.c.l.b16 %v552
        %v3109 = vunpack.c.l.b16 %v553
        %v3110 = vunpack.c.l.b16 %v554
        %v3111 = vunpack.c.l.b16 %v555
        %v3112 = vunpack.c.l.b16 %v556
        %v3113 = vunpack.c.l.b16 %v557
        %v3114 = vunpack.c.l.b16 %v558
        %v3115 = vunpack.c.l.b16 %v559
        %v3116 = vunpack.c.l.b16 %v560
        %v3117 = vunpack.c.l.b16 %v561
        %v3118 = vunpack.c.l.b16 %v562
        %v3119 = vunpack.c.l.b16 %v563
        %v3120 = vunpack.c.l.b16 %v564
        %v3121 = vunpack.c.l.b16 %v565
        %v3122 = vunpack.c.l.b16 %v566
        %v3123 = vunpack.c.l.b16 %v567
        %v3124 = vunpack.c.l.b16 %v568
        %v3125 = vunpack.c.l.b16 %v569
        %v3126 = vunpack.c.l.b16 %v570
        %v3127 = vunpack.c.l.b16 %v571
        %v3128 = vunpack.c.l.b16 %v572
        %v3129 = vunpack.c.l.b16 %v573
        %v3130 = vunpack.c.l.b16 %v574
        %v3131 = vunpack.c.l.b16 %v575
        %v3132 = vunpack.c.l.b16 %v576
        %v3133 = vunpack.c.l.b16 %v577
        %v3134 = vunpack.c.l.b16 %v578
        %v3135 = vunpack.c.l.b16 %v579
        %v3136 = vunpack.c.l.b16 %v580
        %v3137 = vunpack.c.l.b16 %v581
        %v3138 = vunpack.c.l.b16 %v582
        %v3139 = vunpack.c.l.b16 %v583
        %v3140 = vunpack.c.l.b16 %v584
        %v3141 = vunpack.c.l.b16 %v585
        %v3142 = vunpack.c.l.b16 %v586
        %v3143 = vunpack.c.l.b16 %v587
        %v3144 = vunpack.c.l.b16 %v588
        %v3145 = vunpack.c.l.b16 %v589
        %v3146 = vunpack.c.l.b16 %v590
        %v3147 = vunpack.c.l.b16 %v591
        %v3148 = vunpack.c.l.b16 %v592
        %v3149 = vunpack.c.l.b16 %v593
        %v3150 = vunpack.c.l.b16 %v594
        %v3151 = vunpack.c.l.b16 %v595
        %v3152 = vunpack.c.l.b16 %v596
        %v3153 = vunpack.c.l.b16 %v597
        %v3154 = vunpack.c.l.b16 %v598
        %v3155 = vunpack.c.l.b16 %v599
        %v3156 = vunpack.c.l.b16 %v600
        %v3157 = vunpack.c.l.b16 %v601
        %v3158 = vunpack.c.l.b16 %v602
        %v3159 = vunpack.c.l.b16 %v603
        %v3160 = vunpack.c.l.b16 %v604
        %v3161 = vunpack.c.l.b16 %v605
        %v3162 = vunpack.c.l.b16 %v606
        %v3163 = vunpack.c.l.b16 %v607
        %v3164 = vunpack.c.l.b16 %v608
        %v3165 = vunpack.c.l.b16 %v609
        %v3166 = vunpack.c.l.b16 %v610
        %v3167 = vunpack.c.l.b16 %v611
        %v3168 = vunpack.c.l.b16 %v612
        %v3169 = vunpack.c.l.b16 %v613
        %v3170 = vunpack.c.l.b16 %v614
        %v3171 = vunpack.c.l.b16 %v615
        %v3172 = vunpack.c.l.b16 %v616
        %v3173 = vunpack.c.l.b16 %v617
        %v3174 = vunpack.c.l.b16 %v618
        %v3175 = vunpack.c.l.b16 %v619
        %v3176 = vunpack.c.l.b16 %v620
        %v3177 = vunpack.c.l.b16 %v621
        %v3178 = vunpack.c.l.b16 %v622
        %v3179 = vunpack.c.l.b16 %v623
        %v3180 = vunpack.c.l.b16 %v624
        %v3181 = vunpack.c.l.b16 %v625
        %v3182 = vunpack.c.l.b16 %v626
        %v3183 = vunpack.c.l.b16 %v627
        %v3184 = vunpack.c.l.b16 %v628
        %v3185 = vunpack.c.l.b16 %v629
        %v3186 = vunpack.c.l.b16 %v630
        %v3187 = vunpack.c.l.b16 %v631
        %v3188 = vunpack.c.l.b16 %v632
        %v3189 = vunpack.c.l.b16 %v633
        %v3190 = vunpack.c.l.b16 %v634
        %v3191 = vunpack.c.l.b16 %v635
        %v3192 = vunpack.c.l.b16 %v636
        %v3193 = vunpack.c.l.b16 %v637
        %v3194 = vunpack.c.l.b16 %v638
        %v3195 = vunpack.c.l.b16 %v639
        %v3196 = vunpack.c.l.b16 %v640
        %v3197 = vunpack.c.l.b16 %v641
        %v3198 = vunpack.c.l.b16 %v642
        %v3199 = vunpack.c.l.b16 %v643
        %v3200 = vunpack.c.l.b16 %v644
        %v3201 = vunpack.c.l.b16 %v645
        %v3202 = vunpack.c.l.b16 %v646
        %v3203 = vunpack.c.l.b16 %v647
        %v3204 = vunpack.c.l.b16 %v648
        %v3205 = vunpack.c.l.b16 %v649
        %v3206 = vunpack.c.l.b16 %v650
        %v3207 = vunpack.c.l.b16 %v651
        %v3208 = vunpack.c.l.b16 %v652
        %v3209 = vunpack.c.l.b16 %v653
        %v3210 = vunpack.c.l.b16 %v654
        %v3211 = vunpack.c.l.b16 %v655
        %v3212 = vunpack.c.l.b16 %v656
        %v3213 = vunpack.c.l.b16 %v657
        %v3214 = vunpack.c.l.b16 %v658
        %v3215 = vunpack.c.l.b16 %v659
        %v3216 = vunpack.c.l.b16 %v660
        %v3217 = vunpack.c.l.b16 %v661
        %v3218 = vunpack.c.l.b16 %v662
        %v3219 = vunpack.c.l.b16 %v663
        %v3220 = vunpack.c.l.b16 %v664
        %v3221 = vunpack.c.l.b16 %v665
        %v3222 = vunpack.c.l.b16 %v666
        %v3223 = vunpack.c.l.b16 %v667
        %v3224 = vunpack.c.l.b16 %v668
        %v3225 = vunpack.c.l.b16 %v669
        %v3226 = vunpack.c.l.b16 %v670
        %v3227 = vunpack.c.l.b16 %v671
        %v3228 = vunpack.c.l.b16 %v672
        %v3229 = vunpack.c.l.b16 %v673
        %v3230 = vunpack.c.l.b16 %v674
        %v3231 = vunpack.c.l.b16 %v675
        %v3232 = vunpack.c.l.b16 %v676
        %v3233 = vunpack.c.l.b16 %v677
        %v3234 = vunpack.c.l.b16 %v678
        %v3235 = vunpack.c.l.b16 %v679
        %v3236 = vunpack.c.l.b16 %v680
        %v3237 = vunpack.c.l.b16 %v681
        %v3238 = vunpack.c.l.b16 %v682
        %v3239 = vunpack.c.l.b16 %v683
        %v3240 = vunpack.c.l.b16 %v684
        %v3241 = vunpack.c.l.b16 %v685
        %v3242 = vunpack.c.l.b16 %v686
        %v3243 = vunpack.c.l.b16 %v687
        %v3244 = vunpack.c.l.b16 %v688
        %v3245 = vunpack.c.l.b16 %v689
        %v3246 = vunpack.c.l.b16 %v690
        %v3247 = vunpack.c.l.b16 %v691
        %v3248 = vunpack.c.l.b16 %v692
        %v3249 = vunpack.c.l.b16 %v693
        %v3250 = vunpack.c.l.b16 %v694
        %v3251 = vunpack.c.l.b16 %v695
        %v3252 = vunpack.c.l.b16 %v696
        %v3253 = vunpack.c.l.b16 %v697
        %v3254 = vunpack.c.l.b16 %v698
        %v3255 = vunpack.c.l.b16 %v699
        %v3256 = vunpack.c.l.b16 %v700
        %v3257 = vunpack.c.l.b16 %v701
        %v3258 = vunpack.c.l.b16 %v702
        %v3259 = vunpack.c.l.b16 %v703
        %v3260 = vunpack.c.l.b16 %v704
        %v3261 = vunpack.c.l.b16 %v705
        %v3262 = vunpack.c.l.b16 %v706
        %v3263 = vunpack.c.l.b16 %v707
        %v3264 = vunpack.c.l.b16 %v708
        %v3265 = vunpack.c.l.b16 %v709
        %v3266 = vunpack.c.l.b16 %v710
        %v3267 = vunpack.c.l.b16 %v711
        %v3268 = vunpack.c.l.b16 %v712
        %v3269 = vunpack.c.l.b16 %v713
        %v3270 = vunpack.c.l.b16 %v714
        %v3271 = vunpack.c.l.b16 %v715
        %v3272 = vunpack.c.l.b16 %v716
        %v3273 = vunpack.c.l.b16 %v717
        %v3274 = vunpack.c.l.b16 %v718
        %v3275 = vunpack.c.l.b16 %v719
        %v3276 = vunpack.c.l.b16 %v720
        %v3277 = vunpack.c.l.b16 %v721
        %v3278 = vunpack.c.l.b16 %v722
        %v3279 = vunpack.c.l.b16 %v723
        %v3280 = vunpack.c.l.b16 %v724
        %v3281 = vunpack.c.l.b16 %v725
        %v3282 = vunpack.c.l.b16 %v726
        %v3283 = vunpack.c.l.b16 %v727
        %v3284 = vunpack.c.l.b16 %v728
        %v3285 = vunpack.c.l.b16 %v729
        %v3286 = vunpack.c.l.b16 %v730
        %v3287 = vunpack.c.l.b16 %v731
        %v3288 = vunpack.c.l.b16 %v732
        %v3289 = vunpack.c.l.b16 %v733
        %v3290 = vunpack.c.l.b16 %v734
        %v3291 = vunpack.c.l.b16 %v735
        %v3292 = vunpack.c.l.b16 %v736
        %v3293 = vunpack.c.l.b16 %v737
        %v3294 = vunpack.c.l.b16 %v738
        %v3295 = vunpack.c.l.b16 %v739
        %v3296 = vunpack.c.l.b16 %v740
        %v3297 = vunpack.c.l.b16 %v741
        %v3298 = vunpack.c.l.b16 %v742
        %v3299 = vunpack.c.l.b16 %v743
        %v3300 = vunpack.c.l.b16 %v744
        %v3301 = vunpack.c.l.b16 %v745
        %v3302 = vunpack.c.l.b16 %v746
        %v3303 = vunpack.c.l.b16 %v747
        %v3304 = vunpack.c.l.b16 %v748
        %v3305 = vunpack.c.l.b16 %v749
        %v3306 = vunpack.c.l.b16 %v750
        %v3307 = vunpack.c.l.b16 %v751
        %v3308 = vunpack.c.l.b16 %v752
        %v3309 = vunpack.c.l.b16 %v753
        %v3310 = vunpack.c.l.b16 %v754
        %v3311 = vunpack.c.l.b16 %v755
        %v3312 = vunpack.c.l.b16 %v756
        %v3313 = vunpack.c.l.b16 %v757
        %v3314 = vunpack.c.l.b16 %v758
        %v3315 = vunpack.c.l.b16 %v759
        %v3316 = vunpack.c.l.b16 %v760
        %v3317 = vunpack.c.l.b16 %v761
        %v3318 = vunpack.c.l.b16 %v762
        %v3319 = vunpack.c.l.b16 %v763
        %v3320 = vunpack.c.l.b16 %v764
        %v3321 = vunpack.c.l.b16 %v765
        %v3322 = vunpack.c.l.b16 %v766
        %v3323 = vunpack.c.l.b16 %v767
        %v3324 = vunpack.c.l.b16 %v768
        %v3325 = vunpack.c.l.b16 %v769
        %v3326 = vunpack.c.l.b16 %v770
        %v3327 = vunpack.c.l.b16 %v771
        %v3328 = vunpack.c.l.b16 %v772
        %v3329 = vunpack.c.l.b16 %v773
        %v3330 = vunpack.c.l.b16 %v774
        %v3331 = vunpack.c.l.b16 %v775
        %v3332 = vunpack.c.l.b16 %v776
        %v3333 = vunpack.c.l.b16 %v777
        %v3334 = vunpack.c.l.b16 %v778
        %v3335 = vunpack.c.l.b16 %v779
        %v3336 = vunpack.c.l.b16 %v780
        %v3337 = vunpack.c.l.b16 %v781
        %v3338 = vunpack.c.l.b16 %v782
        %v3339 = vunpack.c.l.b16 %v783
        %v3340 = vunpack.c.l.b16 %v784
        %v3341 = vunpack.c.l.b16 %v785
        %v3342 = vunpack.c.l.b16 %v786
        %v3343 = vunpack.c.l.b16 %v787
        %v3344 = vunpack.c.l.b16 %v788
        %v3345 = vunpack.c.l.b16 %v789
        %v3346 = vunpack.c.l.b16 %v790
        %v3347 = vunpack.c.l.b16 %v791
        %v3348 = vunpack.c.l.b16 %v792
        %v3349 = vunpack.c.l.b16 %v793
        %v3350 = vunpack.c.l.b16 %v794
        %v3351 = vunpack.c.l.b16 %v795
        %v3352 = vunpack.c.l.b16 %v796
        %v3353 = vunpack.c.l.b16 %v797
        %v3354 = vunpack.c.l.b16 %v798
        %v3355 = vunpack.c.l.b16 %v799
        %v3356 = vunpack.c.l.b16 %v800
        %v3357 = vunpack.c.l.b16 %v801
        %v3358 = vunpack.c.l.b16 %v802
        %v3359 = vunpack.c.l.b16 %v803
        %v3360 = vunpack.c.l.b16 %v804
        %v3361 = vunpack.c.l.b16 %v805
        %v3362 = vunpack.c.l.b16 %v806
        %v3363 = vunpack.c.l.b16 %v807
        %v3364 = vunpack.c.l.b16 %v808
        %v3365 = vunpack.c.l.b16 %v809
        %v3366 = vunpack.c.l.b16 %v810
        %v3367 = vunpack.c.l.b16 %v811
        %v3368 = vunpack.c.l.b16 %v812
        %v3369 = vunpack.c.l.b16 %v813
        %v3370 = vunpack.c.l.b16 %v814
        %v3371 = vunpack.c.l.b16 %v815
        %v3372 = vunpack.c.l.b16 %v816
        %v3373 = vunpack.c.l.b16 %v817
        %v3374 = vunpack.c.l.b16 %v818
        %v3375 = vunpack.c.l.b16 %v819
        %v3376 = vunpack.c.l.b16 %v820
        %v3377 = vunpack.c.l.b16 %v821
        %v3378 = vunpack.c.l.b16 %v822
        %v3379 = vunpack.c.l.b16 %v823
        %v3380 = vunpack.c.l.b16 %v824
        %v3381 = vunpack.c.l.b16 %v825
        %v3382 = vunpack.c.l.b16 %v826
        %v3383 = vunpack.c.l.b16 %v827
        %v3384 = vunpack.c.l.b16 %v828
        %v3385 = vunpack.c.l.b16 %v829
        %v3386 = vunpack.c.l.b16 %v830
        %v3387 = vunpack.c.l.b16 %v831
        %v3388 = vunpack.c.l.b16 %v832
        %v3389 = vunpack.c.l.b16 %v833
        %v3390 = vunpack.c.l.b16 %v834
        %v3391 = vunpack.c.l.b16 %v835
        %v3392 = vunpack.c.l.b16 %v836
        %v3393 = vunpack.c.l.b16 %v837
        %v3394 = vunpack.c.l.b16 %v838
        %v3395 = vunpack.c.l.b16 %v839
        %v3396 = vunpack.c.l.b16 %v840
        %v3397 = vunpack.c.l.b16 %v841
        %v3398 = vunpack.c.l.b16 %v842
        %v3399 = vunpack.c.l.b16 %v843
        %v3400 = vunpack.c.l.b16 %v844
        %v3401 = vunpack.c.l.b16 %v845
        %v3402 = vunpack.c.l.b16 %v846
        %v3403 = vunpack.c.l.b16 %v847
        %v3404 = vunpack.c.l.b16 %v848
        %v3405 = vunpack.c.l.b16 %v849
        %v3406 = vunpack.c.l.b16 %v850
        %v3407 = vunpack.c.l.b16 %v851
        %v3408 = vunpack.c.l.b16 %v852
        %v3409 = vunpack.c.l.b16 %v853
        %v3410 = vunpack.c.l.b16 %v854
        %v3411 = vunpack.c.l.b16 %v855
        %v3412 = vunpack.c.l.b16 %v856
        %v3413 = vunpack.c.l.b16 %v857
        %v3414 = vunpack.c.l.b16 %v858
        %v3415 = vunpack.c.l.b16 %v859
        %v3416 = vunpack.c.l.b16 %v860
        %v3417 = vunpack.c.l.b16 %v861
        %v3418 = vunpack.c.l.b16 %v862
        %v3419 = vunpack.c.l.b16 %v863
        %v3420 = vunpack.c.l.b16 %v864
        %v3421 = vunpack.c.l.b16 %v865
        %v3422 = vunpack.c.l.b16 %v866
        %v3423 = vunpack.c.l.b16 %v867
        %v3424 = vunpack.c.l.b16 %v868
        %v3425 = vunpack.c.l.b16 %v869
        %v3426 = vunpack.c.l.b16 %v870
        %v3427 = vunpack.c.l.b16 %v871
        %v3428 = vunpack.c.l.b16 %v872
        %v3429 = vunpack.c.l.b16 %v873
        %v3430 = vunpack.c.l.b16 %v874
        %v3431 = vunpack.c.l.b16 %v875
        %v3432 = vunpack.c.l.b16 %v876
        %v3433 = vunpack.c.l.b16 %v877
        %v3434 = vunpack.c.l.b16 %v878
        %v3435 = vunpack.c.l.b16 %v879
        %v3436 = vunpack.c.l.b16 %v880
        %v3437 = vunpack.c.l.b16 %v881
        %v3438 = vunpack.c.l.b16 %v882
        %v3439 = vunpack.c.l.b16 %v883
        %v3440 = vunpack.c.l.b16 %v884
        %v3441 = vunpack.c.l.b16 %v885
        %v3442 = vunpack.c.l.b16 %v886
        %v3443 = vunpack.c.l.b16 %v887
        %v3444 = vunpack.c.l.b16 %v888
        %v3445 = vunpack.c.l.b16 %v889
        %v3446 = vunpack.c.l.b16 %v890
        %v3447 = vunpack.c.l.b16 %v891
        %v3448 = vunpack.c.l.b16 %v892
        %v3449 = vunpack.c.l.b16 %v893
        %v3450 = vunpack.c.l.b16 %v894
        %v3451 = vunpack.c.l.b16 %v895
        %v3452 = vunpack.c.l.b16 %v896
        %v3453 = vunpack.c.l.b16 %v897
        %v3454 = vunpack.c.l.b16 %v898
        %v3455 = vunpack.c.l.b16 %v899
        %v3456 = vunpack.c.l.b16 %v900
        %v3457 = vunpack.c.l.b16 %v901
        %v3458 = vunpack.c.l.b16 %v902
        %v3459 = vunpack.c.l.b16 %v903
        %v3460 = vunpack.c.l.b16 %v904
        %v3461 = vunpack.c.l.b16 %v905
        %v3462 = vunpack.c.l.b16 %v906
        %v3463 = vunpack.c.l.b16 %v907
        %v3464 = vunpack.c.l.b16 %v908
        %v3465 = vunpack.c.l.b16 %v909
        %v3466 = vunpack.c.l.b16 %v910
        %v3467 = vunpack.c.l.b16 %v911
        %v3468 = vunpack.c.l.b16 %v912
        %v3469 = vunpack.c.l.b16 %v913
        %v3470 = vunpack.c.l.b16 %v914
        %v3471 = vunpack.c.l.b16 %v915
        %v3472 = vunpack.c.l.b16 %v916
        %v3473 = vunpack.c.l.b16 %v917
        %v3474 = vunpack.c.l.b16 %v918
        %v3475 = vunpack.c.l.b16 %v919
        %v3476 = vunpack.c.l.b16 %v920
        %v3477 = vunpack.c.l.b16 %v921
        %v3478 = vunpack.c.l.b16 %v922
        %v3479 = vunpack.c.l.b16 %v923
        %v3480 = vunpack.c.l.b16 %v924
        %v3481 = vunpack.c.l.b16 %v925
        %v3482 = vunpack.c.l.b16 %v926
        %v3483 = vunpack.c.l.b16 %v927
        %v3484 = vunpack.c.l.b16 %v928
        %v3485 = vunpack.c.l.b16 %v929
        %v3486 = vunpack.c.l.b16 %v930
        %v3487 = vunpack.c.l.b16 %v931
        %v3488 = vunpack.c.l.b16 %v932
        %v3489 = vunpack.c.l.b16 %v933
        %v3490 = vunpack.c.l.b16 %v934
        %v3491 = vunpack.c.l.b16 %v935
        %v3492 = vunpack.c.l.b16 %v936
        %v3493 = vunpack.c.l.b16 %v937
        %v3494 = vunpack.c.l.b16 %v938
        %v3495 = vunpack.c.l.b16 %v939
        %v3496 = vunpack.c.l.b16 %v940
        %v3497 = vunpack.c.l.b16 %v941
        %v3498 = vunpack.c.l.b16 %v942
        %v3499 = vunpack.c.l.b16 %v943
        %v3500 = vunpack.c.l.b16 %v944
        %v3501 = vunpack.c.l.b16 %v945
        %v3502 = vunpack.c.l.b16 %v946
        %v3503 = vunpack.c.l.b16 %v947
        %v3504 = vunpack.c.l.b16 %v948
        %v3505 = vunpack.c.l.b16 %v949
        %v3506 = vunpack.c.l.b16 %v950
        %v3507 = vunpack.c.l.b16 %v951
        %v3508 = vunpack.c.l.b16 %v952
        %v3509 = vunpack.c.l.b16 %v953
        %v3510 = vunpack.c.l.b16 %v954
        %v3511 = vunpack.c.l.b16 %v955
        %v3512 = vunpack.c.l.b16 %v956
        %v3513 = vunpack.c.l.b16 %v957
        %v3514 = vunpack.c.l.b16 %v958
        %v3515 = vunpack.c.l.b16 %v959
        %v3516 = vunpack.c.l.b16 %v960
        %v3517 = vunpack.c.l.b16 %v961
        %v3518 = vunpack.c.l.b16 %v962
        %v3519 = vunpack.c.l.b16 %v963
        %v3520 = vunpack.c.l.b16 %v964
        %v3521 = vunpack.c.l.b16 %v965
        %v3522 = vunpack.c.l.b16 %v966
        %v3523 = vunpack.c.l.b16 %v967
        %v3524 = vunpack.c.l.b16 %v968
        %v3525 = vunpack.c.l.b16 %v969
        %v3526 = vunpack.c.l.b16 %v970
        %v3527 = vunpack.c.l.b16 %v971
        %v3528 = vunpack.c.l.b16 %v972
        %v3529 = vunpack.c.l.b16 %v973
        %v3530 = vunpack.c.l.b16 %v974
        %v3531 = vunpack.c.l.b16 %v975
        %v3532 = vunpack.c.l.b16 %v976
        %v3533 = vunpack.c.l.b16 %v977
        %v3534 = vunpack.c.l.b16 %v978
        %v3535 = vunpack.c.l.b16 %v979
        %v3536 = vunpack.c.l.b16 %v980
        %v3537 = vunpack.c.l.b16 %v981
        %v3538 = vunpack.c.l.b16 %v982
        %v3539 = vunpack.c.l.b16 %v983
        %v3540 = vunpack.c.l.b16 %v984
        %v3541 = vunpack.c.l.b16 %v985
        %v3542 = vunpack.c.l.b16 %v986
        %v3543 = vunpack.c.l.b16 %v987
        %v3544 = vunpack.c.l.b16 %v988
        %v3545 = vunpack.c.l.b16 %v989
        %v3546 = vunpack.c.l.b16 %v990
        %v3547 = vunpack.c.l.b16 %v991
        %v3548 = vunpack.c.l.b16 %v992
        %v3549 = vunpack.c.l.b16 %v993
        %v3550 = vunpack.c.l.b16 %v994
        %v3551 = vunpack.c.l.b16 %v995
        %v3552 = vunpack.c.l.b16 %v996
        %v3553 = vunpack.c.l.b16 %v997
        %v3554 = vunpack.c.l.b16 %v998
        %v3555 = vunpack.c.l.b16 %v999
        %v3556 = vunpack.c.l.b16 %v1000
        %v3557 = vunpack.c.l.b16 %v1001
        %v3558 = vunpack.c.l.b16 %v1002
        %v3559 = vunpack.c.l.b16 %v1003
        %v3560 = vunpack.c.l.b16 %v1004
        %v3561 = vunpack.c.l.b16 %v1005
        %v3562 = vunpack.c.l.b16 %v1006
        %v3563 = vunpack.c.l.b16 %v1007
        %v3564 = vunpack.c.l.b16 %v1008
        %v3565 = vunpack.c.l.b16 %v1009
        %v3566 = vunpack.c.l.b16 %v1010
        %v3567 = vunpack.c.l.b16 %v1011
        %v3568 = vunpack.c.l.b16 %v1012
        %v3569 = vunpack.c.l.b16 %v1013
        %v3570 = vunpack.c.l.b16 %v1014
        %v3571 = vunpack.c.l.b16 %v1015
        %v3572 = vunpack.c.l.b16 %v1016
        %v3573 = vunpack.c.l.b16 %v1017
        %v3574 = vunpack.c.l.b16 %v1018
        %v3575 = vunpack.c.l.b16 %v1019
        %v3576 = vunpack.c.l.b16 %v1020
        %v3577 = vunpack.c.l.b16 %v1021
        %v3578 = vunpack.c.l.b16 %v1022
        %v3579 = vunpack.c.l.b16 %v1023
        %v3580 = vunpack.c.l.b16 %v1024
        %v3581 = vunpack.c.l.b16 %v1025
        %v3582 = vunpack.c.l.b16 %v1026
        %v3583 = vunpack.c.l.b16 %v1027
        %v3584 = vunpack.c.l.b16 %v1028
        %v3585 = vunpack.c.l.b16 %v1029
        %v3586 = vunpack.c.l.b16 %v1030
        %v3587 = vunpack.c.l.b16 %v1031
        %v3588 = vunpack.c.l.b16 %v1032
        %v3589 = vunpack.c.l.b16 %v1033
        %v3590 = vunpack.c.l.b16 %v1034
        %v3591 = vunpack.c.l.b16 %v1035
        %v3592 = vunpack.c.l.b16 %v1036
        %v3593 = vunpack.c.l.b16 %v1037
        %v3594 = vunpack.c.l.b16 %v1038
        %v3595 = vunpack.c.l.b16 %v1039
        %v3596 = vunpack.c.l.b16 %v1040
        %v3597 = vunpack.c.l.b16 %v1041
        %v3598 = vunpack.c.l.b16 %v1042
        %v3599 = vunpack.c.l.b16 %v1043
        %v3600 = vunpack.c.l.b16 %v1044
        %v3601 = vunpack.c.l.b16 %v1045
        %v3602 = vunpack.c.l.b16 %v1046
        %v3603 = vunpack.c.l.b16 %v1047
        %v3604 = vunpack.c.l.b16 %v1048
        %v3605 = vunpack.c.l.b16 %v1049
        %v3606 = vunpack.c.l.b16 %v1050
        %v3607 = vunpack.c.l.b16 %v1051
        %v3608 = vunpack.c.l.b16 %v1052
        %v3609 = vunpack.c.l.b16 %v1053
        %v3610 = vunpack.c.l.b16 %v1054
        %v3611 = vunpack.c.l.b16 %v1055
        %v3612 = vunpack.c.l.b16 %v1056
        %v3613 = vunpack.c.l.b16 %v1057
        %v3614 = vunpack.c.l.b16 %v1058
        %v3615 = vunpack.c.l.b16 %v1059
        %v3616 = vunpack.c.l.b16 %v1060
        %v3617 = vunpack.c.l.b16 %v1061
        %v3618 = vunpack.c.l.b16 %v1062
        %v3619 = vunpack.c.l.b16 %v1063
        %v3620 = vunpack.c.l.b16 %v1064
        %v3621 = vunpack.c.l.b16 %v1065
        %v3622 = vunpack.c.l.b16 %v1066
        %v3623 = vunpack.c.l.b16 %v1067
        %v3624 = vunpack.c.l.b16 %v1068
        %v3625 = vunpack.c.l.b16 %v1069
        %v3626 = vunpack.c.l.b16 %v1070
        %v3627 = vunpack.c.l.b16 %v1071
        %v3628 = vunpack.c.l.b16 %v1072
        %v3629 = vunpack.c.l.b16 %v1073
        %v3630 = vunpack.c.l.b16 %v1074
        %v3631 = vunpack.c.l.b16 %v1075
        %v3632 = vunpack.c.l.b16 %v1076
        %v3633 = vunpack.c.l.b16 %v1077
        %v3634 = vunpack.c.l.b16 %v1078
        %v3635 = vunpack.c.l.b16 %v1079
        %v3636 = vunpack.c.l.b16 %v1080
        %v3637 = vunpack.c.l.b16 %v1081
        %v3638 = vunpack.c.l.b16 %v1082
        %v3639 = vunpack.c.l.b16 %v1083
        %v3640 = vunpack.c.l.b16 %v1084
        %v3641 = vunpack.c.l.b16 %v1085
        %v3642 = vunpack.c.l.b16 %v1086
        %v3643 = vunpack.c.l.b16 %v1087
        %v3644 = vunpack.c.l.b16 %v1088
        %v3645 = vunpack.c.l.b16 %v1089
        %v3646 = vunpack.c.l.b16 %v1090
        %v3647 = vunpack.c.l.b16 %v1091
        %v3648 = vunpack.c.l.b16 %v1092
        %v3649 = vunpack.c.l.b16 %v1093
        %v3650 = vunpack.c.l.b16 %v1094
        %v3651 = vunpack.c.l.b16 %v1095
        %v3652 = vunpack.c.l.b16 %v1096
        %v3653 = vunpack.c.l.b16 %v1097
        %v3654 = vunpack.c.l.b16 %v1098
        %v3655 = vunpack.c.l.b16 %v1099
        %v3656 = vunpack.c.l.b16 %v1100
        %v3657 = vunpack.c.l.b16 %v1101
        %v3658 = vunpack.c.l.b16 %v1102
        %v3659 = vunpack.c.l.b16 %v1103
        %v3660 = vunpack.c.l.b16 %v1104
        %v3661 = vunpack.c.l.b16 %v1105
        %v3662 = vunpack.c.l.b16 %v1106
        %v3663 = vunpack.c.l.b16 %v1107
        %v3664 = vunpack.c.l.b16 %v1108
        %v3665 = vunpack.c.l.b16 %v1109
        %v3666 = vunpack.c.l.b16 %v1110
        %v3667 = vunpack.c.l.b16 %v1111
        %v3668 = vunpack.c.l.b16 %v1112
        %v3669 = vunpack.c.l.b16 %v1113
        %v3670 = vunpack.c.l.b16 %v1114
        %v3671 = vunpack.c.l.b16 %v1115
        %v3672 = vunpack.c.l.b16 %v1116
        %v3673 = vunpack.c.l.b16 %v1117
        %v3674 = vunpack.c.l.b16 %v1118
        %v3675 = vunpack.c.l.b16 %v1119
        %v3676 = vunpack.c.l.b16 %v1120
        %v3677 = vunpack.c.l.b16 %v1121
        %v3678 = vunpack.c.l.b16 %v1122
        %v3679 = vunpack.c.l.b16 %v1123
        %v3680 = vunpack.c.l.b16 %v1124
        %v3681 = vunpack.c.l.b16 %v1125
        %v3682 = vunpack.c.l.b16 %v1126
        %v3683 = vunpack.c.l.b16 %v1127
        %v3684 = vunpack.c.l.b16 %v1128
        %v3685 = vunpack.c.l.b16 %v1129
        %v3686 = vunpack.c.l.b16 %v1130
        %v3687 = vunpack.c.l.b16 %v1131
        %v3688 = vunpack.c.l.b16 %v1132
        %v3689 = vunpack.c.l.b16 %v1133
        %v3690 = vunpack.c.l.b16 %v1134
        %v3691 = vunpack.c.l.b16 %v1135
        %v3692 = vunpack.c.l.b16 %v1136
        %v3693 = vunpack.c.l.b16 %v1137
        %v3694 = vunpack.c.l.b16 %v1138
        %v3695 = vunpack.c.l.b16 %v1139
        %v3696 = vunpack.c.l.b16 %v1140
        %v3697 = vunpack.c.l.b16 %v1141
        %v3698 = vunpack.c.l.b16 %v1142
        %v3699 = vunpack.c.l.b16 %v1143
        %v3700 = vunpack.c.l.b16 %v1144
        %v3701 = vunpack.c.l.b16 %v1145
        %v3702 = vunpack.c.l.b16 %v1146
        %v3703 = vunpack.c.l.b16 %v1147
        %v3704 = vunpack.c.l.b16 %v1148
        %v3705 = vunpack.c.l.b16 %v1149
        %v3706 = vunpack.c.l.b16 %v1150
        %v3707 = vunpack.c.l.b16 %v1151
        %v3708 = vunpack.c.l.b16 %v1152
        %v3709 = vunpack.c.l.b16 %v1153
        %v3710 = vunpack.c.l.b16 %v1154
        %v3711 = vunpack.c.l.b16 %v1155
        %v3712 = vunpack.c.l.b16 %v1156
        %v3713 = vunpack.c.l.b16 %v1157
        %v3714 = vunpack.c.l.b16 %v1158
        %v3715 = vunpack.c.l.b16 %v1159
        %v3716 = vunpack.c.l.b16 %v1160
        %v3717 = vunpack.c.l.b16 %v1161
        %v3718 = vunpack.c.l.b16 %v1162
        %v3719 = vunpack.c.l.b16 %v1163
        %v3720 = vunpack.c.l.b16 %v1164
        %v3721 = vunpack.c.l.b16 %v1165
        %v3722 = vunpack.c.l.b16 %v1166
        %v3723 = vunpack.c.l.b16 %v1167
        %v3724 = vunpack.c.l.b16 %v1168
        %v3725 = vunpack.c.l.b16 %v1169
        %v3726 = vunpack.c.l.b16 %v1170
        %v3727 = vunpack.c.l.b16 %v1171
        %v3728 = vunpack.c.l.b16 %v1172
        %v3729 = vunpack.c.l.b16 %v1173
        %v3730 = vunpack.c.l.b16 %v1174
        %v3731 = vunpack.c.l.b16 %v1175
        %v3732 = vunpack.c.l.b16 %v1176
        %v3733 = vunpack.c.l.b16 %v1177
        %v3734 = vunpack.c.l.b16 %v1178
        %v3735 = vunpack.c.l.b16 %v1179
        %v3736 = vunpack.c.l.b16 %v1180
        %v3737 = vunpack.c.l.b16 %v1181
        %v3738 = vunpack.c.l.b16 %v1182
        %v3739 = vunpack.c.l.b16 %v1183
        %v3740 = vunpack.c.l.b16 %v1184
        %v3741 = vunpack.c.l.b16 %v1185
        %v3742 = vunpack.c.l.b16 %v1186
        %v3743 = vunpack.c.l.b16 %v1187
        %v3744 = vunpack.c.l.b16 %v1188
        %v3745 = vunpack.c.l.b16 %v1189
        %v3746 = vunpack.c.l.b16 %v1190
        %v3747 = vunpack.c.l.b16 %v1191
        %v3748 = vunpack.c.l.b16 %v1192
        %v3749 = vunpack.c.l.b16 %v1193
        %v3750 = vunpack.c.l.b16 %v1194
        %v3751 = vunpack.c.l.b16 %v1195
        %v3752 = vunpack.c.l.b16 %v1196
        %v3753 = vunpack.c.l.b16 %v1197
        %v3754 = vunpack.c.l.b16 %v1198
        %v3755 = vunpack.c.l.b16 %v1199
        %v3756 = vunpack.c.l.b16 %v1200
        %v3757 = vunpack.c.l.b16 %v1201
        %v3758 = vunpack.c.l.b16 %v1202
        %v3759 = vunpack.c.l.b16 %v1203
        %v3760 = vunpack.c.l.b16 %v1204
        %v3761 = vunpack.c.l.b16 %v1205
        %v3762 = vunpack.c.l.b16 %v1206
        %v3763 = vunpack.c.l.b16 %v1207
        %v3764 = vunpack.c.l.b16 %v1208
        %v3765 = vunpack.c.l.b16 %v1209
        %v3766 = vunpack.c.l.b16 %v1210
        %v3767 = vunpack.c.l.b16 %v1211
        %v3768 = vunpack.c.l.b16 %v1212
        %v3769 = vunpack.c.l.b16 %v1213
        %v3770 = vunpack.c.l.b16 %v1214
        %v3771 = vunpack.c.l.b16 %v1215
        %v3772 = vunpack.c.l.b16 %v1216
        %v3773 = vunpack.c.l.b16 %v1217
        %v3774 = vunpack.c.l.b16 %v1218
        %v3775 = vunpack.c.l.b16 %v1219
        %v3776 = vunpack.c.l.b16 %v1220
        %v3777 = vunpack.c.l.b16 %v1221
        %v3778 = vunpack.c.l.b16 %v1222
        %v3779 = vunpack.c.l.b16 %v1223
        %v3780 = vunpack.c.l.b16 %v1224
        %v3781 = vunpack.c.l.b16 %v1225
        %v3782 = vunpack.c.l.b16 %v1226
        %v3783 = vunpack.c.l.b16 %v1227
        %v3784 = vunpack.c.l.b16 %v1228
        %v3785 = vunpack.c.l.b16 %v1229
        %v3786 = vunpack.c.l.b16 %v1230
        %v3787 = vunpack.c.l.b16 %v1231
        %v3788 = vunpack.c.l.b16 %v1232
        %v3789 = vunpack.c.l.b16 %v1233
        %v3790 = vunpack.c.l.b16 %v1234
        %v3791 = vunpack.c.l.b16 %v1235
        %v3792 = vunpack.c.l.b16 %v1236
        %v3793 = vunpack.c.l.b16 %v1237
        %v3794 = vunpack.c.l.b16 %v1238
        %v3795 = vunpack.c.l.b16 %v1239
        %v3796 = vunpack.c.l.b16 %v1240
        %v3797 = vunpack.c.l.b16 %v1241
        %v3798 = vunpack.c.l.b16 %v1242
        %v3799 = vunpack.c.l.b16 %v1243
        %v3800 = vunpack.c.l.b16 %v1244
        %v3801 = vunpack.c.l.b16 %v1245
        %v3802 = vunpack.c.l.b16 %v1246
        %v3803 = vunpack.c.l.b16 %v1247
        %v3804 = vunpack.c.l.b16 %v1248
        %v3805 = vunpack.c.l.b16 %v1249
        %v3806 = vunpack.c.l.b16 %v1250
        %v3807 = vunpack.c.l.b16 %v1251
        %v3808 = vunpack.c.l.b16 %v1252
        %v3809 = vunpack.c.l.b16 %v1253
        %v3810 = vunpack.c.l.b16 %v1254
        %v3811 = vunpack.c.l.b16 %v1255
        %v3812 = vunpack.c.l.b16 %v1256
        %v3813 = vunpack.c.l.b16 %v1257
        %v3814 = vunpack.c.l.b16 %v1258
        %v3815 = vunpack.c.l.b16 %v1259
        %v3816 = vunpack.c.l.b16 %v1260
        %v3817 = vunpack.c.l.b16 %v1261
        %v3818 = vunpack.c.l.b16 %v1262
        %v3819 = vunpack.c.l.b16 %v1263
        %v3820 = vunpack.c.l.b16 %v1264
        %v3821 = vunpack.c.l.b16 %v1265
        %v3822 = vunpack.c.l.b16 %v1266
        %v3823 = vunpack.c.l.b16 %v1267
        %v3824 = vunpack.c.l.b16 %v1268
        %v3825 = vunpack.c.l.b16 %v1269
        %v3826 = vunpack.c.l.b16 %v1270
        %v3827 = vunpack.c.l.b16 %v1271
        %v3828 = vunpack.c.l.b16 %v1272
        %v3829 = vunpack.c.l.b16 %v1273
        %v3830 = vunpack.c.l.b16 %v1274
        %v3831 = vunpack.c.l.b16 %v1275
        %v3832 = vunpack.c.l.b16 %v1276
        %v3833 = vunpack.c.l.b16 %v1277
        %v3834 = vunpack.c.l.b16 %v1278
        %v3835 = vunpack.c.l.b16 %v1279
        %v3836 = vunpack.c.l.b16 %v1280
        %v3837 = vunpack.c.l.b16 %v1281
        %v3838 = vunpack.c.l.b16 %v1282
        %v3839 = vunpack.c.l.b16 %v1283
        %v3840 = vunpack.c.l.b16 %v1284
        %v3841 = vunpack.c.l.b16 %v1285
        %v3842 = vunpack.c.l.b16 %v1286
        %v3843 = vunpack.c.l.b16 %v1287
        %v3844 = vunpack.c.l.b16 %v1288
        %v3845 = vunpack.c.l.b16 %v1289
        %v3846 = vunpack.c.l.b16 %v1290
        %v3847 = vunpack.c.l.b16 %v1291
        %v3848 = vunpack.c.l.b16 %v1292
        %v3849 = vunpack.c.l.b16 %v1293
        %v3850 = vunpack.c.l.b16 %v1294
        %v3851 = vunpack.c.l.b16 %v1295
        %v3852 = vunpack.c.l.b16 %v1296
        %v3853 = vunpack.c.l.b16 %v1297
        %v3854 = vunpack.c.l.b16 %v1298
        %v3855 = vunpack.c.l.b16 %v1299
        %v3856 = vunpack.c.l.b16 %v1300
        %v3857 = vunpack.c.l.b16 %v1301
        %v3858 = vunpack.c.l.b16 %v1302
        %v3859 = vunpack.c.l.b16 %v1303
        %v3860 = vunpack.c.l.b16 %v1304
        %v3861 = vunpack.c.l.b16 %v1305
        %v3862 = vunpack.c.l.b16 %v1306
        %v3863 = vunpack.c.l.b16 %v1307
        %v3864 = vunpack.c.l.b16 %v1308
        %v3865 = vunpack.c.l.b16 %v1309
        %v3866 = vunpack.c.l.b16 %v1310
        %v3867 = vunpack.c.l.b16 %v1311
        %v3868 = vunpack.c.l.b16 %v1312
        %v3869 = vunpack.c.l.b16 %v1313
        %v3870 = vunpack.c.l.b16 %v1314
        %v3871 = vunpack.c.l.b16 %v1315
        %v3872 = vunpack.c.l.b16 %v1316
        %v3873 = vunpack.c.l.b16 %v1317
        %v3874 = vunpack.c.l.b16 %v1318
        %v3875 = vunpack.c.l.b16 %v1319
        %v3876 = vunpack.c.l.b16 %v1320
        %v3877 = vunpack.c.l.b16 %v1321
        %v3878 = vunpack.c.l.b16 %v1322
        %v3879 = vunpack.c.l.b16 %v1323
        %v3880 = vunpack.c.l.b16 %v1324
        %v3881 = vunpack.c.l.b16 %v1325
        %v3882 = vunpack.c.l.b16 %v1326
        %v3883 = vunpack.c.l.b16 %v1327
        %v3884 = vunpack.c.l.b16 %v1328
        %v3885 = vunpack.c.l.b16 %v1329
        %v3886 = vunpack.c.l.b16 %v1330
        %v3887 = vunpack.c.l.b16 %v1331
        %v3888 = vunpack.c.l.b16 %v1332
        %v3889 = vunpack.c.l.b16 %v1333
        %v3890 = vunpack.c.l.b16 %v1334
        %v3891 = vunpack.c.l.b16 %v1335
        %v3892 = vunpack.c.l.b16 %v1336
        %v3893 = vunpack.c.l.b16 %v1337
        %v3894 = vunpack.c.l.b16 %v1338
        %v3895 = vunpack.c.l.b16 %v1339
        %v3896 = vunpack.c.l.b16 %v1340
        %v3897 = vunpack.c.l.b16 %v1341
        %v3898 = vunpack.c.l.b16 %v1342
        %v3899 = vunpack.c.l.b16 %v1343
        %v3900 = vunpack.c.l.b16 %v1344
        %v3901 = vunpack.c.l.b16 %v1345
        %v3902 = vunpack.c.l.b16 %v1346
        %v3903 = vunpack.c.l.b16 %v1347
        %v3904 = vunpack.c.l.b16 %v1348
        %v3905 = vunpack.c.l.b16 %v1349
        %v3906 = vunpack.c.l.b16 %v1350
        %v3907 = vunpack.c.l.b16 %v1351
        %v3908 = vunpack.c.l.b16 %v1352
        %v3909 = vunpack.c.l.b16 %v1353
        %v3910 = vunpack.c.l.b16 %v1354
        %v3911 = vunpack.c.l.b16 %v1355
        %v3912 = vunpack.c.l.b16 %v1356
        %v3913 = vunpack.c.l.b16 %v1357
        %v3914 = vunpack.c.l.b16 %v1358
        %v3915 = vunpack.c.l.b16 %v1359
        %v3916 = vunpack.c.l.b16 %v1360
        %v3917 = vunpack.c.l.b16 %v1361
        %v3918 = vunpack.c.l.b16 %v1362
        %v3919 = vunpack.c.l.b16 %v1363
        %v3920 = vunpack.c.l.b16 %v1364
        %v3921 = vunpack.c.l.b16 %v1365
        %v3922 = vunpack.c.l.b16 %v1366
        %v3923 = vunpack.c.l.b16 %v1367
        %v3924 = vunpack.c.l.b16 %v1368
        %v3925 = vunpack.c.l.b16 %v1369
        %v3926 = vunpack.c.l.b16 %v1370
        %v3927 = vunpack.c.l.b16 %v1371
        %v3928 = vunpack.c.l.b16 %v1372
        %v3929 = vunpack.c.l.b16 %v1373
        %v3930 = vunpack.c.l.b16 %v1374
        %v3931 = vunpack.c.l.b16 %v1375
        %v3932 = vunpack.c.l.b16 %v1376
        %v3933 = vunpack.c.l.b16 %v1377
        %v3934 = vunpack.c.l.b16 %v1378
        %v3935 = vunpack.c.l.b16 %v1379
        %v3936 = vunpack.c.l.b16 %v1380
        %v3937 = vunpack.c.l.b16 %v1381
        %v3938 = vunpack.c.l.b16 %v1382
        %v3939 = vunpack.c.l.b16 %v1383
        %v3940 = vunpack.c.l.b16 %v1384
        %v3941 = vunpack.c.l.b16 %v1385
        %v3942 = vunpack.c.l.b16 %v1386
        %v3943 = vunpack.c.l.b16 %v1387
        %v3944 = vunpack.c.l.b16 %v1388
        %v3945 = vunpack.c.l.b16 %v1389
        %v3946 = vunpack.c.l.b16 %v1390
        %v3947 = vunpack.c.l.b16 %v1391
        %v3948 = vunpack.c.l.b16 %v1392
        %v3949 = vunpack.c.l.b16 %v1393
        %v3950 = vunpack.c.l.b16 %v1394
        %v3951 = vunpack.c.l.b16 %v1395
        %v3952 = vunpack.c.l.b16 %v1396
        %v3953 = vunpack.c.l.b16 %v1397
        %v3954 = vunpack.c.l.b16 %v1398
        %v3955 = vunpack.c.l.b16 %v1399
        %v3956 = vunpack.c.l.b16 %v1400
        %v3957 = vunpack.c.l.b16 %v1401
        %v3958 = vunpack.c.l.b16 %v1402
        %v3959 = vunpack.c.l.b16 %v1403
        %v3960 = vunpack.c.l.b16 %v1404
        %v3961 = vunpack.c.l.b16 %v1405
        %v3962 = vunpack.c.l.b16 %v1406
        %v3963 = vunpack.c.l.b16 %v1407
        %v3964 = vunpack.c.l.b16 %v1408
        %v3965 = vunpack.c.l.b16 %v1409
        %v3966 = vunpack.c.l.b16 %v1410
        %v3967 = vunpack.c.l.b16 %v1411
        %v3968 = vunpack.c.l.b16 %v1412
        %v3969 = vunpack.c.l.b16 %v1413
        %v3970 = vunpack.c.l.b16 %v1414
        %v3971 = vunpack.c.l.b16 %v1415
        %v3972 = vunpack.c.l.b16 %v1416
        %v3973 = vunpack.c.l.b16 %v1417
        %v3974 = vunpack.c.l.b16 %v1418
        %v3975 = vunpack.c.l.b16 %v1419
        %v3976 = vunpack.c.l.b16 %v1420
        %v3977 = vunpack.c.l.b16 %v1421
        %v3978 = vunpack.c.l.b16 %v1422
        %v3979 = vunpack.c.l.b16 %v1423
        %v3980 = vunpack.c.l.b16 %v1424
        %v3981 = vunpack.c.l.b16 %v1425
        %v3982 = vunpack.c.l.b16 %v1426
        %v3983 = vunpack.c.l.b16 %v1427
        %v3984 = vunpack.c.l.b16 %v1428
        %v3985 = vunpack.c.l.b16 %v1429
        %v3986 = vunpack.c.l.b16 %v1430
        %v3987 = vunpack.c.l.b16 %v1431
        %v3988 = vunpack.c.l.b16 %v1432
        %v3989 = vunpack.c.l.b16 %v1433
        %v3990 = vunpack.c.l.b16 %v1434
        %v3991 = vunpack.c.l.b16 %v1435
        %v3992 = vunpack.c.l.b16 %v1436
        %v3993 = vunpack.c.l.b16 %v1437
        %v3994 = vunpack.c.l.b16 %v1438
        %v3995 = vunpack.c.l.b16 %v1439
        %v3996 = vunpack.c.l.b16 %v1440
        %v3997 = vunpack.c.l.b16 %v1441
        %v3998 = vunpack.c.l.b16 %v1442
        %v3999 = vunpack.c.l.b16 %v1443
        %v4000 = vunpack.c.l.b16 %v1444
        %v4001 = vunpack.c.l.b16 %v1445
        %v4002 = vunpack.c.l.b16 %v1446
        %v4003 = vunpack.c.l.b16 %v1447
        %v4004 = vunpack.c.l.b16 %v1448
        %v4005 = vunpack.c.l.b16 %v1449
        %v4006 = vunpack.c.l.b16 %v1450
        %v4007 = vunpack.c.l.b16 %v1451
        %v4008 = vunpack.c.l.b16 %v1452
        %v4009 = vunpack.c.l.b16 %v1453
        %v4010 = vunpack.c.l.b16 %v1454
        %v4011 = vunpack.c.l.b16 %v1455
        %v4012 = vunpack.c.l.b16 %v1456
        %v4013 = vunpack.c.l.b16 %v1457
        %v4014 = vunpack.c.l.b16 %v1458
        %v4015 = vunpack.c.l.b16 %v1459
        %v4016 = vunpack.c.l.b16 %v1460
        %v4017 = vunpack.c.l.b16 %v1461
        %v4018 = vunpack.c.l.b16 %v1462
        %v4019 = vunpack.c.l.b16 %v1463
        %v4020 = vunpack.c.l.b16 %v1464
        %v4021 = vunpack.c.l.b16 %v1465
        %v4022 = vunpack.c.l.b16 %v1466
        %v4023 = vunpack.c.l.b16 %v1467
        %v4024 = vunpack.c.l.b16 %v1468
        %v4025 = vunpack.c.l.b16 %v1469
        %v4026 = vunpack.c.l.b16 %v1470
        %v4027 = vunpack.c.l.b16 %v1471
        %v4028 = vunpack.c.l.b16 %v1472
        %v4029 = vunpack.c.l.b16 %v1473
        %v4030 = vunpack.c.l.b16 %v1474
        %v4031 = vunpack.c.l.b16 %v1475
        %v4032 = vunpack.c.l.b16 %v1476
        %v4033 = vunpack.c.l.b16 %v1477
        %v4034 = vunpack.c.l.b16 %v1478
        %v4035 = vunpack.c.l.b16 %v1479
        %v4036 = vunpack.c.l.b16 %v1480
        %v4037 = vunpack.c.l.b16 %v1481
        %v4038 = vunpack.c.l.b16 %v1482
        %v4039 = vunpack.c.l.b16 %v1483
        %v4040 = vunpack.c.l.b16 %v1484
        %v4041 = vunpack.c.l.b16 %v1485
        %v4042 = vunpack.c.l.b16 %v1486
        %v4043 = vunpack.c.l.b16 %v1487
        %v4044 = vunpack.c.l.b16 %v1488
        %v4045 = vunpack.c.l.b16 %v1489
        %v4046 = vunpack.c.l.b16 %v1490
        %v4047 = vunpack.c.l.b16 %v1491
        %v4048 = vunpack.c.l.b16 %v1492
        %v4049 = vunpack.c.l.b16 %v1493
        %v4050 = vunpack.c.l.b16 %v1494
        %v4051 = vunpack.c.l.b16 %v1495
        %v4052 = vunpack.c.l.b16 %v1496
        %v4053 = vunpack.c.l.b16 %v1497
        %v4054 = vunpack.c.l.b16 %v1498
        %v4055 = vunpack.c.l.b16 %v1499
        %v4056 = vunpack.c.l.b16 %v1500
        %v4057 = vunpack.c.l.b16 %v1501
        %v4058 = vunpack.c.l.b16 %v1502
        %v4059 = vunpack.c.l.b16 %v1503
        %v4060 = vunpack.c.l.b16 %v1504
        %v4061 = vunpack.c.l.b16 %v1505
        %v4062 = vunpack.c.l.b16 %v1506
        %v4063 = vunpack.c.l.b16 %v1507
        %v4064 = vunpack.c.l.b16 %v1508
        %v4065 = vunpack.c.l.b16 %v1509
        %v4066 = vunpack.c.l.b16 %v1510
        %v4067 = vunpack.c.l.b16 %v1511
        %v4068 = vunpack.c.l.b16 %v1512
        %v4069 = vunpack.c.l.b16 %v1513
        %v4070 = vunpack.c.l.b16 %v1514
        %v4071 = vunpack.c.l.b16 %v1515
        %v4072 = vunpack.c.l.b16 %v1516
        %v4073 = vunpack.c.l.b16 %v1517
        %v4074 = vunpack.c.l.b16 %v1518
        %v4075 = vunpack.c.l.b16 %v1519
        %v4076 = vunpack.c.l.b16 %v1520
        %v4077 = vunpack.c.l.b16 %v1521
        %v4078 = vunpack.c.l.b16 %v1522
        %v4079 = vunpack.c.l.b16 %v1523
        %v4080 = vunpack.c.l.b16 %v1524
        %v4081 = vunpack.c.l.b16 %v1525
        %v4082 = vunpack.c.l.b16 %v1526
        %v4083 = vunpack.c.l.b16 %v1527
        %v4084 = vunpack.c.l.b16 %v1528
        %v4085 = vunpack.c.l.b16 %v1529
        %v4086 = vunpack.c.l.b16 %v1530
        %v4087 = vunpack.c.l.b16 %v1531
        %v4088 = vunpack.c.l.b16 %v1532
        %v4089 = vunpack.c.l.b16 %v1533
        %v4090 = vunpack.c.l.b16 %v1534
        %v4091 = vunpack.c.l.b16 %v1535
        %v4092 = vunpack.c.l.b16 %v1536
        %v4093 = vunpack.c.l.b16 %v1537
        %v4094 = vunpack.c.l.b16 %v1538
        %v4095 = vunpack.c.l.b16 %v1539
        %v4096 = vunpack.c.l.b16 %v1540
        %v4097 = vunpack.c.l.b16 %v1541
        %v4098 = vunpack.c.l.b16 %v1542
        %v4099 = vunpack.c.l.b16 %v1543
        %v4100 = vunpack.c.l.b16 %v1544
        %v4101 = vunpack.c.l.b16 %v1545
        %v4102 = vunpack.c.l.b16 %v1546
        %v4103 = vunpack.c.l.b16 %v1547
        %v4104 = vunpack.c.l.b16 %v1548
        %v4105 = vunpack.c.l.b16 %v1549
        %v4106 = vunpack.c.l.b16 %v1550
        %v4107 = vunpack.c.l.b16 %v1551
        %v4108 = vunpack.c.l.b16 %v1552
        %v4109 = vunpack.c.l.b16 %v1553
        %v4110 = vunpack.c.l.b16 %v1554
        %v4111 = vunpack.c.l.b16 %v1555
        %v4112 = vunpack.c.l.b16 %v1556
        %v4113 = vunpack.c.l.b16 %v1557
        %v4114 = vunpack.c.l.b16 %v1558
        %v4115 = vunpack.c.l.b16 %v1559
        %v4116 = vunpack.c.l.b16 %v1560
        %v4117 = vunpack.c.l.b16 %v1561
        %v4118 = vunpack.c.l.b16 %v1562
        %v4119 = vunpack.c.l.b16 %v1563
        %v4120 = vunpack.c.l.b16 %v1564
        %v4121 = vunpack.c.l.b16 %v1565
        %v4122 = vunpack.c.l.b16 %v1566
        %v4123 = vunpack.c.l.b16 %v1567
        %v4124 = vunpack.c.l.b16 %v1568
        %v4125 = vunpack.c.l.b16 %v1569
        %v4126 = vunpack.c.l.b16 %v1570
        %v4127 = vunpack.c.l.b16 %v1571
        %v4128 = vunpack.c.l.b16 %v1572
        %v4129 = vpack.c.b16 %v2978, %v2977
        %v4130 = vpack.c.b16 %v2980, %v2979
        %v4131 = vpack.c.b16 %v2982, %v2981
        %v4132 = vpack.c.b16 %v2984, %v2983
        %v4133 = vpack.c.b16 %v2986, %v2985
        %v4134 = vpack.c.b16 %v2988, %v2987
        %v4135 = vpack.c.b16 %v2990, %v2989
        %v4136 = vpack.c.b16 %v2992, %v2991
        %v4137 = vpack.c.b16 %v2994, %v2993
        %v4138 = vpack.c.b16 %v2996, %v2995
        %v4139 = vpack.c.b16 %v2998, %v2997
        %v4140 = vpack.c.b16 %v3000, %v2999
        %v4141 = vpack.c.b16 %v3002, %v3001
        %v4142 = vpack.c.b16 %v3004, %v3003
        %v4143 = vpack.c.b16 %v3006, %v3005
        %v4144 = vpack.c.b16 %v3008, %v3007
        %v4145 = vpack.c.b16 %v3010, %v3009
        %v4146 = vpack.c.b16 %v3012, %v3011
        %v4147 = vpack.c.b16 %v3014, %v3013
        %v4148 = vpack.c.b16 %v3016, %v3015
        %v4149 = vpack.c.b16 %v3018, %v3017
        %v4150 = vpack.c.b16 %v3020, %v3019
        %v4151 = vpack.c.b16 %v3022, %v3021
        %v4152 = vpack.c.b16 %v3024, %v3023
        %v4153 = vpack.c.b16 %v3026, %v3025
        %v4154 = vpack.c.b16 %v3028, %v3027
        %v4155 = vpack.c.b16 %v3030, %v3029
        %v4156 = vpack.c.b16 %v3032, %v3031
        %v4157 = vpack.c.b16 %v3034, %v3033
        %v4158 = vpack.c.b16 %v3036, %v3035
        %v4159 = vpack.c.b16 %v3038, %v3037
        %v4160 = vpack.c.b16 %v3040, %v3039
        %v4161 = vpack.c.b16 %v3042, %v3041
        %v4162 = vpack.c.b16 %v3044, %v3043
        %v4163 = vpack.c.b16 %v3046, %v3045
        %v4164 = vpack.c.b16 %v3048, %v3047
        %v4165 = vpack.c.b16 %v3050, %v3049
        %v4166 = vpack.c.b16 %v3052, %v3051
        %v4167 = vpack.c.b16 %v3054, %v3053
        %v4168 = vpack.c.b16 %v3056, %v3055
        %v4169 = vpack.c.b16 %v3058, %v3057
        %v4170 = vpack.c.b16 %v3060, %v3059
        %v4171 = vpack.c.b16 %v3062, %v3061
        %v4172 = vpack.c.b16 %v3064, %v3063
        %v4173 = vpack.c.b16 %v3066, %v3065
        %v4174 = vpack.c.b16 %v3068, %v3067
        %v4175 = vpack.c.b16 %v3070, %v3069
        %v4176 = vpack.c.b16 %v3072, %v3071
        %v4177 = vpack.c.b16 %v3074, %v3073
        %v4178 = vpack.c.b16 %v3076, %v3075
        %v4179 = vpack.c.b16 %v3078, %v3077
        %v4180 = vpack.c.b16 %v3080, %v3079
        %v4181 = vpack.c.b16 %v3082, %v3081
        %v4182 = vpack.c.b16 %v3084, %v3083
        %v4183 = vpack.c.b16 %v3086, %v3085
        %v4184 = vpack.c.b16 %v3088, %v3087
        %v4185 = vpack.c.b16 %v3090, %v3089
        %v4186 = vpack.c.b16 %v3092, %v3091
        %v4187 = vpack.c.b16 %v3094, %v3093
        %v4188 = vpack.c.b16 %v3096, %v3095
        %v4189 = vpack.c.b16 %v3098, %v3097
        %v4190 = vpack.c.b16 %v3100, %v3099
        %v4191 = vpack.c.b16 %v3102, %v3101
        %v4192 = vpack.c.b16 %v3104, %v3103
        %v4193 = vpack.c.b16 %v3106, %v3105
        %v4194 = vpack.c.b16 %v3108, %v3107
        %v4195 = vpack.c.b16 %v3110, %v3109
        %v4196 = vpack.c.b16 %v3112, %v3111
        %v4197 = vpack.c.b16 %v3114, %v3113
        %v4198 = vpack.c.b16 %v3116, %v3115
        %v4199 = vpack.c.b16 %v3118, %v3117
        %v4200 = vpack.c.b16 %v3120, %v3119
        %v4201 = vpack.c.b16 %v3122, %v3121
        %v4202 = vpack.c.b16 %v3124, %v3123
        %v4203 = vpack.c.b16 %v3126, %v3125
        %v4204 = vpack.c.b16 %v3128, %v3127
        %v4205 = vpack.c.b16 %v3130, %v3129
        %v4206 = vpack.c.b16 %v3132, %v3131
        %v4207 = vpack.c.b16 %v3134, %v3133
        %v4208 = vpack.c.b16 %v3136, %v3135
        %v4209 = vpack.c.b16 %v3138, %v3137
        %v4210 = vpack.c.b16 %v3140, %v3139
        %v4211 = vpack.c.b16 %v3142, %v3141
        %v4212 = vpack.c.b16 %v3144, %v3143
        %v4213 = vpack.c.b16 %v3146, %v3145
        %v4214 = vpack.c.b16 %v3148, %v3147
        %v4215 = vpack.c.b16 %v3150, %v3149
        %v4216 = vpack.c.b16 %v3152, %v3151
        %v4217 = vpack.c.b16 %v3154, %v3153
        %v4218 = vpack.c.b16 %v3156, %v3155
        %v4219 = vpack.c.b16 %v3158, %v3157
        %v4220 = vpack.c.b16 %v3160, %v3159
        %v4221 = vpack.c.b16 %v3162, %v3161
        %v4222 = vpack.c.b16 %v3164, %v3163
        %v4223 = vpack.c.b16 %v3166, %v3165
        %v4224 = vpack.c.b16 %v3168, %v3167
        %v4225 = vpack.c.b16 %v3170, %v3169
        %v4226 = vpack.c.b16 %v3172, %v3171
        %v4227 = vpack.c.b16 %v3174, %v3173
        %v4228 = vpack.c.b16 %v3176, %v3175
        %v4229 = vpack.c.b16 %v3178, %v3177
        %v4230 = vpack.c.b16 %v3180, %v3179
        %v4231 = vpack.c.b16 %v3182, %v3181
        %v4232 = vpack.c.b16 %v3184, %v3183
        %v4233 = vpack.c.b16 %v3186, %v3185
        %v4234 = vpack.c.b16 %v3188, %v3187
        %v4235 = vpack.c.b16 %v3190, %v3189
        %v4236 = vpack.c.b16 %v3192, %v3191
        %v4237 = vpack.c.b16 %v3194, %v3193
        %v4238 = vpack.c.b16 %v3196, %v3195
        %v4239 = vpack.c.b16 %v3198, %v3197
        %v4240 = vpack.c.b16 %v3200, %v3199
        %v4241 = vpack.c.b16 %v3202, %v3201
        %v4242 = vpack.c.b16 %v3204, %v3203
        %v4243 = vpack.c.b16 %v3206, %v3205
        %v4244 = vpack.c.b16 %v3208, %v3207
        %v4245 = vpack.c.b16 %v3210, %v3209
        %v4246 = vpack.c.b16 %v3212, %v3211
        %v4247 = vpack.c.b16 %v3214, %v3213
        %v4248 = vpack.c.b16 %v3216, %v3215
        %v4249 = vpack.c.b16 %v3218, %v3217
        %v4250 = vpack.c.b16 %v3220, %v3219
        %v4251 = vpack.c.b16 %v3222, %v3221
        %v4252 = vpack.c.b16 %v3224, %v3223
        %v4253 = vpack.c.b16 %v3226, %v3225
        %v4254 = vpack.c.b16 %v3228, %v3227
        %v4255 = vpack.c.b16 %v3230, %v3229
        %v4256 = vpack.c.b16 %v3232, %v3231
        %v4257 = vpack.c.b16 %v3234, %v3233
        %v4258 = vpack.c.b16 %v3236, %v3235
        %v4259 = vpack.c.b16 %v3238, %v3237
        %v4260 = vpack.c.b16 %v3240, %v3239
        %v4261 = vpack.c.b16 %v3242, %v3241
        %v4262 = vpack.c.b16 %v3244, %v3243
        %v4263 = vpack.c.b16 %v3246, %v3245
        %v4264 = vpack.c.b16 %v3248, %v3247
        %v4265 = vpack.c.b16 %v3250, %v3249
        %v4266 = vpack.c.b16 %v3252, %v3251
        %v4267 = vpack.c.b16 %v3254, %v3253
        %v4268 = vpack.c.b16 %v3256, %v3255
        %v4269 = vpack.c.b16 %v3258, %v3257
        %v4270 = vpack.c.b16 %v3260, %v3259
        %v4271 = vpack.c.b16 %v3262, %v3261
        %v4272 = vpack.c.b16 %v3264, %v3263
        %v4273 = vpack.c.b16 %v3266, %v3265
        %v4274 = vpack.c.b16 %v3268, %v3267
        %v4275 = vpack.c.b16 %v3270, %v3269
        %v4276 = vpack.c.b16 %v3272, %v3271
        %v4277 = vpack.c.b16 %v3274, %v3273
        %v4278 = vpack.c.b16 %v3276, %v3275
        %v4279 = vpack.c.b16 %v3278, %v3277
        %v4280 = vpack.c.b16 %v3280, %v3279
        %v4281 = vpack.c.b16 %v3282, %v3281
        %v4282 = vpack.c.b16 %v3284, %v3283
        %v4283 = vpack.c.b16 %v3286, %v3285
        %v4284 = vpack.c.b16 %v3288, %v3287
        %v4285 = vpack.c.b16 %v3290, %v3289
        %v4286 = vpack.c.b16 %v3292, %v3291
        %v4287 = vpack.c.b16 %v3294, %v3293
        %v4288 = vpack.c.b16 %v3296, %v3295
        %v4289 = vpack.c.b16 %v3298, %v3297
        %v4290 = vpack.c.b16 %v3300, %v3299
        %v4291 = vpack.c.b16 %v3302, %v3301
        %v4292 = vpack.c.b16 %v3304, %v3303
        %v4293 = vpack.c.b16 %v3306, %v3305
        %v4294 = vpack.c.b16 %v3308, %v3307
        %v4295 = vpack.c.b16 %v3310, %v3309
        %v4296 = vpack.c.b16 %v3312, %v3311
        %v4297 = vpack.c.b16 %v3314, %v3313
        %v4298 = vpack.c.b16 %v3316, %v3315
        %v4299 = vpack.c.b16 %v3318, %v3317
        %v4300 = vpack.c.b16 %v3320, %v3319
        %v4301 = vpack.c.b16 %v3322, %v3321
        %v4302 = vpack.c.b16 %v3324, %v3323
        %v4303 = vpack.c.b16 %v3326, %v3325
        %v4304 = vpack.c.b16 %v3328, %v3327
        %v4305 = vpack.c.b16 %v3330, %v3329
        %v4306 = vpack.c.b16 %v3332, %v3331
        %v4307 = vpack.c.b16 %v3334, %v3333
        %v4308 = vpack.c.b16 %v3336, %v3335
        %v4309 = vpack.c.b16 %v3338, %v3337
        %v4310 = vpack.c.b16 %v3340, %v3339
        %v4311 = vpack.c.b16 %v3342, %v3341
        %v4312 = vpack.c.b16 %v3344, %v3343
        %v4313 = vpack.c.b16 %v3346, %v3345
        %v4314 = vpack.c.b16 %v3348, %v3347
        %v4315 = vpack.c.b16 %v3350, %v3349
        %v4316 = vpack.c.b16 %v3352, %v3351
        %v4317 = vpack.c.b16 %v3354, %v3353
        %v4318 = vpack.c.b16 %v3356, %v3355
        %v4319 = vpack.c.b16 %v3358, %v3357
        %v4320 = vpack.c.b16 %v3360, %v3359
        %v4321 = vpack.c.b16 %v3362, %v3361
        %v4322 = vpack.c.b16 %v3364, %v3363
        %v4323 = vpack.c.b16 %v3366, %v3365
        %v4324 = vpack.c.b16 %v3368, %v3367
        %v4325 = vpack.c.b16 %v3370, %v3369
        %v4326 = vpack.c.b16 %v3372, %v3371
        %v4327 = vpack.c.b16 %v3374, %v3373
        %v4328 = vpack.c.b16 %v3376, %v3375
        %v4329 = vpack.c.b16 %v3378, %v3377
        %v4330 = vpack.c.b16 %v3380, %v3379
        %v4331 = vpack.c.b16 %v3382, %v3381
        %v4332 = vpack.c.b16 %v3384, %v3383
        %v4333 = vpack.c.b16 %v3386, %v3385
        %v4334 = vpack.c.b16 %v3388, %v3387
        %v4335 = vpack.c.b16 %v3390, %v3389
        %v4336 = vpack.c.b16 %v3392, %v3391
        %v4337 = vpack.c.b16 %v3394, %v3393
        %v4338 = vpack.c.b16 %v3396, %v3395
        %v4339 = vpack.c.b16 %v3398, %v3397
        %v4340 = vpack.c.b16 %v3400, %v3399
        %v4341 = vpack.c.b16 %v3402, %v3401
        %v4342 = vpack.c.b16 %v3404, %v3403
        %v4343 = vpack.c.b16 %v3406, %v3405
        %v4344 = vpack.c.b16 %v3408, %v3407
        %v4345 = vpack.c.b16 %v3410, %v3409
        %v4346 = vpack.c.b16 %v3412, %v3411
        %v4347 = vpack.c.b16 %v3414, %v3413
        %v4348 = vpack.c.b16 %v3416, %v3415
        %v4349 = vpack.c.b16 %v3418, %v3417
        %v4350 = vpack.c.b16 %v3420, %v3419
        %v4351 = vpack.c.b16 %v3422, %v3421
        %v4352 = vpack.c.b16 %v3424, %v3423
        %v4353 = vpack.c.b16 %v3426, %v3425
        %v4354 = vpack.c.b16 %v3428, %v3427
        %v4355 = vpack.c.b16 %v3430, %v3429
        %v4356 = vpack.c.b16 %v3432, %v3431
        %v4357 = vpack.c.b16 %v3434, %v3433
        %v4358 = vpack.c.b16 %v3436, %v3435
        %v4359 = vpack.c.b16 %v3438, %v3437
        %v4360 = vpack.c.b16 %v3440, %v3439
        %v4361 = vpack.c.b16 %v3442, %v3441
        %v4362 = vpack.c.b16 %v3444, %v3443
        %v4363 = vpack.c.b16 %v3446, %v3445
        %v4364 = vpack.c.b16 %v3448, %v3447
        %v4365 = vpack.c.b16 %v3450, %v3449
        %v4366 = vpack.c.b16 %v3452, %v3451
        %v4367 = vpack.c.b16 %v3454, %v3453
        %v4368 = vpack.c.b16 %v3456, %v3455
        %v4369 = vpack.c.b16 %v3458, %v3457
        %v4370 = vpack.c.b16 %v3460, %v3459
        %v4371 = vpack.c.b16 %v3462, %v3461
        %v4372 = vpack.c.b16 %v3464, %v3463
        %v4373 = vpack.c.b16 %v3466, %v3465
        %v4374 = vpack.c.b16 %v3468, %v3467
        %v4375 = vpack.c.b16 %v3470, %v3469
        %v4376 = vpack.c.b16 %v3472, %v3471
        %v4377 = vpack.c.b16 %v3474, %v3473
        %v4378 = vpack.c.b16 %v3476, %v3475
        %v4379 = vpack.c.b16 %v3478, %v3477
        %v4380 = vpack.c.b16 %v3480, %v3479
        %v4381 = vpack.c.b16 %v3482, %v3481
        %v4382 = vpack.c.b16 %v3484, %v3483
        %v4383 = vpack.c.b16 %v3486, %v3485
        %v4384 = vpack.c.b16 %v3488, %v3487
        %v4385 = vpack.c.b16 %v3490, %v3489
        %v4386 = vpack.c.b16 %v3492, %v3491
        %v4387 = vpack.c.b16 %v3494, %v3493
        %v4388 = vpack.c.b16 %v3496, %v3495
        %v4389 = vpack.c.b16 %v3498, %v3497
        %v4390 = vpack.c.b16 %v3500, %v3499
        %v4391 = vpack.c.b16 %v3502, %v3501
        %v4392 = vpack.c.b16 %v3504, %v3503
        %v4393 = vpack.c.b16 %v3506, %v3505
        %v4394 = vpack.c.b16 %v3508, %v3507
        %v4395 = vpack.c.b16 %v3510, %v3509
        %v4396 = vpack.c.b16 %v3512, %v3511
        %v4397 = vpack.c.b16 %v3514, %v3513
        %v4398 = vpack.c.b16 %v3516, %v3515
        %v4399 = vpack.c.b16 %v3518, %v3517
        %v4400 = vpack.c.b16 %v3520, %v3519
        %v4401 = vpack.c.b16 %v3522, %v3521
        %v4402 = vpack.c.b16 %v3524, %v3523
        %v4403 = vpack.c.b16 %v3526, %v3525
        %v4404 = vpack.c.b16 %v3528, %v3527
        %v4405 = vpack.c.b16 %v3530, %v3529
        %v4406 = vpack.c.b16 %v3532, %v3531
        %v4407 = vpack.c.b16 %v3534, %v3533
        %v4408 = vpack.c.b16 %v3536, %v3535
        %v4409 = vpack.c.b16 %v3538, %v3537
        %v4410 = vpack.c.b16 %v3540, %v3539
        %v4411 = vpack.c.b16 %v3542, %v3541
        %v4412 = vpack.c.b16 %v3544, %v3543
        %v4413 = vpack.c.b16 %v3546, %v3545
        %v4414 = vpack.c.b16 %v3548, %v3547
        %v4415 = vpack.c.b16 %v3550, %v3549
        %v4416 = vpack.c.b16 %v3552, %v3551
        %v4417 = vpack.c.b16 %v3554, %v3553
        %v4418 = vpack.c.b16 %v3556, %v3555
        %v4419 = vpack.c.b16 %v3558, %v3557
        %v4420 = vpack.c.b16 %v3560, %v3559
        %v4421 = vpack.c.b16 %v3562, %v3561
        %v4422 = vpack.c.b16 %v3564, %v3563
        %v4423 = vpack.c.b16 %v3566, %v3565
        %v4424 = vpack.c.b16 %v3568, %v3567
        %v4425 = vpack.c.b16 %v3570, %v3569
        %v4426 = vpack.c.b16 %v3572, %v3571
        %v4427 = vpack.c.b16 %v3574, %v3573
        %v4428 = vpack.c.b16 %v3576, %v3575
        %v4429 = vpack.c.b16 %v3578, %v3577
        %v4430 = vpack.c.b16 %v3580, %v3579
        %v4431 = vpack.c.b16 %v3582, %v3581
        %v4432 = vpack.c.b16 %v3584, %v3583
        %v4433 = vpack.c.b16 %v3586, %v3585
        %v4434 = vpack.c.b16 %v3588, %v3587
        %v4435 = vpack.c.b16 %v3590, %v3589
        %v4436 = vpack.c.b16 %v3592, %v3591
        %v4437 = vpack.c.b16 %v3594, %v3593
        %v4438 = vpack.c.b16 %v3596, %v3595
        %v4439 = vpack.c.b16 %v3598, %v3597
        %v4440 = vpack.c.b16 %v3600, %v3599
        %v4441 = vpack.c.b16 %v3602, %v3601
        %v4442 = vpack.c.b16 %v3604, %v3603
        %v4443 = vpack.c.b16 %v3606, %v3605
        %v4444 = vpack.c.b16 %v3608, %v3607
        %v4445 = vpack.c.b16 %v3610, %v3609
        %v4446 = vpack.c.b16 %v3612, %v3611
        %v4447 = vpack.c.b16 %v3614, %v3613
        %v4448 = vpack.c.b16 %v3616, %v3615
        %v4449 = vpack.c.b16 %v3618, %v3617
        %v4450 = vpack.c.b16 %v3620, %v3619
        %v4451 = vpack.c.b16 %v3622, %v3621
        %v4452 = vpack.c.b16 %v3624, %v3623
        %v4453 = vpack.c.b16 %v3626, %v3625
        %v4454 = vpack.c.b16 %v3628, %v3627
        %v4455 = vpack.c.b16 %v3630, %v3629
        %v4456 = vpack.c.b16 %v3632, %v3631
        %v4457 = vpack.c.b16 %v3634, %v3633
        %v4458 = vpack.c.b16 %v3636, %v3635
        %v4459 = vpack.c.b16 %v3638, %v3637
        %v4460 = vpack.c.b16 %v3640, %v3639
        %v4461 = vpack.c.b16 %v3642, %v3641
        %v4462 = vpack.c.b16 %v3644, %v3643
        %v4463 = vpack.c.b16 %v3646, %v3645
        %v4464 = vpack.c.b16 %v3648, %v3647
        %v4465 = vpack.c.b16 %v3650, %v3649
        %v4466 = vpack.c.b16 %v3652, %v3651
        %v4467 = vpack.c.b16 %v3654, %v3653
        %v4468 = vpack.c.b16 %v3656, %v3655
        %v4469 = vpack.c.b16 %v3658, %v3657
        %v4470 = vpack.c.b16 %v3660, %v3659
        %v4471 = vpack.c.b16 %v3662, %v3661
        %v4472 = vpack.c.b16 %v3664, %v3663
        %v4473 = vpack.c.b16 %v3666, %v3665
        %v4474 = vpack.c.b16 %v3668, %v3667
        %v4475 = vpack.c.b16 %v3670, %v3669
        %v4476 = vpack.c.b16 %v3672, %v3671
        %v4477 = vpack.c.b16 %v3674, %v3673
        %v4478 = vpack.c.b16 %v3676, %v3675
        %v4479 = vpack.c.b16 %v3678, %v3677
        %v4480 = vpack.c.b16 %v3680, %v3679
        %v4481 = vpack.c.b16 %v3682, %v3681
        %v4482 = vpack.c.b16 %v3684, %v3683
        %v4483 = vpack.c.b16 %v3686, %v3685
        %v4484 = vpack.c.b16 %v3688, %v3687
        %v4485 = vpack.c.b16 %v3690, %v3689
        %v4486 = vpack.c.b16 %v3692, %v3691
        %v4487 = vpack.c.b16 %v3694, %v3693
        %v4488 = vpack.c.b16 %v3696, %v3695
        %v4489 = vpack.c.b16 %v3698, %v3697
        %v4490 = vpack.c.b16 %v3700, %v3699
        %v4491 = vpack.c.b16 %v3702, %v3701
        %v4492 = vpack.c.b16 %v3704, %v3703
        %v4493 = vpack.c.b16 %v3706, %v3705
        %v4494 = vpack.c.b16 %v3708, %v3707
        %v4495 = vpack.c.b16 %v3710, %v3709
        %v4496 = vpack.c.b16 %v3712, %v3711
        %v4497 = vpack.c.b16 %v3714, %v3713
        %v4498 = vpack.c.b16 %v3716, %v3715
        %v4499 = vpack.c.b16 %v3718, %v3717
        %v4500 = vpack.c.b16 %v3720, %v3719
        %v4501 = vpack.c.b16 %v3722, %v3721
        %v4502 = vpack.c.b16 %v3724, %v3723
        %v4503 = vpack.c.b16 %v3726, %v3725
        %v4504 = vpack.c.b16 %v3728, %v3727
        %v4505 = vpack.c.b16 %v3730, %v3729
        %v4506 = vpack.c.b16 %v3732, %v3731
        %v4507 = vpack.c.b16 %v3734, %v3733
        %v4508 = vpack.c.b16 %v3736, %v3735
        %v4509 = vpack.c.b16 %v3738, %v3737
        %v4510 = vpack.c.b16 %v3740, %v3739
        %v4511 = vpack.c.b16 %v3742, %v3741
        %v4512 = vpack.c.b16 %v3744, %v3743
        %v4513 = vpack.c.b16 %v3746, %v3745
        %v4514 = vpack.c.b16 %v3748, %v3747
        %v4515 = vpack.c.b16 %v3750, %v3749
        %v4516 = vpack.c.b16 %v3752, %v3751
        %v4517 = vpack.c.b16 %v3754, %v3753
        %v4518 = vpack.c.b16 %v3756, %v3755
        %v4519 = vpack.c.b16 %v3758, %v3757
        %v4520 = vpack.c.b16 %v3760, %v3759
        %v4521 = vpack.c.b16 %v3762, %v3761
        %v4522 = vpack.c.b16 %v3764, %v3763
        %v4523 = vpack.c.b16 %v3766, %v3765
        %v4524 = vpack.c.b16 %v3768, %v3767
        %v4525 = vpack.c.b16 %v3770, %v3769
        %v4526 = vpack.c.b16 %v3772, %v3771
        %v4527 = vpack.c.b16 %v3774, %v3773
        %v4528 = vpack.c.b16 %v3776, %v3775
        %v4529 = vpack.c.b16 %v3778, %v3777
        %v4530 = vpack.c.b16 %v3780, %v3779
        %v4531 = vpack.c.b16 %v3782, %v3781
        %v4532 = vpack.c.b16 %v3784, %v3783
        %v4533 = vpack.c.b16 %v3786, %v3785
        %v4534 = vpack.c.b16 %v3788, %v3787
        %v4535 = vpack.c.b16 %v3790, %v3789
        %v4536 = vpack.c.b16 %v3792, %v3791
        %v4537 = vpack.c.b16 %v3794, %v3793
        %v4538 = vpack.c.b16 %v3796, %v3795
        %v4539 = vpack.c.b16 %v3798, %v3797
        %v4540 = vpack.c.b16 %v3800, %v3799
        %v4541 = vpack.c.b16 %v3802, %v3801
        %v4542 = vpack.c.b16 %v3804, %v3803
        %v4543 = vpack.c.b16 %v3806, %v3805
        %v4544 = vpack.c.b16 %v3808, %v3807
        %v4545 = vpack.c.b16 %v3810, %v3809
        %v4546 = vpack.c.b16 %v3812, %v3811
        %v4547 = vpack.c.b16 %v3814, %v3813
        %v4548 = vpack.c.b16 %v3816, %v3815
        %v4549 = vpack.c.b16 %v3818, %v3817
        %v4550 = vpack.c.b16 %v3820, %v3819
        %v4551 = vpack.c.b16 %v3822, %v3821
        %v4552 = vpack.c.b16 %v3824, %v3823
        %v4553 = vpack.c.b16 %v3826, %v3825
        %v4554 = vpack.c.b16 %v3828, %v3827
        %v4555 = vpack.c.b16 %v3830, %v3829
        %v4556 = vpack.c.b16 %v3832, %v3831
        %v4557 = vpack.c.b16 %v3834, %v3833
        %v4558 = vpack.c.b16 %v3836, %v3835
        %v4559 = vpack.c.b16 %v3838, %v3837
        %v4560 = vpack.c.b16 %v3840, %v3839
        %v4561 = vpack.c.b16 %v3842, %v3841
        %v4562 = vpack.c.b16 %v3844, %v3843
        %v4563 = vpack.c.b16 %v3846, %v3845
        %v4564 = vpack.c.b16 %v3848, %v3847
        %v4565 = vpack.c.b16 %v3850, %v3849
        %v4566 = vpack.c.b16 %v3852, %v3851
        %v4567 = vpack.c.b16 %v3854, %v3853
        %v4568 = vpack.c.b16 %v3856, %v3855
        %v4569 = vpack.c.b16 %v3858, %v3857
        %v4570 = vpack.c.b16 %v3860, %v3859
        %v4571 = vpack.c.b16 %v3862, %v3861
        %v4572 = vpack.c.b16 %v3864, %v3863
        %v4573 = vpack.c.b16 %v3866, %v3865
        %v4574 = vpack.c.b16 %v3868, %v3867
        %v4575 = vpack.c.b16 %v3870, %v3869
        %v4576 = vpack.c.b16 %v3872, %v3871
        %v4577 = vpack.c.b16 %v3874, %v3873
        %v4578 = vpack.c.b16 %v3876, %v3875
        %v4579 = vpack.c.b16 %v3878, %v3877
        %v4580 = vpack.c.b16 %v3880, %v3879
        %v4581 = vpack.c.b16 %v3882, %v3881
        %v4582 = vpack.c.b16 %v3884, %v3883
        %v4583 = vpack.c.b16 %v3886, %v3885
        %v4584 = vpack.c.b16 %v3888, %v3887
        %v4585 = vpack.c.b16 %v3890, %v3889
        %v4586 = vpack.c.b16 %v3892, %v3891
        %v4587 = vpack.c.b16 %v3894, %v3893
        %v4588 = vpack.c.b16 %v3896, %v3895
        %v4589 = vpack.c.b16 %v3898, %v3897
        %v4590 = vpack.c.b16 %v3900, %v3899
        %v4591 = vpack.c.b16 %v3902, %v3901
        %v4592 = vpack.c.b16 %v3904, %v3903
        %v4593 = vpack.c.b16 %v3906, %v3905
        %v4594 = vpack.c.b16 %v3908, %v3907
        %v4595 = vpack.c.b16 %v3910, %v3909
        %v4596 = vpack.c.b16 %v3912, %v3911
        %v4597 = vpack.c.b16 %v3914, %v3913
        %v4598 = vpack.c.b16 %v3916, %v3915
        %v4599 = vpack.c.b16 %v3918, %v3917
        %v4600 = vpack.c.b16 %v3920, %v3919
        %v4601 = vpack.c.b16 %v3922, %v3921
        %v4602 = vpack.c.b16 %v3924, %v3923
        %v4603 = vpack.c.b16 %v3926, %v3925
        %v4604 = vpack.c.b16 %v3928, %v3927
        %v4605 = vpack.c.b16 %v3930, %v3929
        %v4606 = vpack.c.b16 %v3932, %v3931
        %v4607 = vpack.c.b16 %v3934, %v3933
        %v4608 = vpack.c.b16 %v3936, %v3935
        %v4609 = vpack.c.b16 %v3938, %v3937
        %v4610 = vpack.c.b16 %v3940, %v3939
        %v4611 = vpack.c.b16 %v3942, %v3941
        %v4612 = vpack.c.b16 %v3944, %v3943
        %v4613 = vpack.c.b16 %v3946, %v3945
        %v4614 = vpack.c.b16 %v3948, %v3947
        %v4615 = vpack.c.b16 %v3950, %v3949
        %v4616 = vpack.c.b16 %v3952, %v3951
        %v4617 = vpack.c.b16 %v3954, %v3953
        %v4618 = vpack.c.b16 %v3956, %v3955
        %v4619 = vpack.c.b16 %v3958, %v3957
        %v4620 = vpack.c.b16 %v3960, %v3959
        %v4621 = vpack.c.b16 %v3962, %v3961
        %v4622 = vpack.c.b16 %v3964, %v3963
        %v4623 = vpack.c.b16 %v3966, %v3965
        %v4624 = vpack.c.b16 %v3968, %v3967
        %v4625 = vpack.c.b16 %v3970, %v3969
        %v4626 = vpack.c.b16 %v3972, %v3971
        %v4627 = vpack.c.b16 %v3974, %v3973
        %v4628 = vpack.c.b16 %v3976, %v3975
        %v4629 = vpack.c.b16 %v3978, %v3977
        %v4630 = vpack.c.b16 %v3980, %v3979
        %v4631 = vpack.c.b16 %v3982, %v3981
        %v4632 = vpack.c.b16 %v3984, %v3983
        %v4633 = vpack.c.b16 %v3986, %v3985
        %v4634 = vpack.c.b16 %v3988, %v3987
        %v4635 = vpack.c.b16 %v3990, %v3989
        %v4636 = vpack.c.b16 %v3992, %v3991
        %v4637 = vpack.c.b16 %v3994, %v3993
        %v4638 = vpack.c.b16 %v3996, %v3995
        %v4639 = vpack.c.b16 %v3998, %v3997
        %v4640 = vpack.c.b16 %v4000, %v3999
        %v4641 = vpack.c.b16 %v4002, %v4001
        %v4642 = vpack.c.b16 %v4004, %v4003
        %v4643 = vpack.c.b16 %v4006, %v4005
        %v4644 = vpack.c.b16 %v4008, %v4007
        %v4645 = vpack.c.b16 %v4010, %v4009
        %v4646 = vpack.c.b16 %v4012, %v4011
        %v4647 = vpack.c.b16 %v4014, %v4013
        %v4648 = vpack.c.b16 %v4016, %v4015
        %v4649 = vpack.c.b16 %v4018, %v4017
        %v4650 = vpack.c.b16 %v4020, %v4019
        %v4651 = vpack.c.b16 %v4022, %v4021
        %v4652 = vpack.c.b16 %v4024, %v4023
        %v4653 = vpack.c.b16 %v4026, %v4025
        %v4654 = vpack.c.b16 %v4028, %v4027
        %v4655 = vpack.c.b16 %v4030, %v4029
        %v4656 = vpack.c.b16 %v4032, %v4031
        %v4657 = vpack.c.b16 %v4034, %v4033
        %v4658 = vpack.c.b16 %v4036, %v4035
        %v4659 = vpack.c.b16 %v4038, %v4037
        %v4660 = vpack.c.b16 %v4040, %v4039
        %v4661 = vpack.c.b16 %v4042, %v4041
        %v4662 = vpack.c.b16 %v4044, %v4043
        %v4663 = vpack.c.b16 %v4046, %v4045
        %v4664 = vpack.c.b16 %v4048, %v4047
        %v4665 = vpack.c.b16 %v4050, %v4049
        %v4666 = vpack.c.b16 %v4052, %v4051
        %v4667 = vpack.c.b16 %v4054, %v4053
        %v4668 = vpack.c.b16 %v4056, %v4055
        %v4669 = vpack.c.b16 %v4058, %v4057
        %v4670 = vpack.c.b16 %v4060, %v4059
        %v4671 = vpack.c.b16 %v4062, %v4061
        %v4672 = vpack.c.b16 %v4064, %v4063
        %v4673 = vpack.c.b16 %v4066, %v4065
        %v4674 = vpack.c.b16 %v4068, %v4067
        %v4675 = vpack.c.b16 %v4070, %v4069
        %v4676 = vpack.c.b16 %v4072, %v4071
        %v4677 = vpack.c.b16 %v4074, %v4073
        %v4678 = vpack.c.b16 %v4076, %v4075
        %v4679 = vpack.c.b16 %v4078, %v4077
        %v4680 = vpack.c.b16 %v4080, %v4079
        %v4681 = vpack.c.b16 %v4082, %v4081
        %v4682 = vpack.c.b16 %v4084, %v4083
        %v4683 = vpack.c.b16 %v4086, %v4085
        %v4684 = vpack.c.b16 %v4088, %v4087
        %v4685 = vpack.c.b16 %v4090, %v4089
        %v4686 = vpack.c.b16 %v4092, %v4091
        %v4687 = vpack.c.b16 %v4094, %v4093
        %v4688 = vpack.c.b16 %v4096, %v4095
        %v4689 = vpack.c.b16 %v4098, %v4097
        %v4690 = vpack.c.b16 %v4100, %v4099
        %v4691 = vpack.c.b16 %v4102, %v4101
        %v4692 = vpack.c.b16 %v4104, %v4103
        %v4693 = vpack.c.b16 %v4106, %v4105
        %v4694 = vpack.c.b16 %v4108, %v4107
        %v4695 = vpack.c.b16 %v4110, %v4109
        %v4696 = vpack.c.b16 %v4112, %v4111
        %v4697 = vpack.c.b16 %v4114, %v4113
        %v4698 = vpack.c.b16 %v4116, %v4115
        %v4699 = vpack.c.b16 %v4118, %v4117
        %v4700 = vpack.c.b16 %v4120, %v4119
        %v4701 = vpack.c.b16 %v4122, %v4121
        %v4702 = vpack.c.b16 %v4124, %v4123
        %v4703 = vpack.c.b16 %v4126, %v4125
        %v4704 = vpack.c.b16 %v4128, %v4127
        %5281 = vmatpush.bf16.msra.mxu0 %v4136
        %5282 = vmatpush.bf16.msra.mxu0 %v4135
        %5283 = vmatpush.bf16.msra.mxu0 %v4134
        %5284 = vmatpush.bf16.msra.mxu0 %v4133
        %5285 = vmatpush.bf16.msra.mxu0 %v4132
        %5286 = vmatpush.bf16.msra.mxu0 %v4131
        %5287 = vmatpush.bf16.msra.mxu0 %v4130
        %5288 = vmatpush.bf16.msra.mxu0 %v4129
        %5289 = vmatmul.bf16.gmra.mxu0 %v1681
        %v5290 = vpop.f32.mrf.mxu0
        %v5291 = vadd.f32 0.0, %v5290
        %v5292 = vpop.f32.mrf.mxu0
        %5293 = vdwg.mxu0
        %5294 = vmatpush.bf16.msra.mxu0 %v4144
        %5295 = vmatpush.bf16.msra.mxu0 %v4143
        %5296 = vmatpush.bf16.msra.mxu0 %v4142
        %5297 = vmatpush.bf16.msra.mxu0 %v4141
        %5298 = vmatpush.bf16.msra.mxu0 %v4140
        %5299 = vmatpush.bf16.msra.mxu0 %v4139
        %5300 = vmatpush.bf16.msra.mxu0 %v4138
        %5301 = vmatpush.bf16.msra.mxu0 %v4137
        %5302 = vmatmul.bf16.gmra.mxu0 %v1682
        %v5303 = vpop.f32.mrf.mxu0
        %v5304 = vadd.f32 %v5291, %v5303
        %v5305 = vpop.f32.mrf.mxu0
        %5306 = vdwg.mxu0
        %5307 = vmatpush.bf16.msra.mxu0 %v4152
        %5308 = vmatpush.bf16.msra.mxu0 %v4151
        %5309 = vmatpush.bf16.msra.mxu0 %v4150
        %5310 = vmatpush.bf16.msra.mxu0 %v4149
        %5311 = vmatpush.bf16.msra.mxu0 %v4148
        %5312 = vmatpush.bf16.msra.mxu0 %v4147
        %5313 = vmatpush.bf16.msra.mxu0 %v4146
        %5314 = vmatpush.bf16.msra.mxu0 %v4145
        %5315 = vmatmul.bf16.gmra.mxu0 %v1683
        %v5316 = vpop.f32.mrf.mxu0
        %v5317 = vadd.f32 %v5304, %v5316
        %v5318 = vpop.f32.mrf.mxu0
        %5319 = vdwg.mxu0
        %5320 = vmatpush.bf16.msra.mxu0 %v4160
        %5321 = vmatpush.bf16.msra.mxu0 %v4159
        %5322 = vmatpush.bf16.msra.mxu0 %v4158
        %5323 = vmatpush.bf16.msra.mxu0 %v4157
        %5324 = vmatpush.bf16.msra.mxu0 %v4156
        %5325 = vmatpush.bf16.msra.mxu0 %v4155
        %5326 = vmatpush.bf16.msra.mxu0 %v4154
        %5327 = vmatpush.bf16.msra.mxu0 %v4153
        %5328 = vmatmul.bf16.gmra.mxu0 %v1684
        %v5329 = vpop.f32.mrf.mxu0
        %v5330 = vadd.f32 %v5317, %v5329
        %v5331 = vpop.f32.mrf.mxu0
        %5332 = vdwg.mxu0
        %5333 = vmatpush.bf16.msra.mxu0 %v4168
        %5334 = vmatpush.bf16.msra.mxu0 %v4167
        %5335 = vmatpush.bf16.msra.mxu0 %v4166
        %5336 = vmatpush.bf16.msra.mxu0 %v4165
        %5337 = vmatpush.bf16.msra.mxu0 %v4164
        %5338 = vmatpush.bf16.msra.mxu0 %v4163
        %5339 = vmatpush.bf16.msra.mxu0 %v4162
        %5340 = vmatpush.bf16.msra.mxu0 %v4161
        %5341 = vmatmul.bf16.gmra.mxu0 %v1685
        %v5342 = vpop.f32.mrf.mxu0
        %v5343 = vadd.f32 %v5330, %v5342
        %v5344 = vpop.f32.mrf.mxu0
        %5345 = vdwg.mxu0
        %5346 = vmatpush.bf16.msra.mxu0 %v4176
        %5347 = vmatpush.bf16.msra.mxu0 %v4175
        %5348 = vmatpush.bf16.msra.mxu0 %v4174
        %5349 = vmatpush.bf16.msra.mxu0 %v4173
        %5350 = vmatpush.bf16.msra.mxu0 %v4172
        %5351 = vmatpush.bf16.msra.mxu0 %v4171
        %5352 = vmatpush.bf16.msra.mxu0 %v4170
        %5353 = vmatpush.bf16.msra.mxu0 %v4169
        %5354 = vmatmul.bf16.gmra.mxu0 %v1686
        %v5355 = vpop.f32.mrf.mxu0
        %v5356 = vadd.f32 %v5343, %v5355
        %v5357 = vpop.f32.mrf.mxu0
        %5358 = vdwg.mxu0
        %5359 = vmatpush.bf16.msra.mxu0 %v4184
        %5360 = vmatpush.bf16.msra.mxu0 %v4183
        %5361 = vmatpush.bf16.msra.mxu0 %v4182
        %5362 = vmatpush.bf16.msra.mxu0 %v4181
        %5363 = vmatpush.bf16.msra.mxu0 %v4180
        %5364 = vmatpush.bf16.msra.mxu0 %v4179
        %5365 = vmatpush.bf16.msra.mxu0 %v4178
        %5366 = vmatpush.bf16.msra.mxu0 %v4177
        %5367 = vmatmul.bf16.gmra.mxu0 %v1687
        %v5368 = vpop.f32.mrf.mxu0
        %v5369 = vadd.f32 %v5356, %v5368
        %v5370 = vpop.f32.mrf.mxu0
        %5371 = vdwg.mxu0
        %5372 = vmatpush.bf16.msra.mxu0 %v4192
        %5373 = vmatpush.bf16.msra.mxu0 %v4191
        %5374 = vmatpush.bf16.msra.mxu0 %v4190
        %5375 = vmatpush.bf16.msra.mxu0 %v4189
        %5376 = vmatpush.bf16.msra.mxu0 %v4188
        %5377 = vmatpush.bf16.msra.mxu0 %v4187
        %5378 = vmatpush.bf16.msra.mxu0 %v4186
        %5379 = vmatpush.bf16.msra.mxu0 %v4185
        %5380 = vmatmul.bf16.gmra.mxu0 %v1688
        %v5381 = vpop.f32.mrf.mxu0
        %v5382 = vadd.f32 %v5369, %v5381
        %v5383 = vpop.f32.mrf.mxu0
        %5384 = vdwg.mxu0
        %5385 = vmatpush.bf16.msra.mxu0 %v4200
        %5386 = vmatpush.bf16.msra.mxu0 %v4199
        %5387 = vmatpush.bf16.msra.mxu0 %v4198
        %5388 = vmatpush.bf16.msra.mxu0 %v4197
        %5389 = vmatpush.bf16.msra.mxu0 %v4196
        %5390 = vmatpush.bf16.msra.mxu0 %v4195
        %5391 = vmatpush.bf16.msra.mxu0 %v4194
        %5392 = vmatpush.bf16.msra.mxu0 %v4193
        %5393 = vmatmul.bf16.gmra.mxu0 %v1689
        %v5394 = vpop.f32.mrf.mxu0
        %v5395 = vadd.f32 %v5382, %v5394
        %v5396 = vpop.f32.mrf.mxu0
        %5397 = vdwg.mxu0
        %5398 = vmatpush.bf16.msra.mxu0 %v4208
        %5399 = vmatpush.bf16.msra.mxu0 %v4207
        %5400 = vmatpush.bf16.msra.mxu0 %v4206
        %5401 = vmatpush.bf16.msra.mxu0 %v4205
        %5402 = vmatpush.bf16.msra.mxu0 %v4204
        %5403 = vmatpush.bf16.msra.mxu0 %v4203
        %5404 = vmatpush.bf16.msra.mxu0 %v4202
        %5405 = vmatpush.bf16.msra.mxu0 %v4201
        %5406 = vmatmul.bf16.gmra.mxu0 %v1690
        %v5407 = vpop.f32.mrf.mxu0
        %v5408 = vadd.f32 %v5395, %v5407
        %v5409 = vpop.f32.mrf.mxu0
        %5410 = vdwg.mxu0
        %5411 = vmatpush.bf16.msra.mxu0 %v4216
        %5412 = vmatpush.bf16.msra.mxu0 %v4215
        %5413 = vmatpush.bf16.msra.mxu0 %v4214
        %5414 = vmatpush.bf16.msra.mxu0 %v4213
        %5415 = vmatpush.bf16.msra.mxu0 %v4212
        %5416 = vmatpush.bf16.msra.mxu0 %v4211
        %5417 = vmatpush.bf16.msra.mxu0 %v4210
        %5418 = vmatpush.bf16.msra.mxu0 %v4209
        %5419 = vmatmul.bf16.gmra.mxu0 %v1691
        %v5420 = vpop.f32.mrf.mxu0
        %v5421 = vadd.f32 %v5408, %v5420
        %v5422 = vpop.f32.mrf.mxu0
        %5423 = vdwg.mxu0
        %5424 = vmatpush.bf16.msra.mxu0 %v4224
        %5425 = vmatpush.bf16.msra.mxu0 %v4223
        %5426 = vmatpush.bf16.msra.mxu0 %v4222
        %5427 = vmatpush.bf16.msra.mxu0 %v4221
        %5428 = vmatpush.bf16.msra.mxu0 %v4220
        %5429 = vmatpush.bf16.msra.mxu0 %v4219
        %5430 = vmatpush.bf16.msra.mxu0 %v4218
        %5431 = vmatpush.bf16.msra.mxu0 %v4217
        %5432 = vmatmul.bf16.gmra.mxu0 %v1692
        %v5433 = vpop.f32.mrf.mxu0
        %v5434 = vadd.f32 %v5421, %v5433
        %v5435 = vpop.f32.mrf.mxu0
        %5436 = vdwg.mxu0
        %5437 = vmatpush.bf16.msra.mxu0 %v4232
        %5438 = vmatpush.bf16.msra.mxu0 %v4231
        %5439 = vmatpush.bf16.msra.mxu0 %v4230
        %5440 = vmatpush.bf16.msra.mxu0 %v4229
        %5441 = vmatpush.bf16.msra.mxu0 %v4228
        %5442 = vmatpush.bf16.msra.mxu0 %v4227
        %5443 = vmatpush.bf16.msra.mxu0 %v4226
        %5444 = vmatpush.bf16.msra.mxu0 %v4225
        %5445 = vmatmul.bf16.gmra.mxu0 %v1693
        %v5446 = vpop.f32.mrf.mxu0
        %v5447 = vadd.f32 %v5434, %v5446
        %v5448 = vpop.f32.mrf.mxu0
        %5449 = vdwg.mxu0
        %5450 = vmatpush.bf16.msra.mxu0 %v4240
        %5451 = vmatpush.bf16.msra.mxu0 %v4239
        %5452 = vmatpush.bf16.msra.mxu0 %v4238
        %5453 = vmatpush.bf16.msra.mxu0 %v4237
        %5454 = vmatpush.bf16.msra.mxu0 %v4236
        %5455 = vmatpush.bf16.msra.mxu0 %v4235
        %5456 = vmatpush.bf16.msra.mxu0 %v4234
        %5457 = vmatpush.bf16.msra.mxu0 %v4233
        %5458 = vmatmul.bf16.gmra.mxu0 %v1694
        %v5459 = vpop.f32.mrf.mxu0
        %v5460 = vadd.f32 %v5447, %v5459
        %v5461 = vpop.f32.mrf.mxu0
        %5462 = vdwg.mxu0
        %5463 = vmatpush.bf16.msra.mxu0 %v4248
        %5464 = vmatpush.bf16.msra.mxu0 %v4247
        %5465 = vmatpush.bf16.msra.mxu0 %v4246
        %5466 = vmatpush.bf16.msra.mxu0 %v4245
        %5467 = vmatpush.bf16.msra.mxu0 %v4244
        %5468 = vmatpush.bf16.msra.mxu0 %v4243
        %5469 = vmatpush.bf16.msra.mxu0 %v4242
        %5470 = vmatpush.bf16.msra.mxu0 %v4241
        %5471 = vmatmul.bf16.gmra.mxu0 %v1695
        %v5472 = vpop.f32.mrf.mxu0
        %v5473 = vadd.f32 %v5460, %v5472
        %v5474 = vpop.f32.mrf.mxu0
        %5475 = vdwg.mxu0
        %5476 = vmatpush.bf16.msra.mxu0 %v4256
        %5477 = vmatpush.bf16.msra.mxu0 %v4255
        %5478 = vmatpush.bf16.msra.mxu0 %v4254
        %5479 = vmatpush.bf16.msra.mxu0 %v4253
        %5480 = vmatpush.bf16.msra.mxu0 %v4252
        %5481 = vmatpush.bf16.msra.mxu0 %v4251
        %5482 = vmatpush.bf16.msra.mxu0 %v4250
        %5483 = vmatpush.bf16.msra.mxu0 %v4249
        %5484 = vmatmul.bf16.gmra.mxu0 %v1696
        %v5485 = vpop.f32.mrf.mxu0
        %v5486 = vadd.f32 %v5473, %v5485
        %v5487 = vpop.f32.mrf.mxu0
        %5488 = vdwg.mxu0
        %5489 = vmatpush.bf16.msra.mxu0 %v4264
        %5490 = vmatpush.bf16.msra.mxu0 %v4263
        %5491 = vmatpush.bf16.msra.mxu0 %v4262
        %5492 = vmatpush.bf16.msra.mxu0 %v4261
        %5493 = vmatpush.bf16.msra.mxu0 %v4260
        %5494 = vmatpush.bf16.msra.mxu0 %v4259
        %5495 = vmatpush.bf16.msra.mxu0 %v4258
        %5496 = vmatpush.bf16.msra.mxu0 %v4257
        %5497 = vmatmul.bf16.gmra.mxu0 %v1697
        %v5498 = vpop.f32.mrf.mxu0
        %v5499 = vadd.f32 %v5486, %v5498
        %v5500 = vpop.f32.mrf.mxu0
        %5501 = vdwg.mxu0
        %5502 = vmatpush.bf16.msra.mxu0 %v4272
        %5503 = vmatpush.bf16.msra.mxu0 %v4271
        %5504 = vmatpush.bf16.msra.mxu0 %v4270
        %5505 = vmatpush.bf16.msra.mxu0 %v4269
        %5506 = vmatpush.bf16.msra.mxu0 %v4268
        %5507 = vmatpush.bf16.msra.mxu0 %v4267
        %5508 = vmatpush.bf16.msra.mxu0 %v4266
        %5509 = vmatpush.bf16.msra.mxu0 %v4265
        %5510 = vmatmul.bf16.gmra.mxu0 %v1698
        %v5511 = vpop.f32.mrf.mxu0
        %v5512 = vadd.f32 %v5499, %v5511
        %v5513 = vpop.f32.mrf.mxu0
        %5514 = vdwg.mxu0
        %5515 = vmatpush.bf16.msra.mxu0 %v4280
        %5516 = vmatpush.bf16.msra.mxu0 %v4279
        %5517 = vmatpush.bf16.msra.mxu0 %v4278
        %5518 = vmatpush.bf16.msra.mxu0 %v4277
        %5519 = vmatpush.bf16.msra.mxu0 %v4276
        %5520 = vmatpush.bf16.msra.mxu0 %v4275
        %5521 = vmatpush.bf16.msra.mxu0 %v4274
        %5522 = vmatpush.bf16.msra.mxu0 %v4273
        %5523 = vmatmul.bf16.gmra.mxu0 %v1699
        %v5524 = vpop.f32.mrf.mxu0
        %v5525 = vadd.f32 %v5512, %v5524
        %v5526 = vpop.f32.mrf.mxu0
        %5527 = vdwg.mxu0
        %5528 = vmatpush.bf16.msra.mxu0 %v4288
        %5529 = vmatpush.bf16.msra.mxu0 %v4287
        %5530 = vmatpush.bf16.msra.mxu0 %v4286
        %5531 = vmatpush.bf16.msra.mxu0 %v4285
        %5532 = vmatpush.bf16.msra.mxu0 %v4284
        %5533 = vmatpush.bf16.msra.mxu0 %v4283
        %5534 = vmatpush.bf16.msra.mxu0 %v4282
        %5535 = vmatpush.bf16.msra.mxu0 %v4281
        %5536 = vmatmul.bf16.gmra.mxu0 %v1700
        %v5537 = vpop.f32.mrf.mxu0
        %v5538 = vadd.f32 %v5525, %v5537
        %v5539 = vpop.f32.mrf.mxu0
        %5540 = vdwg.mxu0
        %5541 = vmatpush.bf16.msra.mxu0 %v4296
        %5542 = vmatpush.bf16.msra.mxu0 %v4295
        %5543 = vmatpush.bf16.msra.mxu0 %v4294
        %5544 = vmatpush.bf16.msra.mxu0 %v4293
        %5545 = vmatpush.bf16.msra.mxu0 %v4292
        %5546 = vmatpush.bf16.msra.mxu0 %v4291
        %5547 = vmatpush.bf16.msra.mxu0 %v4290
        %5548 = vmatpush.bf16.msra.mxu0 %v4289
        %5549 = vmatmul.bf16.gmra.mxu0 %v1701
        %v5550 = vpop.f32.mrf.mxu0
        %v5551 = vadd.f32 %v5538, %v5550
        %v5552 = vpop.f32.mrf.mxu0
        %5553 = vdwg.mxu0
        %5554 = vmatpush.bf16.msra.mxu0 %v4304
        %5555 = vmatpush.bf16.msra.mxu0 %v4303
        %5556 = vmatpush.bf16.msra.mxu0 %v4302
        %5557 = vmatpush.bf16.msra.mxu0 %v4301
        %5558 = vmatpush.bf16.msra.mxu0 %v4300
        %5559 = vmatpush.bf16.msra.mxu0 %v4299
        %5560 = vmatpush.bf16.msra.mxu0 %v4298
        %5561 = vmatpush.bf16.msra.mxu0 %v4297
        %5562 = vmatmul.bf16.gmra.mxu0 %v1702
        %v5563 = vpop.f32.mrf.mxu0
        %v5564 = vadd.f32 %v5551, %v5563
        %v5565 = vpop.f32.mrf.mxu0
        %5566 = vdwg.mxu0
        %5567 = vmatpush.bf16.msra.mxu0 %v4312
        %5568 = vmatpush.bf16.msra.mxu0 %v4311
        %5569 = vmatpush.bf16.msra.mxu0 %v4310
        %5570 = vmatpush.bf16.msra.mxu0 %v4309
        %5571 = vmatpush.bf16.msra.mxu0 %v4308
        %5572 = vmatpush.bf16.msra.mxu0 %v4307
        %5573 = vmatpush.bf16.msra.mxu0 %v4306
        %5574 = vmatpush.bf16.msra.mxu0 %v4305
        %5575 = vmatmul.bf16.gmra.mxu0 %v1703
        %v5576 = vpop.f32.mrf.mxu0
        %v5577 = vadd.f32 %v5564, %v5576
        %v5578 = vpop.f32.mrf.mxu0
        %5579 = vdwg.mxu0
        %5580 = vmatpush.bf16.msra.mxu0 %v4320
        %5581 = vmatpush.bf16.msra.mxu0 %v4319
        %5582 = vmatpush.bf16.msra.mxu0 %v4318
        %5583 = vmatpush.bf16.msra.mxu0 %v4317
        %5584 = vmatpush.bf16.msra.mxu0 %v4316
        %5585 = vmatpush.bf16.msra.mxu0 %v4315
        %5586 = vmatpush.bf16.msra.mxu0 %v4314
        %5587 = vmatpush.bf16.msra.mxu0 %v4313
        %5588 = vmatmul.bf16.gmra.mxu0 %v1704
        %v5589 = vpop.f32.mrf.mxu0
        %v5590 = vadd.f32 %v5577, %v5589
        %v5591 = vpop.f32.mrf.mxu0
        %5592 = vdwg.mxu0
        %5593 = vmatpush.bf16.msra.mxu0 %v4328
        %5594 = vmatpush.bf16.msra.mxu0 %v4327
        %5595 = vmatpush.bf16.msra.mxu0 %v4326
        %5596 = vmatpush.bf16.msra.mxu0 %v4325
        %5597 = vmatpush.bf16.msra.mxu0 %v4324
        %5598 = vmatpush.bf16.msra.mxu0 %v4323
        %5599 = vmatpush.bf16.msra.mxu0 %v4322
        %5600 = vmatpush.bf16.msra.mxu0 %v4321
        %5601 = vmatmul.bf16.gmra.mxu0 %v1705
        %v5602 = vpop.f32.mrf.mxu0
        %v5603 = vadd.f32 %v5590, %v5602
        %v5604 = vpop.f32.mrf.mxu0
        %5605 = vdwg.mxu0
        %5606 = vmatpush.bf16.msra.mxu0 %v4336
        %5607 = vmatpush.bf16.msra.mxu0 %v4335
        %5608 = vmatpush.bf16.msra.mxu0 %v4334
        %5609 = vmatpush.bf16.msra.mxu0 %v4333
        %5610 = vmatpush.bf16.msra.mxu0 %v4332
        %5611 = vmatpush.bf16.msra.mxu0 %v4331
        %5612 = vmatpush.bf16.msra.mxu0 %v4330
        %5613 = vmatpush.bf16.msra.mxu0 %v4329
        %5614 = vmatmul.bf16.gmra.mxu0 %v1706
        %v5615 = vpop.f32.mrf.mxu0
        %v5616 = vadd.f32 %v5603, %v5615
        %v5617 = vpop.f32.mrf.mxu0
        %5618 = vdwg.mxu0
        %5619 = vmatpush.bf16.msra.mxu0 %v4344
        %5620 = vmatpush.bf16.msra.mxu0 %v4343
        %5621 = vmatpush.bf16.msra.mxu0 %v4342
        %5622 = vmatpush.bf16.msra.mxu0 %v4341
        %5623 = vmatpush.bf16.msra.mxu0 %v4340
        %5624 = vmatpush.bf16.msra.mxu0 %v4339
        %5625 = vmatpush.bf16.msra.mxu0 %v4338
        %5626 = vmatpush.bf16.msra.mxu0 %v4337
        %5627 = vmatmul.bf16.gmra.mxu0 %v1707
        %v5628 = vpop.f32.mrf.mxu0
        %v5629 = vadd.f32 %v5616, %v5628
        %v5630 = vpop.f32.mrf.mxu0
        %5631 = vdwg.mxu0
        %5632 = vmatpush.bf16.msra.mxu0 %v4352
        %5633 = vmatpush.bf16.msra.mxu0 %v4351
        %5634 = vmatpush.bf16.msra.mxu0 %v4350
        %5635 = vmatpush.bf16.msra.mxu0 %v4349
        %5636 = vmatpush.bf16.msra.mxu0 %v4348
        %5637 = vmatpush.bf16.msra.mxu0 %v4347
        %5638 = vmatpush.bf16.msra.mxu0 %v4346
        %5639 = vmatpush.bf16.msra.mxu0 %v4345
        %5640 = vmatmul.bf16.gmra.mxu0 %v1708
        %v5641 = vpop.f32.mrf.mxu0
        %v5642 = vadd.f32 %v5629, %v5641
        %v5643 = vpop.f32.mrf.mxu0
        %5644 = vdwg.mxu0
        %5645 = vmatpush.bf16.msra.mxu0 %v4360
        %5646 = vmatpush.bf16.msra.mxu0 %v4359
        %5647 = vmatpush.bf16.msra.mxu0 %v4358
        %5648 = vmatpush.bf16.msra.mxu0 %v4357
        %5649 = vmatpush.bf16.msra.mxu0 %v4356
        %5650 = vmatpush.bf16.msra.mxu0 %v4355
        %5651 = vmatpush.bf16.msra.mxu0 %v4354
        %5652 = vmatpush.bf16.msra.mxu0 %v4353
        %5653 = vmatmul.bf16.gmra.mxu0 %v1709
        %v5654 = vpop.f32.mrf.mxu0
        %v5655 = vadd.f32 %v5642, %v5654
        %v5656 = vpop.f32.mrf.mxu0
        %5657 = vdwg.mxu0
        %5658 = vmatpush.bf16.msra.mxu0 %v4368
        %5659 = vmatpush.bf16.msra.mxu0 %v4367
        %5660 = vmatpush.bf16.msra.mxu0 %v4366
        %5661 = vmatpush.bf16.msra.mxu0 %v4365
        %5662 = vmatpush.bf16.msra.mxu0 %v4364
        %5663 = vmatpush.bf16.msra.mxu0 %v4363
        %5664 = vmatpush.bf16.msra.mxu0 %v4362
        %5665 = vmatpush.bf16.msra.mxu0 %v4361
        %5666 = vmatmul.bf16.gmra.mxu0 %v1710
        %v5667 = vpop.f32.mrf.mxu0
        %v5668 = vadd.f32 %v5655, %v5667
        %v5669 = vpop.f32.mrf.mxu0
        %5670 = vdwg.mxu0
        %5671 = vmatpush.bf16.msra.mxu0 %v4376
        %5672 = vmatpush.bf16.msra.mxu0 %v4375
        %5673 = vmatpush.bf16.msra.mxu0 %v4374
        %5674 = vmatpush.bf16.msra.mxu0 %v4373
        %5675 = vmatpush.bf16.msra.mxu0 %v4372
        %5676 = vmatpush.bf16.msra.mxu0 %v4371
        %5677 = vmatpush.bf16.msra.mxu0 %v4370
        %5678 = vmatpush.bf16.msra.mxu0 %v4369
        %5679 = vmatmul.bf16.gmra.mxu0 %v1711
        %v5680 = vpop.f32.mrf.mxu0
        %v5681 = vadd.f32 %v5668, %v5680
        %v5682 = vpop.f32.mrf.mxu0
        %5683 = vdwg.mxu0
        %5684 = vmatpush.bf16.msra.mxu0 %v4384
        %5685 = vmatpush.bf16.msra.mxu0 %v4383
        %5686 = vmatpush.bf16.msra.mxu0 %v4382
        %5687 = vmatpush.bf16.msra.mxu0 %v4381
        %5688 = vmatpush.bf16.msra.mxu0 %v4380
        %5689 = vmatpush.bf16.msra.mxu0 %v4379
        %5690 = vmatpush.bf16.msra.mxu0 %v4378
        %5691 = vmatpush.bf16.msra.mxu0 %v4377
        %5692 = vmatmul.bf16.gmra.mxu0 %v1712
        %v5693 = vpop.f32.mrf.mxu0
        %v5694 = vadd.f32 %v5681, %v5693
        %v5695 = vpop.f32.mrf.mxu0
        %5696 = vdwg.mxu0
        %5697 = vmatpush.bf16.msra.mxu0 %v4392
        %5698 = vmatpush.bf16.msra.mxu0 %v4391
        %5699 = vmatpush.bf16.msra.mxu0 %v4390
        %5700 = vmatpush.bf16.msra.mxu0 %v4389
        %5701 = vmatpush.bf16.msra.mxu0 %v4388
        %5702 = vmatpush.bf16.msra.mxu0 %v4387
        %5703 = vmatpush.bf16.msra.mxu0 %v4386
        %5704 = vmatpush.bf16.msra.mxu0 %v4385
        %5705 = vmatmul.bf16.gmra.mxu0 %v1713
        %v5706 = vpop.f32.mrf.mxu0
        %v5707 = vadd.f32 %v5694, %v5706
        %v5708 = vpop.f32.mrf.mxu0
        %5709 = vdwg.mxu0
        %5710 = vmatpush.bf16.msra.mxu0 %v4400
        %5711 = vmatpush.bf16.msra.mxu0 %v4399
        %5712 = vmatpush.bf16.msra.mxu0 %v4398
        %5713 = vmatpush.bf16.msra.mxu0 %v4397
        %5714 = vmatpush.bf16.msra.mxu0 %v4396
        %5715 = vmatpush.bf16.msra.mxu0 %v4395
        %5716 = vmatpush.bf16.msra.mxu0 %v4394
        %5717 = vmatpush.bf16.msra.mxu0 %v4393
        %5718 = vmatmul.bf16.gmra.mxu0 %v1714
        %v5719 = vpop.f32.mrf.mxu0
        %v5720 = vadd.f32 %v5707, %v5719
        %v5721 = vpop.f32.mrf.mxu0
        %5722 = vdwg.mxu0
        %5723 = vmatpush.bf16.msra.mxu0 %v4408
        %5724 = vmatpush.bf16.msra.mxu0 %v4407
        %5725 = vmatpush.bf16.msra.mxu0 %v4406
        %5726 = vmatpush.bf16.msra.mxu0 %v4405
        %5727 = vmatpush.bf16.msra.mxu0 %v4404
        %5728 = vmatpush.bf16.msra.mxu0 %v4403
        %5729 = vmatpush.bf16.msra.mxu0 %v4402
        %5730 = vmatpush.bf16.msra.mxu0 %v4401
        %5731 = vmatmul.bf16.gmra.mxu0 %v1715
        %v5732 = vpop.f32.mrf.mxu0
        %v5733 = vadd.f32 %v5720, %v5732
        %v5734 = vpop.f32.mrf.mxu0
        %5735 = vdwg.mxu0
        %5736 = vmatpush.bf16.msra.mxu0 %v4416
        %5737 = vmatpush.bf16.msra.mxu0 %v4415
        %5738 = vmatpush.bf16.msra.mxu0 %v4414
        %5739 = vmatpush.bf16.msra.mxu0 %v4413
        %5740 = vmatpush.bf16.msra.mxu0 %v4412
        %5741 = vmatpush.bf16.msra.mxu0 %v4411
        %5742 = vmatpush.bf16.msra.mxu0 %v4410
        %5743 = vmatpush.bf16.msra.mxu0 %v4409
        %5744 = vmatmul.bf16.gmra.mxu0 %v1716
        %v5745 = vpop.f32.mrf.mxu0
        %v5746 = vadd.f32 %v5733, %v5745
        %v5747 = vpop.f32.mrf.mxu0
        %5748 = vdwg.mxu0
        %5749 = vmatpush.bf16.msra.mxu0 %v4424
        %5750 = vmatpush.bf16.msra.mxu0 %v4423
        %5751 = vmatpush.bf16.msra.mxu0 %v4422
        %5752 = vmatpush.bf16.msra.mxu0 %v4421
        %5753 = vmatpush.bf16.msra.mxu0 %v4420
        %5754 = vmatpush.bf16.msra.mxu0 %v4419
        %5755 = vmatpush.bf16.msra.mxu0 %v4418
        %5756 = vmatpush.bf16.msra.mxu0 %v4417
        %5757 = vmatmul.bf16.gmra.mxu0 %v1717
        %v5758 = vpop.f32.mrf.mxu0
        %v5759 = vadd.f32 %v5746, %v5758
        %v5760 = vpop.f32.mrf.mxu0
        %5761 = vdwg.mxu0
        %5762 = vmatpush.bf16.msra.mxu0 %v4432
        %5763 = vmatpush.bf16.msra.mxu0 %v4431
        %5764 = vmatpush.bf16.msra.mxu0 %v4430
        %5765 = vmatpush.bf16.msra.mxu0 %v4429
        %5766 = vmatpush.bf16.msra.mxu0 %v4428
        %5767 = vmatpush.bf16.msra.mxu0 %v4427
        %5768 = vmatpush.bf16.msra.mxu0 %v4426
        %5769 = vmatpush.bf16.msra.mxu0 %v4425
        %5770 = vmatmul.bf16.gmra.mxu0 %v1718
        %v5771 = vpop.f32.mrf.mxu0
        %v5772 = vadd.f32 %v5759, %v5771
        %v5773 = vpop.f32.mrf.mxu0
        %5774 = vdwg.mxu0
        %5775 = vmatpush.bf16.msra.mxu0 %v4440
        %5776 = vmatpush.bf16.msra.mxu0 %v4439
        %5777 = vmatpush.bf16.msra.mxu0 %v4438
        %5778 = vmatpush.bf16.msra.mxu0 %v4437
        %5779 = vmatpush.bf16.msra.mxu0 %v4436
        %5780 = vmatpush.bf16.msra.mxu0 %v4435
        %5781 = vmatpush.bf16.msra.mxu0 %v4434
        %5782 = vmatpush.bf16.msra.mxu0 %v4433
        %5783 = vmatmul.bf16.gmra.mxu0 %v1719
        %v5784 = vpop.f32.mrf.mxu0
        %v5785 = vadd.f32 %v5772, %v5784
        %v5786 = vpop.f32.mrf.mxu0
        %5787 = vdwg.mxu0
        %5788 = vmatpush.bf16.msra.mxu0 %v4448
        %5789 = vmatpush.bf16.msra.mxu0 %v4447
        %5790 = vmatpush.bf16.msra.mxu0 %v4446
        %5791 = vmatpush.bf16.msra.mxu0 %v4445
        %5792 = vmatpush.bf16.msra.mxu0 %v4444
        %5793 = vmatpush.bf16.msra.mxu0 %v4443
        %5794 = vmatpush.bf16.msra.mxu0 %v4442
        %5795 = vmatpush.bf16.msra.mxu0 %v4441
        %5796 = vmatmul.bf16.gmra.mxu0 %v1720
        %v5797 = vpop.f32.mrf.mxu0
        %v5798 = vadd.f32 %v5785, %v5797
        %v5799 = vpop.f32.mrf.mxu0
        %5800 = vdwg.mxu0
        %5801 = vmatpush.bf16.msra.mxu0 %v4456
        %5802 = vmatpush.bf16.msra.mxu0 %v4455
        %5803 = vmatpush.bf16.msra.mxu0 %v4454
        %5804 = vmatpush.bf16.msra.mxu0 %v4453
        %5805 = vmatpush.bf16.msra.mxu0 %v4452
        %5806 = vmatpush.bf16.msra.mxu0 %v4451
        %5807 = vmatpush.bf16.msra.mxu0 %v4450
        %5808 = vmatpush.bf16.msra.mxu0 %v4449
        %5809 = vmatmul.bf16.gmra.mxu0 %v1721
        %v5810 = vpop.f32.mrf.mxu0
        %v5811 = vadd.f32 %v5798, %v5810
        %v5812 = vpop.f32.mrf.mxu0
        %5813 = vdwg.mxu0
        %5814 = vmatpush.bf16.msra.mxu0 %v4464
        %5815 = vmatpush.bf16.msra.mxu0 %v4463
        %5816 = vmatpush.bf16.msra.mxu0 %v4462
        %5817 = vmatpush.bf16.msra.mxu0 %v4461
        %5818 = vmatpush.bf16.msra.mxu0 %v4460
        %5819 = vmatpush.bf16.msra.mxu0 %v4459
        %5820 = vmatpush.bf16.msra.mxu0 %v4458
        %5821 = vmatpush.bf16.msra.mxu0 %v4457
        %5822 = vmatmul.bf16.gmra.mxu0 %v1722
        %v5823 = vpop.f32.mrf.mxu0
        %v5824 = vadd.f32 %v5811, %v5823
        %v5825 = vpop.f32.mrf.mxu0
        %5826 = vdwg.mxu0
        %5827 = vmatpush.bf16.msra.mxu0 %v4472
        %5828 = vmatpush.bf16.msra.mxu0 %v4471
        %5829 = vmatpush.bf16.msra.mxu0 %v4470
        %5830 = vmatpush.bf16.msra.mxu0 %v4469
        %5831 = vmatpush.bf16.msra.mxu0 %v4468
        %5832 = vmatpush.bf16.msra.mxu0 %v4467
        %5833 = vmatpush.bf16.msra.mxu0 %v4466
        %5834 = vmatpush.bf16.msra.mxu0 %v4465
        %5835 = vmatmul.bf16.gmra.mxu0 %v1723
        %v5836 = vpop.f32.mrf.mxu0
        %v5837 = vadd.f32 %v5824, %v5836
        %v5838 = vpop.f32.mrf.mxu0
        %5839 = vdwg.mxu0
        %5840 = vmatpush.bf16.msra.mxu0 %v4480
        %5841 = vmatpush.bf16.msra.mxu0 %v4479
        %5842 = vmatpush.bf16.msra.mxu0 %v4478
        %5843 = vmatpush.bf16.msra.mxu0 %v4477
        %5844 = vmatpush.bf16.msra.mxu0 %v4476
        %5845 = vmatpush.bf16.msra.mxu0 %v4475
        %5846 = vmatpush.bf16.msra.mxu0 %v4474
        %5847 = vmatpush.bf16.msra.mxu0 %v4473
        %5848 = vmatmul.bf16.gmra.mxu0 %v1724
        %v5849 = vpop.f32.mrf.mxu0
        %v5850 = vadd.f32 %v5837, %v5849
        %v5851 = vpop.f32.mrf.mxu0
        %5852 = vdwg.mxu0
        %5853 = vmatpush.bf16.msra.mxu0 %v4488
        %5854 = vmatpush.bf16.msra.mxu0 %v4487
        %5855 = vmatpush.bf16.msra.mxu0 %v4486
        %5856 = vmatpush.bf16.msra.mxu0 %v4485
        %5857 = vmatpush.bf16.msra.mxu0 %v4484
        %5858 = vmatpush.bf16.msra.mxu0 %v4483
        %5859 = vmatpush.bf16.msra.mxu0 %v4482
        %5860 = vmatpush.bf16.msra.mxu0 %v4481
        %5861 = vmatmul.bf16.gmra.mxu0 %v1725
        %v5862 = vpop.f32.mrf.mxu0
        %v5863 = vadd.f32 %v5850, %v5862
        %v5864 = vpop.f32.mrf.mxu0
        %5865 = vdwg.mxu0
        %5866 = vmatpush.bf16.msra.mxu0 %v4496
        %5867 = vmatpush.bf16.msra.mxu0 %v4495
        %5868 = vmatpush.bf16.msra.mxu0 %v4494
        %5869 = vmatpush.bf16.msra.mxu0 %v4493
        %5870 = vmatpush.bf16.msra.mxu0 %v4492
        %5871 = vmatpush.bf16.msra.mxu0 %v4491
        %5872 = vmatpush.bf16.msra.mxu0 %v4490
        %5873 = vmatpush.bf16.msra.mxu0 %v4489
        %5874 = vmatmul.bf16.gmra.mxu0 %v1726
        %v5875 = vpop.f32.mrf.mxu0
        %v5876 = vadd.f32 %v5863, %v5875
        %v5877 = vpop.f32.mrf.mxu0
        %5878 = vdwg.mxu0
        %5879 = vmatpush.bf16.msra.mxu0 %v4504
        %5880 = vmatpush.bf16.msra.mxu0 %v4503
        %5881 = vmatpush.bf16.msra.mxu0 %v4502
        %5882 = vmatpush.bf16.msra.mxu0 %v4501
        %5883 = vmatpush.bf16.msra.mxu0 %v4500
        %5884 = vmatpush.bf16.msra.mxu0 %v4499
        %5885 = vmatpush.bf16.msra.mxu0 %v4498
        %5886 = vmatpush.bf16.msra.mxu0 %v4497
        %5887 = vmatmul.bf16.gmra.mxu0 %v1727
        %v5888 = vpop.f32.mrf.mxu0
        %v5889 = vadd.f32 %v5876, %v5888
        %v5890 = vpop.f32.mrf.mxu0
        %5891 = vdwg.mxu0
        %5892 = vmatpush.bf16.msra.mxu0 %v4512
        %5893 = vmatpush.bf16.msra.mxu0 %v4511
        %5894 = vmatpush.bf16.msra.mxu0 %v4510
        %5895 = vmatpush.bf16.msra.mxu0 %v4509
        %5896 = vmatpush.bf16.msra.mxu0 %v4508
        %5897 = vmatpush.bf16.msra.mxu0 %v4507
        %5898 = vmatpush.bf16.msra.mxu0 %v4506
        %5899 = vmatpush.bf16.msra.mxu0 %v4505
        %5900 = vmatmul.bf16.gmra.mxu0 %v1728
        %v5901 = vpop.f32.mrf.mxu0
        %v5902 = vadd.f32 %v5889, %v5901
        %v5903 = vpop.f32.mrf.mxu0
        %5904 = vdwg.mxu0
        %5905 = vmatpush.bf16.msra.mxu0 %v4520
        %5906 = vmatpush.bf16.msra.mxu0 %v4519
        %5907 = vmatpush.bf16.msra.mxu0 %v4518
        %5908 = vmatpush.bf16.msra.mxu0 %v4517
        %5909 = vmatpush.bf16.msra.mxu0 %v4516
        %5910 = vmatpush.bf16.msra.mxu0 %v4515
        %5911 = vmatpush.bf16.msra.mxu0 %v4514
        %5912 = vmatpush.bf16.msra.mxu0 %v4513
        %5913 = vmatmul.bf16.gmra.mxu0 %v1729
        %v5914 = vpop.f32.mrf.mxu0
        %v5915 = vadd.f32 %v5902, %v5914
        %v5916 = vpop.f32.mrf.mxu0
        %5917 = vdwg.mxu0
        %5918 = vmatpush.bf16.msra.mxu0 %v4528
        %5919 = vmatpush.bf16.msra.mxu0 %v4527
        %5920 = vmatpush.bf16.msra.mxu0 %v4526
        %5921 = vmatpush.bf16.msra.mxu0 %v4525
        %5922 = vmatpush.bf16.msra.mxu0 %v4524
        %5923 = vmatpush.bf16.msra.mxu0 %v4523
        %5924 = vmatpush.bf16.msra.mxu0 %v4522
        %5925 = vmatpush.bf16.msra.mxu0 %v4521
        %5926 = vmatmul.bf16.gmra.mxu0 %v1730
        %v5927 = vpop.f32.mrf.mxu0
        %v5928 = vadd.f32 %v5915, %v5927
        %v5929 = vpop.f32.mrf.mxu0
        %5930 = vdwg.mxu0
        %5931 = vmatpush.bf16.msra.mxu0 %v4536
        %5932 = vmatpush.bf16.msra.mxu0 %v4535
        %5933 = vmatpush.bf16.msra.mxu0 %v4534
        %5934 = vmatpush.bf16.msra.mxu0 %v4533
        %5935 = vmatpush.bf16.msra.mxu0 %v4532
        %5936 = vmatpush.bf16.msra.mxu0 %v4531
        %5937 = vmatpush.bf16.msra.mxu0 %v4530
        %5938 = vmatpush.bf16.msra.mxu0 %v4529
        %5939 = vmatmul.bf16.gmra.mxu0 %v1731
        %v5940 = vpop.f32.mrf.mxu0
        %v5941 = vadd.f32 %v5928, %v5940
        %v5942 = vpop.f32.mrf.mxu0
        %5943 = vdwg.mxu0
        %5944 = vmatpush.bf16.msra.mxu0 %v4544
        %5945 = vmatpush.bf16.msra.mxu0 %v4543
        %5946 = vmatpush.bf16.msra.mxu0 %v4542
        %5947 = vmatpush.bf16.msra.mxu0 %v4541
        %5948 = vmatpush.bf16.msra.mxu0 %v4540
        %5949 = vmatpush.bf16.msra.mxu0 %v4539
        %5950 = vmatpush.bf16.msra.mxu0 %v4538
        %5951 = vmatpush.bf16.msra.mxu0 %v4537
        %5952 = vmatmul.bf16.gmra.mxu0 %v1732
        %v5953 = vpop.f32.mrf.mxu0
        %v5954 = vadd.f32 %v5941, %v5953
        %v5955 = vpop.f32.mrf.mxu0
        %5956 = vdwg.mxu0
        %5957 = vmatpush.bf16.msra.mxu0 %v4552
        %5958 = vmatpush.bf16.msra.mxu0 %v4551
        %5959 = vmatpush.bf16.msra.mxu0 %v4550
        %5960 = vmatpush.bf16.msra.mxu0 %v4549
        %5961 = vmatpush.bf16.msra.mxu0 %v4548
        %5962 = vmatpush.bf16.msra.mxu0 %v4547
        %5963 = vmatpush.bf16.msra.mxu0 %v4546
        %5964 = vmatpush.bf16.msra.mxu0 %v4545
        %5965 = vmatmul.bf16.gmra.mxu0 %v1733
        %v5966 = vpop.f32.mrf.mxu0
        %v5967 = vadd.f32 %v5954, %v5966
        %v5968 = vpop.f32.mrf.mxu0
        %5969 = vdwg.mxu0
        %5970 = vmatpush.bf16.msra.mxu0 %v4560
        %5971 = vmatpush.bf16.msra.mxu0 %v4559
        %5972 = vmatpush.bf16.msra.mxu0 %v4558
        %5973 = vmatpush.bf16.msra.mxu0 %v4557
        %5974 = vmatpush.bf16.msra.mxu0 %v4556
        %5975 = vmatpush.bf16.msra.mxu0 %v4555
        %5976 = vmatpush.bf16.msra.mxu0 %v4554
        %5977 = vmatpush.bf16.msra.mxu0 %v4553
        %5978 = vmatmul.bf16.gmra.mxu0 %v1734
        %v5979 = vpop.f32.mrf.mxu0
        %v5980 = vadd.f32 %v5967, %v5979
        %v5981 = vpop.f32.mrf.mxu0
        %5982 = vdwg.mxu0
        %5983 = vmatpush.bf16.msra.mxu0 %v4568
        %5984 = vmatpush.bf16.msra.mxu0 %v4567
        %5985 = vmatpush.bf16.msra.mxu0 %v4566
        %5986 = vmatpush.bf16.msra.mxu0 %v4565
        %5987 = vmatpush.bf16.msra.mxu0 %v4564
        %5988 = vmatpush.bf16.msra.mxu0 %v4563
        %5989 = vmatpush.bf16.msra.mxu0 %v4562
        %5990 = vmatpush.bf16.msra.mxu0 %v4561
        %5991 = vmatmul.bf16.gmra.mxu0 %v1735
        %v5992 = vpop.f32.mrf.mxu0
        %v5993 = vadd.f32 %v5980, %v5992
        %v5994 = vpop.f32.mrf.mxu0
        %5995 = vdwg.mxu0
        %5996 = vmatpush.bf16.msra.mxu0 %v4576
        %5997 = vmatpush.bf16.msra.mxu0 %v4575
        %5998 = vmatpush.bf16.msra.mxu0 %v4574
        %5999 = vmatpush.bf16.msra.mxu0 %v4573
        %6000 = vmatpush.bf16.msra.mxu0 %v4572
        %6001 = vmatpush.bf16.msra.mxu0 %v4571
        %6002 = vmatpush.bf16.msra.mxu0 %v4570
        %6003 = vmatpush.bf16.msra.mxu0 %v4569
        %6004 = vmatmul.bf16.gmra.mxu0 %v1736
        %v6005 = vpop.f32.mrf.mxu0
        %v6006 = vadd.f32 %v5993, %v6005
        %v6007 = vpop.f32.mrf.mxu0
        %6008 = vdwg.mxu0
        %6009 = vmatpush.bf16.msra.mxu0 %v4584
        %6010 = vmatpush.bf16.msra.mxu0 %v4583
        %6011 = vmatpush.bf16.msra.mxu0 %v4582
        %6012 = vmatpush.bf16.msra.mxu0 %v4581
        %6013 = vmatpush.bf16.msra.mxu0 %v4580
        %6014 = vmatpush.bf16.msra.mxu0 %v4579
        %6015 = vmatpush.bf16.msra.mxu0 %v4578
        %6016 = vmatpush.bf16.msra.mxu0 %v4577
        %6017 = vmatmul.bf16.gmra.mxu0 %v1737
        %v6018 = vpop.f32.mrf.mxu0
        %v6019 = vadd.f32 %v6006, %v6018
        %v6020 = vpop.f32.mrf.mxu0
        %6021 = vdwg.mxu0
        %6022 = vmatpush.bf16.msra.mxu0 %v4592
        %6023 = vmatpush.bf16.msra.mxu0 %v4591
        %6024 = vmatpush.bf16.msra.mxu0 %v4590
        %6025 = vmatpush.bf16.msra.mxu0 %v4589
        %6026 = vmatpush.bf16.msra.mxu0 %v4588
        %6027 = vmatpush.bf16.msra.mxu0 %v4587
        %6028 = vmatpush.bf16.msra.mxu0 %v4586
        %6029 = vmatpush.bf16.msra.mxu0 %v4585
        %6030 = vmatmul.bf16.gmra.mxu0 %v1738
        %v6031 = vpop.f32.mrf.mxu0
        %v6032 = vadd.f32 %v6019, %v6031
        %v6033 = vpop.f32.mrf.mxu0
        %6034 = vdwg.mxu0
        %6035 = vmatpush.bf16.msra.mxu0 %v4600
        %6036 = vmatpush.bf16.msra.mxu0 %v4599
        %6037 = vmatpush.bf16.msra.mxu0 %v4598
        %6038 = vmatpush.bf16.msra.mxu0 %v4597
        %6039 = vmatpush.bf16.msra.mxu0 %v4596
        %6040 = vmatpush.bf16.msra.mxu0 %v4595
        %6041 = vmatpush.bf16.msra.mxu0 %v4594
        %6042 = vmatpush.bf16.msra.mxu0 %v4593
        %6043 = vmatmul.bf16.gmra.mxu0 %v1739
        %v6044 = vpop.f32.mrf.mxu0
        %v6045 = vadd.f32 %v6032, %v6044
        %v6046 = vpop.f32.mrf.mxu0
        %6047 = vdwg.mxu0
        %6048 = vmatpush.bf16.msra.mxu0 %v4608
        %6049 = vmatpush.bf16.msra.mxu0 %v4607
        %6050 = vmatpush.bf16.msra.mxu0 %v4606
        %6051 = vmatpush.bf16.msra.mxu0 %v4605
        %6052 = vmatpush.bf16.msra.mxu0 %v4604
        %6053 = vmatpush.bf16.msra.mxu0 %v4603
        %6054 = vmatpush.bf16.msra.mxu0 %v4602
        %6055 = vmatpush.bf16.msra.mxu0 %v4601
        %6056 = vmatmul.bf16.gmra.mxu0 %v1740
        %v6057 = vpop.f32.mrf.mxu0
        %v6058 = vadd.f32 %v6045, %v6057
        %v6059 = vpop.f32.mrf.mxu0
        %6060 = vdwg.mxu0
        %6061 = vmatpush.bf16.msra.mxu0 %v4616
        %6062 = vmatpush.bf16.msra.mxu0 %v4615
        %6063 = vmatpush.bf16.msra.mxu0 %v4614
        %6064 = vmatpush.bf16.msra.mxu0 %v4613
        %6065 = vmatpush.bf16.msra.mxu0 %v4612
        %6066 = vmatpush.bf16.msra.mxu0 %v4611
        %6067 = vmatpush.bf16.msra.mxu0 %v4610
        %6068 = vmatpush.bf16.msra.mxu0 %v4609
        %6069 = vmatmul.bf16.gmra.mxu0 %v1741
        %v6070 = vpop.f32.mrf.mxu0
        %v6071 = vadd.f32 %v6058, %v6070
        %v6072 = vpop.f32.mrf.mxu0
        %6073 = vdwg.mxu0
        %6074 = vmatpush.bf16.msra.mxu0 %v4624
        %6075 = vmatpush.bf16.msra.mxu0 %v4623
        %6076 = vmatpush.bf16.msra.mxu0 %v4622
        %6077 = vmatpush.bf16.msra.mxu0 %v4621
        %6078 = vmatpush.bf16.msra.mxu0 %v4620
        %6079 = vmatpush.bf16.msra.mxu0 %v4619
        %6080 = vmatpush.bf16.msra.mxu0 %v4618
        %6081 = vmatpush.bf16.msra.mxu0 %v4617
        %6082 = vmatmul.bf16.gmra.mxu0 %v1742
        %v6083 = vpop.f32.mrf.mxu0
        %v6084 = vadd.f32 %v6071, %v6083
        %v6085 = vpop.f32.mrf.mxu0
        %6086 = vdwg.mxu0
        %6087 = vmatpush.bf16.msra.mxu0 %v4632
        %6088 = vmatpush.bf16.msra.mxu0 %v4631
        %6089 = vmatpush.bf16.msra.mxu0 %v4630
        %6090 = vmatpush.bf16.msra.mxu0 %v4629
        %6091 = vmatpush.bf16.msra.mxu0 %v4628
        %6092 = vmatpush.bf16.msra.mxu0 %v4627
        %6093 = vmatpush.bf16.msra.mxu0 %v4626
        %6094 = vmatpush.bf16.msra.mxu0 %v4625
        %6095 = vmatmul.bf16.gmra.mxu0 %v1743
        %v6096 = vpop.f32.mrf.mxu0
        %v6097 = vadd.f32 %v6084, %v6096
        %v6098 = vpop.f32.mrf.mxu0
        %6099 = vdwg.mxu0
        %6100 = vmatpush.bf16.msra.mxu0 %v4640
        %6101 = vmatpush.bf16.msra.mxu0 %v4639
        %6102 = vmatpush.bf16.msra.mxu0 %v4638
        %6103 = vmatpush.bf16.msra.mxu0 %v4637
        %6104 = vmatpush.bf16.msra.mxu0 %v4636
        %6105 = vmatpush.bf16.msra.mxu0 %v4635
        %6106 = vmatpush.bf16.msra.mxu0 %v4634
        %6107 = vmatpush.bf16.msra.mxu0 %v4633
        %6108 = vmatmul.bf16.gmra.mxu0 %v1744
        %v6109 = vpop.f32.mrf.mxu0
        %v6110 = vadd.f32 %v6097, %v6109
        %v6111 = vpop.f32.mrf.mxu0
        %6112 = vdwg.mxu0
        %6113 = vmatpush.bf16.msra.mxu0 %v4648
        %6114 = vmatpush.bf16.msra.mxu0 %v4647
        %6115 = vmatpush.bf16.msra.mxu0 %v4646
        %6116 = vmatpush.bf16.msra.mxu0 %v4645
        %6117 = vmatpush.bf16.msra.mxu0 %v4644
        %6118 = vmatpush.bf16.msra.mxu0 %v4643
        %6119 = vmatpush.bf16.msra.mxu0 %v4642
        %6120 = vmatpush.bf16.msra.mxu0 %v4641
        %6121 = vmatmul.bf16.gmra.mxu0 %v1745
        %v6122 = vpop.f32.mrf.mxu0
        %v6123 = vadd.f32 %v6110, %v6122
        %v6124 = vpop.f32.mrf.mxu0
        %6125 = vdwg.mxu0
        %6126 = vmatpush.bf16.msra.mxu0 %v4656
        %6127 = vmatpush.bf16.msra.mxu0 %v4655
        %6128 = vmatpush.bf16.msra.mxu0 %v4654
        %6129 = vmatpush.bf16.msra.mxu0 %v4653
        %6130 = vmatpush.bf16.msra.mxu0 %v4652
        %6131 = vmatpush.bf16.msra.mxu0 %v4651
        %6132 = vmatpush.bf16.msra.mxu0 %v4650
        %6133 = vmatpush.bf16.msra.mxu0 %v4649
        %6134 = vmatmul.bf16.gmra.mxu0 %v1746
        %v6135 = vpop.f32.mrf.mxu0
        %v6136 = vadd.f32 %v6123, %v6135
        %v6137 = vpop.f32.mrf.mxu0
        %6138 = vdwg.mxu0
        %6139 = vmatpush.bf16.msra.mxu0 %v4664
        %6140 = vmatpush.bf16.msra.mxu0 %v4663
        %6141 = vmatpush.bf16.msra.mxu0 %v4662
        %6142 = vmatpush.bf16.msra.mxu0 %v4661
        %6143 = vmatpush.bf16.msra.mxu0 %v4660
        %6144 = vmatpush.bf16.msra.mxu0 %v4659
        %6145 = vmatpush.bf16.msra.mxu0 %v4658
        %6146 = vmatpush.bf16.msra.mxu0 %v4657
        %6147 = vmatmul.bf16.gmra.mxu0 %v1747
        %v6148 = vpop.f32.mrf.mxu0
        %v6149 = vadd.f32 %v6136, %v6148
        %v6150 = vpop.f32.mrf.mxu0
        %6151 = vdwg.mxu0
        %6152 = vmatpush.bf16.msra.mxu0 %v4672
        %6153 = vmatpush.bf16.msra.mxu0 %v4671
        %6154 = vmatpush.bf16.msra.mxu0 %v4670
        %6155 = vmatpush.bf16.msra.mxu0 %v4669
        %6156 = vmatpush.bf16.msra.mxu0 %v4668
        %6157 = vmatpush.bf16.msra.mxu0 %v4667
        %6158 = vmatpush.bf16.msra.mxu0 %v4666
        %6159 = vmatpush.bf16.msra.mxu0 %v4665
        %6160 = vmatmul.bf16.gmra.mxu0 %v1748
        %v6161 = vpop.f32.mrf.mxu0
        %v6162 = vadd.f32 %v6149, %v6161
        %v6163 = vpop.f32.mrf.mxu0
        %6164 = vdwg.mxu0
        %6165 = vmatpush.bf16.msra.mxu0 %v4680
        %6166 = vmatpush.bf16.msra.mxu0 %v4679
        %6167 = vmatpush.bf16.msra.mxu0 %v4678
        %6168 = vmatpush.bf16.msra.mxu0 %v4677
        %6169 = vmatpush.bf16.msra.mxu0 %v4676
        %6170 = vmatpush.bf16.msra.mxu0 %v4675
        %6171 = vmatpush.bf16.msra.mxu0 %v4674
        %6172 = vmatpush.bf16.msra.mxu0 %v4673
        %6173 = vmatmul.bf16.gmra.mxu0 %v1749
        %v6174 = vpop.f32.mrf.mxu0
        %v6175 = vadd.f32 %v6162, %v6174
        %v6176 = vpop.f32.mrf.mxu0
        %6177 = vdwg.mxu0
        %6178 = vmatpush.bf16.msra.mxu0 %v4688
        %6179 = vmatpush.bf16.msra.mxu0 %v4687
        %6180 = vmatpush.bf16.msra.mxu0 %v4686
        %6181 = vmatpush.bf16.msra.mxu0 %v4685
        %6182 = vmatpush.bf16.msra.mxu0 %v4684
        %6183 = vmatpush.bf16.msra.mxu0 %v4683
        %6184 = vmatpush.bf16.msra.mxu0 %v4682
        %6185 = vmatpush.bf16.msra.mxu0 %v4681
        %6186 = vmatmul.bf16.gmra.mxu0 %v1750
        %v6187 = vpop.f32.mrf.mxu0
        %v6188 = vadd.f32 %v6175, %v6187
        %v6189 = vpop.f32.mrf.mxu0
        %6190 = vdwg.mxu0
        %6191 = vmatpush.bf16.msra.mxu0 %v4696
        %6192 = vmatpush.bf16.msra.mxu0 %v4695
        %6193 = vmatpush.bf16.msra.mxu0 %v4694
        %6194 = vmatpush.bf16.msra.mxu0 %v4693
        %6195 = vmatpush.bf16.msra.mxu0 %v4692
        %6196 = vmatpush.bf16.msra.mxu0 %v4691
        %6197 = vmatpush.bf16.msra.mxu0 %v4690
        %6198 = vmatpush.bf16.msra.mxu0 %v4689
        %6199 = vmatmul.bf16.gmra.mxu0 %v1751
        %v6200 = vpop.f32.mrf.mxu0
        %v6201 = vadd.f32 %v6188, %v6200
        %v6202 = vpop.f32.mrf.mxu0
        %6203 = vdwg.mxu0
        %6204 = vmatpush.bf16.msra.mxu0 %v4704
        %6205 = vmatpush.bf16.msra.mxu0 %v4703
        %6206 = vmatpush.bf16.msra.mxu0 %v4702
        %6207 = vmatpush.bf16.msra.mxu0 %v4701
        %6208 = vmatpush.bf16.msra.mxu0 %v4700
        %6209 = vmatpush.bf16.msra.mxu0 %v4699
        %6210 = vmatpush.bf16.msra.mxu0 %v4698
        %6211 = vmatpush.bf16.msra.mxu0 %v4697
        %6212 = vmatmul.bf16.gmra.mxu0 %v1752
        %v6213 = vpop.f32.mrf.mxu0
        %v6214 = vadd.f32 %v6201, %v6213
        %v6215 = vpop.f32.mrf.mxu0
        %6216 = vdwg.mxu0
        %v6217 = vadd.f32 %v384, %v6214
        %6218 = vst [vmem:[#allocation2] sm:$0xff] %v6217
        %p6219 = scmp.eq.s32.totalorder %s29, 3
        // Predicated region
        $region65: #{neural_network_forward.1} parent=47 // pred_check
          %p6220 = pneg %p6219
        $region66: #{neural_network_forward.1} parent=47 // pred_check_branch
          %6222 = sbr.rel (%p6220) target = $region68
        $region67: #{neural_network_forward.1} parent=47 // pred_region
          %v6223 = vld [vmem:[#allocation2] sm:$0xff]
          %v6224 = vld [vmem:[#allocation6] sm:$0x1]
          %v6226 = vperm.slane %v6224, 0
          %v6228 = vadd.f32 %v6223, %v6226
          %v6229 = vmax.f32 %v6228, 0.0
          %v6230 = vld [vmem:[%s3] sm:$0xff]
          %v6231 = vld [vmem:[%s3 + $0x8] sm:$0xff]
          %v6232 = vld [vmem:[%s3 + $0x10] sm:$0xff]
          %v6233 = vld [vmem:[%s3 + $0x18] sm:$0xff]
          %v6234 = vld [vmem:[%s3 + $0x20] sm:$0xff]
          %v6235 = vld [vmem:[%s3 + $0x28] sm:$0xff]
          %v6236 = vld [vmem:[%s3 + $0x30] sm:$0xff]
          %v6237 = vld [vmem:[%s3 + $0x38] sm:$0xff]
          %v6238 = vld [vmem:[%s3 + $0x40] sm:$0xff]
          %v6239 = vld [vmem:[%s3 + $0x48] sm:$0xff]
          %v6240 = vld [vmem:[%s3 + $0x50] sm:$0xff]
          %v6241 = vld [vmem:[%s3 + $0x58] sm:$0xff]
          %v6242 = vld [vmem:[%s3 + $0x60] sm:$0xff]
          %v6243 = vld [vmem:[%s3 + $0x68] sm:$0xff]
          %v6244 = vld [vmem:[%s3 + $0x70] sm:$0xff]
          %v6245 = vld [vmem:[%s3 + $0x78] sm:$0xff]
          %v6246 = vld [vmem:[#allocation8] sm:$0x1]
          %v6248 = vperm.slane %v6246, 0
          %6250 = vmatpush.msra.mxu0 %v6245
          %6251 = vmatpush.msra.mxu0 %v6244
          %6252 = vmatpush.msra.mxu0 %v6243
          %6253 = vmatpush.msra.mxu0 %v6242
          %6254 = vmatpush.msra.mxu0 %v6241
          %6255 = vmatpush.msra.mxu0 %v6240
          %6256 = vmatpush.msra.mxu0 %v6239
          %6257 = vmatpush.msra.mxu0 %v6238
          %6258 = vmatpush.msra.mxu0 %v6237
          %6259 = vmatpush.msra.mxu0 %v6236
          %6260 = vmatpush.msra.mxu0 %v6235
          %6261 = vmatpush.msra.mxu0 %v6234
          %6262 = vmatpush.msra.mxu0 %v6233
          %6263 = vmatpush.msra.mxu0 %v6232
          %6264 = vmatpush.msra.mxu0 %v6231
          %6265 = vmatpush.msra.mxu0 %v6230
          %6266 = vmatmul.f32.gmra.mxu0 %v6229
          %v6267 = vpop.f32.mrf.mxu0
          %v6268 = vadd.f32 %v6248, %v6267
          %6269 = vdwg.mxu0
          %v6270 = vmax.f32 %v6268, 0.0
          %v6271 = vld [vmem:[%s5] sm:$0xff]
          %v6272 = vld [vmem:[%s5 + $0x8] sm:$0xff]
          %v6273 = vld [vmem:[%s5 + $0x10] sm:$0xff]
          %v6274 = vld [vmem:[%s5 + $0x18] sm:$0xff]
          %v6275 = vld [vmem:[#allocation3] sm:$0x1]
          %v6277 = vperm.slane %v6275, 0
          %vm6279 = vcmask 261120
          %v6281 = vsel %vm6279, %v6270, 0
          %6283 = vmatpush.msra.mxu0 0.0
          %6284 = vmatpush.msra.mxu0 0.0
          %6285 = vmatpush.msra.mxu0 0.0
          %6286 = vmatpush.msra.mxu0 0.0
          %6287 = vmatpush.msra.mxu0 0.0
          %6288 = vmatpush.msra.mxu0 0.0
          %6289 = vmatpush.msra.mxu0 0.0
          %6290 = vmatpush.msra.mxu0 0.0
          %6291 = vmatpush.msra.mxu0 0.0
          %6292 = vmatpush.msra.mxu0 0.0
          %6293 = vmatpush.msra.mxu0 0.0
          %6294 = vmatpush.msra.mxu0 0.0
          %6295 = vmatpush.msra.mxu0 %v6274
          %6296 = vmatpush.msra.mxu0 %v6273
          %6297 = vmatpush.msra.mxu0 %v6272
          %6298 = vmatpush.msra.mxu0 %v6271
          %6299 = vmatmul.f32.gmra.mxu0 %v6281
          %v6300 = vpop.f32.mrf.mxu0
          %v6301 = vadd.f32 %v6277, %v6300
          %6302 = vdwg.mxu0
          %vm6303 = vcmask 7168
          %6304 = vst.msk [vmem:[%s378] sm:$0xff] %vm6303, %v6301
        $region68: #{neural_network_forward.1} parent=47 // pred_fallthru
          _
        %p6305 = scmp.lt.s32.totalorder %s28, 0
        %s6306 = scalar_select %p6305, %s28, 0
        %s6307 = smul.addr %s6306, 8
        %s6308 = scalar_lea.vmem %s7, %s6307
        // Predicated region
        $region69: #{neural_network_forward.1} parent=47 // pred_check
          %p6309 = pneg %p213
        $region70: #{neural_network_forward.1} parent=47 // pred_check_branch
          %6311 = sbr.rel (%p6309) target = $region72
        $region71: #{neural_network_forward.1} parent=47 // pred_region
          _
        $region72: #{neural_network_forward.1} parent=47 // pred_fallthru
          _
        // Predicated region
        $region73: #{neural_network_forward.1} parent=47 // pred_check
          %p6312 = pneg %p213
        $region74: #{neural_network_forward.1} parent=47 // pred_check_branch
          %6314 = sbr.rel (%p6312) target = $region76
        $region75: #{neural_network_forward.1} parent=47 // pred_region
          %p6315 = scmp.lt.s32.totalorder %s28, 0
          %s6316 = scalar_select %p6315, %s28, 0
          %s6317 = smul.addr %s6316, 8
          %s6318 = scalar_lea.vmem %s7, %s6317
        $region76: #{neural_network_forward.1} parent=47 // pred_fallthru
          _
      $region48: #{neural_network_forward.1} parent=5 // pred_fallthru
        _
      %p6319 = scmp.le.s32.totalorder 2, %s19
      // Predicated region
      $region77: #{neural_network_forward.1} parent=5 // pred_check
        %p6320 = pneg %p6319
      $region78: #{neural_network_forward.1} parent=5 // pred_check_branch
        %6322 = sbr.rel (%p6320) target = $region80
      $region79: #{neural_network_forward.1} parent=5 // pred_region
        %s6323 = ssub.s32 %s19, 2
      $region80: #{neural_network_forward.1} parent=5 // pred_fallthru
        _
    $region6: #{neural_network_forward.1} parent=1 // loop_footer
      %s23 = sadd.s32 1, %s19
    $region7: #{neural_network_forward.1} parent=1 // loop_footer_branch
      %18 = sbr.rel target = $region3
    $region8: #{neural_network_forward.1} parent=1 // loop_exit
      _
    %6324 = vsyncpa [#allocation5], 1
    %s6325 = scalar_lea.sflag [#allocation5], 1
    %6326 = vsyncpa %s6325, 1
    %6327 = vsyncpa [#allocation7], 1

</llo_original>
